<compile_context>
chip_gen: v6e
topology: v6e:2x2x1
jax: 0.10.0
libtpu: 0.0.40
codegen_flags: <defaults>
</compile_context>

<pallas_src>
import functools

import jax
import jax.numpy as jnp
from jax import lax
from jax.experimental import pallas as pl
from jax.experimental.pallas import tpu as pltpu


def _largest_divisor_leq(n, upper, multiple_of=1):
    """Largest divisor of n that is <= upper and a multiple of `multiple_of`."""
    best = None
    for d in range(1, min(n, upper) + 1):
        if n % d == 0 and d % multiple_of == 0:
            best = d
    return best


def _alpha_from_chunk(a_chunk, h_chunk, wa, wh, b, watt):
    """Attention forward for one chunk: (cb, F, N) features + (cb, H) hidden -> (cb, N) alpha."""
    cb, F, N = a_chunk.shape
    O = wa.shape[1]

    # (cb, F, N) -> (cb, N, F) -> (cb*N, F): one long-M MXU matmul for f_a.
    a_t = jnp.transpose(a_chunk, (0, 2, 1)).reshape(cb * N, F)
    att_a = jnp.dot(a_t, wa, preferred_element_type=jnp.float32).reshape(cb, N, O)

    # f_h once per batch row; the two Linear biases are pre-folded into `b`.
    att_h = jnp.dot(h_chunk, wh, preferred_element_type=jnp.float32) + b     # (cb, O)

    s = jnp.maximum(att_a + att_h[:, None, :], 0.0)                          # (cb, N, O)

    # f_att: weighted lane-reduce over O.  f_att's bias is constant along the
    # softmax axis, so it cancels in the softmax and is omitted.
    score = jnp.sum(s * watt, axis=-1)                                       # (cb, N)

    # Exact softmax over num_feats (dim=1 in torch); approx reciprocal dropped.
    m = jnp.max(score, axis=-1, keepdims=True)
    e = jnp.exp(score - m)
    return e / jnp.sum(e, axis=-1, keepdims=True)


def _attention_kernel_flat(a_ref, h_ref, wa_ref, wh_ref, b_ref, watt_ref,
                           out_ref, *, cb, feat_dim, num_feats):
    """Primary path: a_ref is a lane-dense (tb, F*N) stream of the features."""
    tb = h_ref.shape[0]
    wa, wh = wa_ref[...], wh_ref[...]
    b, watt = b_ref[...], watt_ref[...]

    def alpha(x_flat, h_c):
        # In-VMEM relayout of the lane-dense rows back to (rows, F, N).
        x3 = x_flat.reshape(x_flat.shape[0], feat_dim, num_feats)
        return _alpha_from_chunk(x3, h_c, wa, wh, b, watt)

    if cb >= tb:
        out_ref[...] = alpha(a_ref[...], h_ref[...]).astype(out_ref.dtype)
    else:
        def body(c, carry):
            r0 = pl.multiple_of(c * cb, cb)
            out_ref[pl.ds(r0, cb), :] = alpha(
                a_ref[pl.ds(r0, cb), :],
                h_ref[pl.ds(r0, cb), :]).astype(out_ref.dtype)
            return carry

        lax.fori_loop(0, tb // cb, body, None, unroll=True)


def _attention_kernel_3d(a_ref, h_ref, wa_ref, wh_ref, b_ref, watt_ref,
                         out_ref, *, cb):
    """Fallback path: a_ref is the original (tb, F, N) block (lane dim padded in VMEM)."""
    tb = h_ref.shape[0]
    wa, wh = wa_ref[...], wh_ref[...]
    b, watt = b_ref[...], watt_ref[...]

    if cb >= tb:
        out_ref[...] = _alpha_from_chunk(
            a_ref[...], h_ref[...], wa, wh, b, watt).astype(out_ref.dtype)
    else:
        def body(c, carry):
            r0 = pl.multiple_of(c * cb, cb)
            out_ref[pl.ds(r0, cb), :] = _alpha_from_chunk(
                a_ref[pl.ds(r0, cb), :, :],
                h_ref[pl.ds(r0, cb), :], wa, wh, b, watt).astype(out_ref.dtype)
            return carry

        lax.fori_loop(0, tb // cb, body, None, unroll=True)


# Probed once: can Mosaic lower the in-kernel lane->sublane relayout used by
# the lane-dense path?  (If not, the padded 3-D block path is used instead.)
_LANE_DENSE_OK = None


def hard_attention_alpha(a, h, params, *, tb=None, cb=None, lane_dense=None):
    """a: (B, feat_dim, num_feats) PyTorch layout, h: (B, hidden_dim) -> alpha (B, num_feats)."""
    global _LANE_DENSE_OK
    B, F, N = a.shape
    H = h.shape[1]
    O = params["wa"].shape[1]

    # Fold the two Linear biases once, outside the kernel's hot path (tiny op).
    b_comb = (params["ba"] + params["bh"]).astype(jnp.float32)

    def call(use_flat):
        # Batch tile: the kernel is HBM/overhead bound, so take the largest
        # divisor of B up to the request.  tb is kept a multiple of 8 (or the
        # full batch) so every block satisfies the (8, 128) sublane rule.
        tb_req = tb if tb is not None else (1024 if use_flat else 512)
        tb_ = _largest_divisor_leq(B, tb_req, 8) or B
        # Compute chunk: bounds a_t / att_a / s scratch and vreg pressure per
        # step so raising tb only grows the (cheap) streamed buffers.
        cb_req = min(cb if cb is not None else 256, tb_)
        cb_ = (_largest_divisor_leq(tb_, cb_req, 8)
               or _largest_divisor_leq(tb_, cb_req) or tb_)

        if use_flat:
            kernel = functools.partial(_attention_kernel_flat, cb=cb_,
                                       feat_dim=F, num_feats=N)
            a_in = a.reshape(B, F * N)                     # free contiguous reshape
            a_spec = pl.BlockSpec((tb_, F * N), lambda i: (i, 0))
        else:
            kernel = functools.partial(_attention_kernel_3d, cb=cb_)
            a_in = a
            a_spec = pl.BlockSpec((tb_, F, N), lambda i: (i, 0, 0))

        return pl.pallas_call(
            kernel,
            out_shape=jax.ShapeDtypeStruct((B, N), jnp.float32),
            grid=(B // tb_,),
            in_specs=[
                a_spec,                                            # streamed per batch tile
                pl.BlockSpec((tb_, H), lambda i: (i, 0)),          # streamed per batch tile
                pl.BlockSpec((F, O), lambda i: (0, 0)),            # weights: resident
                pl.BlockSpec((H, O), lambda i: (0, 0)),
                pl.BlockSpec((1, O), lambda i: (0, 0)),
                pl.BlockSpec((1, O), lambda i: (0, 0)),
            ],
            out_specs=pl.BlockSpec((tb_, N), lambda i: (i, 0)),
            compiler_params=pltpu.CompilerParams(
                dimension_semantics=("parallel",),      # megacore / 2-TC sharding
                vmem_limit_bytes=48 * 1024 * 1024,      # < v7x 64 MiB physical, > v5e/v6e defaults
            ),
        )(a_in, h, params["wa"], params["wh"], b_comb, params["watt"])

    if lane_dense is None:
        if _LANE_DENSE_OK is None:
            if (F * N) % 128 == 0:
                # One-time probe of the lane-dense relayout on this backend.
                try:
                    out = jax.block_until_ready(call(True))
                    _LANE_DENSE_OK = True
                    return out
                except Exception:  # relayout unsupported -> padded 3-D fallback
                    _LANE_DENSE_OK = False
                    return call(False)
            lane_dense = False
        else:
            lane_dense = _LANE_DENSE_OK
    return call(bool(lane_dense))


def init_params(key, feat_dim, hidden_dim, out_features):
    """Deterministic init matching the PyTorch Linear shapes (weights pre-transposed)."""
    ks = jax.random.split(key, 6)

    def unif(k, shape, fan_in):
        bound = 1.0 / jnp.sqrt(fan_in)
        return jax.random.uniform(k, shape, jnp.float32, -bound, bound)

    return {
        # f_a: Linear(feat_dim -> out_features); store W^T as (F, O)
        "wa": unif(ks[0], (feat_dim, out_features), feat_dim),
        "ba": unif(ks[1], (1, out_features), feat_dim),
        # f_h: Linear(hidden_dim -> out_features); store W^T as (H, O)
        "wh": unif(ks[2], (hidden_dim, out_features), hidden_dim),
        "bh": unif(ks[3], (1, out_features), hidden_dim),
        # f_att: Linear(out_features -> 1); weight is (1, O) already row-shaped
        "watt": unif(ks[4], (1, out_features), out_features),
        "batt": unif(ks[5], (1, 1), out_features),
    }


def _reference_alpha(a, h, p):
    """Plain-JAX reference mirroring the PyTorch forward exactly."""
    B, F, N = a.shape
    a_t = jnp.transpose(a, (0, 2, 1)).reshape(B * N, F)
    h_rep = jnp.repeat(h[:, None, :], N, axis=1).reshape(B * N, h.shape[1])
    att = jnp.maximum(a_t @ p["wa"] + p["ba"] + h_rep @ p["wh"] + p["bh"], 0.0)
    score = (att @ p["watt"].T + p["batt"]).reshape(B, N)
    return jax.nn.softmax(score, axis=1)


if __name__ == "__main__":
    B, feat_dim, num_feats, hidden_dim, out_features = 16, 32, 16, 32, 32

    key = jax.random.PRNGKey(0)
    k_a, k_h, k_p = jax.random.split(key, 3)
    a = jax.random.normal(k_a, (B, feat_dim, num_feats), jnp.float32)
    h = jax.random.normal(k_h, (B, hidden_dim), jnp.float32)
    params = init_params(k_p, feat_dim, hidden_dim, out_features)

    ref = _reference_alpha(a, h, params)

    # tb=8 -> grid=(2,): exercises the pipelined, megacore-parallel batch grid.
    alpha = jax.block_until_ready(hard_attention_alpha(a, h, params, tb=8))
    assert alpha.shape == (B, num_feats)
    assert jnp.allclose(alpha, ref, rtol=1e-4, atol=1e-6), "mismatch vs reference"
    assert jnp.allclose(jnp.sum(alpha, axis=1), 1.0, atol=1e-5)

    # tb=16, cb=8 -> exercises the in-kernel compute sub-blocking loop.
    alpha2 = jax.block_until_ready(hard_attention_alpha(a, h, params, tb=16, cb=8))
    assert jnp.allclose(alpha2, ref, rtol=1e-4, atol=1e-6), "chunked path mismatch"

    # The padded 3-D fallback path (auto-selected when the lane-dense relayout
    # is unsupported) is also verified explicitly.
    alpha3 = jax.block_until_ready(
        hard_attention_alpha(a, h, params, tb=8, lane_dense=False))
    assert jnp.allclose(alpha3, ref, rtol=1e-4, atol=1e-6), "fallback path mismatch"

    print("KERNEL_OK")
</pallas_src>

<mosaic_0001>
module attributes {stable_mosaic.version = 11 : i64} {
  func.func @_attention_kernel_flat(%arg0: i32, %arg1: memref<8x512xf32, #tpu.memory_space<vmem>>, %arg2: memref<8x32xf32, #tpu.memory_space<vmem>>, %arg3: memref<32x32xf32, #tpu.memory_space<vmem>>, %arg4: memref<32x32xf32, #tpu.memory_space<vmem>>, %arg5: memref<1x32xf32, #tpu.memory_space<vmem>>, %arg6: memref<1x32xf32, #tpu.memory_space<vmem>>, %arg7: memref<8x16xf32, #tpu.memory_space<vmem>>) attributes {dimension_semantics = [#tpu.dimension_semantics<parallel>], iteration_bounds = array<i64: 2>, scalar_prefetch = 0 : i64, scratch_operands = 0 : i64, tpu.core_type = #tpu.core_type<tc>, window_params = [{transform_indices = @transform_0, window_bounds = array<i64: 8, 512>}, {transform_indices = @transform_1, window_bounds = array<i64: 8, 32>}, {pipeline_mode = #tpu.pipeline_mode<synchronous>, transform_indices = @transform_2, window_bounds = array<i64: 32, 32>}, {pipeline_mode = #tpu.pipeline_mode<synchronous>, transform_indices = @transform_3, window_bounds = array<i64: 32, 32>}, {pipeline_mode = #tpu.pipeline_mode<synchronous>, transform_indices = @transform_4, window_bounds = array<i64: 1, 32>}, {pipeline_mode = #tpu.pipeline_mode<synchronous>, transform_indices = @transform_5, window_bounds = array<i64: 1, 32>}, {transform_indices = @transform_6, window_bounds = array<i64: 8, 16>}]} {
    %c0 = arith.constant 0 : index
    %c0_0 = arith.constant 0 : index
    %0 = vector.load %arg3[%c0, %c0_0] : memref<32x32xf32, #tpu.memory_space<vmem>>, vector<32x32xf32>
    %c0_1 = arith.constant 0 : index
    %c0_2 = arith.constant 0 : index
    %1 = vector.load %arg4[%c0_1, %c0_2] : memref<32x32xf32, #tpu.memory_space<vmem>>, vector<32x32xf32>
    %c0_3 = arith.constant 0 : index
    %c0_4 = arith.constant 0 : index
    %2 = vector.load %arg5[%c0_3, %c0_4] : memref<1x32xf32, #tpu.memory_space<vmem>>, vector<1x32xf32>
    %c0_5 = arith.constant 0 : index
    %c0_6 = arith.constant 0 : index
    %3 = vector.load %arg6[%c0_5, %c0_6] : memref<1x32xf32, #tpu.memory_space<vmem>>, vector<1x32xf32>
    %c0_7 = arith.constant 0 : index
    %c0_8 = arith.constant 0 : index
    %4 = vector.load %arg1[%c0_7, %c0_8] : memref<8x512xf32, #tpu.memory_space<vmem>>, vector<8x512xf32>
    %c0_9 = arith.constant 0 : index
    %c0_10 = arith.constant 0 : index
    %5 = vector.load %arg2[%c0_9, %c0_10] : memref<8x32xf32, #tpu.memory_space<vmem>>, vector<8x32xf32>
    %6 = vector.shape_cast %4 : vector<8x512xf32> to vector<8x32x16xf32>
    %7 = tpu.transpose %6, [0, 2, 1] : vector<8x32x16xf32> -> vector<8x16x32xf32>
    %8 = vector.shape_cast %7 : vector<8x16x32xf32> to vector<128x32xf32>
    %cst = arith.constant dense<0.000000e+00> : vector<128x32xf32>
    %9 = tpu.matmul %8, %0, %cst {dimension_numbers = #tpu.dot_dimension_numbers<[1], [0], [0], [1], [0, 0, 1, 1], [], []>} : vector<128x32xf32>, vector<32x32xf32>, vector<128x32xf32> -> vector<128x32xf32>
    %10 = vector.shape_cast %9 : vector<128x32xf32> to vector<8x16x32xf32>
    %cst_11 = arith.constant dense<0.000000e+00> : vector<8x32xf32>
    %11 = tpu.matmul %5, %1, %cst_11 {dimension_numbers = #tpu.dot_dimension_numbers<[1], [0], [0], [1], [0, 0, 1, 1], [], []>} : vector<8x32xf32>, vector<32x32xf32>, vector<8x32xf32> -> vector<8x32xf32>
    %12 = vector.broadcast %2 : vector<1x32xf32> to vector<8x32xf32>
    %13 = arith.addf %11, %12 : vector<8x32xf32>
    %14 = vector.shape_cast %13 : vector<8x32xf32> to vector<8x1x32xf32>
    %15 = vector.broadcast %14 : vector<8x1x32xf32> to vector<8x16x32xf32>
    %16 = arith.addf %10, %15 : vector<8x16x32xf32>
    %cst_12 = arith.constant 0.000000e+00 : f32
    %17 = vector.broadcast %cst_12 : f32 to vector<8x16x32xf32>
    %18 = arith.maximumf %16, %17 : vector<8x16x32xf32>
    %19 = vector.shape_cast %3 : vector<1x32xf32> to vector<1x1x32xf32>
    %20 = vector.broadcast %19 : vector<1x1x32xf32> to vector<8x16x32xf32>
    %21 = arith.mulf %18, %20 : vector<8x16x32xf32>
    %cst_13 = arith.constant dense<0.000000e+00> : vector<8x16xf32>
    %22 = vector.multi_reduction <add>, %21, %cst_13 [2] : vector<8x16x32xf32> to vector<8x16xf32>
    %cst_14 = arith.constant dense<0xFF800000> : vector<8xf32>
    %23 = vector.multi_reduction <maximumf>, %22, %cst_14 [1] : vector<8x16xf32> to vector<8xf32>
    %24 = vector.shape_cast %23 : vector<8xf32> to vector<8x1xf32>
    %25 = vector.broadcast %24 : vector<8x1xf32> to vector<8x16xf32>
    %26 = arith.subf %22, %25 : vector<8x16xf32>
    %27 = math.exp %26 : vector<8x16xf32>
    %cst_15 = arith.constant dense<0.000000e+00> : vector<8xf32>
    %28 = vector.multi_reduction <add>, %27, %cst_15 [1] : vector<8x16xf32> to vector<8xf32>
    %29 = vector.shape_cast %28 : vector<8xf32> to vector<8x1xf32>
    %30 = vector.broadcast %29 : vector<8x1xf32> to vector<8x16xf32>
    %31 = arith.divf %27, %30 : vector<8x16xf32>
    %c0_16 = arith.constant 0 : index
    %c0_17 = arith.constant 0 : index
    %32 = vector.load %arg7[%c0_16, %c0_17] : memref<8x16xf32, #tpu.memory_space<vmem>>, vector<8x16xf32>
    tpu.vector_store %arg7[%c0_16, %c0_17], %31 {strides = array<i32>} : memref<8x16xf32, #tpu.memory_space<vmem>>, vector<8x16xf32>,
    return
  }
  func.func @transform_0(%arg0: i32) -> (i32, i32) {
    %c0_i32 = arith.constant 0 : i32
    %c0_i32_0 = arith.constant 0 : i32
    return %arg0, %c0_i32 : i32, i32
  }
  func.func @transform_1(%arg0: i32) -> (i32, i32) {
    %c0_i32 = arith.constant 0 : i32
    %c0_i32_0 = arith.constant 0 : i32
    return %arg0, %c0_i32 : i32, i32
  }
  func.func @transform_2(%arg0: i32) -> (i32, i32) {
    %c0_i32 = arith.constant 0 : i32
    %c0_i32_0 = arith.constant 0 : i32
    %c0_i32_1 = arith.constant 0 : i32
    return %c0_i32, %c0_i32_0 : i32, i32
  }
  func.func @transform_3(%arg0: i32) -> (i32, i32) {
    %c0_i32 = arith.constant 0 : i32
    %c0_i32_0 = arith.constant 0 : i32
    %c0_i32_1 = arith.constant 0 : i32
    return %c0_i32, %c0_i32_0 : i32, i32
  }
  func.func @transform_4(%arg0: i32) -> (i32, i32) {
    %c0_i32 = arith.constant 0 : i32
    %c0_i32_0 = arith.constant 0 : i32
    %c0_i32_1 = arith.constant 0 : i32
    return %c0_i32, %c0_i32_0 : i32, i32
  }
  func.func @transform_5(%arg0: i32) -> (i32, i32) {
    %c0_i32 = arith.constant 0 : i32
    %c0_i32_0 = arith.constant 0 : i32
    %c0_i32_1 = arith.constant 0 : i32
    return %c0_i32, %c0_i32_0 : i32, i32
  }
  func.func @transform_6(%arg0: i32) -> (i32, i32) {
    %c0_i32 = arith.constant 0 : i32
    %c0_i32_0 = arith.constant 0 : i32
    return %arg0, %c0_i32 : i32, i32
  }
}

module attributes {stable_mosaic.version = 11 : i64} {
  func.func @_attention_kernel_3d(%arg0: i32, %arg1: memref<8x32x16xf32, #tpu.memory_space<vmem>>, %arg2: memref<8x32xf32, #tpu.memory_space<vmem>>, %arg3: memref<32x32xf32, #tpu.memory_space<vmem>>, %arg4: memref<32x32xf32, #tpu.memory_space<vmem>>, %arg5: memref<1x32xf32, #tpu.memory_space<vmem>>, %arg6: memref<1x32xf32, #tpu.memory_space<vmem>>, %arg7: memref<8x16xf32, #tpu.memory_space<vmem>>) attributes {dimension_semantics = [#tpu.dimension_semantics<parallel>], iteration_bounds = array<i64: 2>, scalar_prefetch = 0 : i64, scratch_operands = 0 : i64, tpu.core_type = #tpu.core_type<tc>, window_params = [{transform_indices = @transform_0, window_bounds = array<i64: 8, 32, 16>}, {transform_indices = @transform_1, window_bounds = array<i64: 8, 32>}, {pipeline_mode = #tpu.pipeline_mode<synchronous>, transform_indices = @transform_2, window_bounds = array<i64: 32, 32>}, {pipeline_mode = #tpu.pipeline_mode<synchronous>, transform_indices = @transform_3, window_bounds = array<i64: 32, 32>}, {pipeline_mode = #tpu.pipeline_mode<synchronous>, transform_indices = @transform_4, window_bounds = array<i64: 1, 32>}, {pipeline_mode = #tpu.pipeline_mode<synchronous>, transform_indices = @transform_5, window_bounds = array<i64: 1, 32>}, {transform_indices = @transform_6, window_bounds = array<i64: 8, 16>}]} {
    %c0 = arith.constant 0 : index
    %c0_0 = arith.constant 0 : index
    %0 = vector.load %arg3[%c0, %c0_0] : memref<32x32xf32, #tpu.memory_space<vmem>>, vector<32x32xf32>
    %c0_1 = arith.constant 0 : index
    %c0_2 = arith.constant 0 : index
    %1 = vector.load %arg4[%c0_1, %c0_2] : memref<32x32xf32, #tpu.memory_space<vmem>>, vector<32x32xf32>
    %c0_3 = arith.constant 0 : index
    %c0_4 = arith.constant 0 : index
    %2 = vector.load %arg5[%c0_3, %c0_4] : memref<1x32xf32, #tpu.memory_space<vmem>>, vector<1x32xf32>
    %c0_5 = arith.constant 0 : index
    %c0_6 = arith.constant 0 : index
    %3 = vector.load %arg6[%c0_5, %c0_6] : memref<1x32xf32, #tpu.memory_space<vmem>>, vector<1x32xf32>
    %c0_7 = arith.constant 0 : index
    %c0_8 = arith.constant 0 : index
    %c0_9 = arith.constant 0 : index
    %4 = vector.load %arg1[%c0_7, %c0_8, %c0_9] : memref<8x32x16xf32, #tpu.memory_space<vmem>>, vector<8x32x16xf32>
    %c0_10 = arith.constant 0 : index
    %c0_11 = arith.constant 0 : index
    %5 = vector.load %arg2[%c0_10, %c0_11] : memref<8x32xf32, #tpu.memory_space<vmem>>, vector<8x32xf32>
    %6 = tpu.transpose %4, [0, 2, 1] : vector<8x32x16xf32> -> vector<8x16x32xf32>
    %7 = vector.shape_cast %6 : vector<8x16x32xf32> to vector<128x32xf32>
    %cst = arith.constant dense<0.000000e+00> : vector<128x32xf32>
    %8 = tpu.matmul %7, %0, %cst {dimension_numbers = #tpu.dot_dimension_numbers<[1], [0], [0], [1], [0, 0, 1, 1], [], []>} : vector<128x32xf32>, vector<32x32xf32>, vector<128x32xf32> -> vector<128x32xf32>
    %9 = vector.shape_cast %8 : vector<128x32xf32> to vector<8x16x32xf32>
    %cst_12 = arith.constant dense<0.000000e+00> : vector<8x32xf32>
    %10 = tpu.matmul %5, %1, %cst_12 {dimension_numbers = #tpu.dot_dimension_numbers<[1], [0], [0], [1], [0, 0, 1, 1], [], []>} : vector<8x32xf32>, vector<32x32xf32>, vector<8x32xf32> -> vector<8x32xf32>
    %11 = vector.broadcast %2 : vector<1x32xf32> to vector<8x32xf32>
    %12 = arith.addf %10, %11 : vector<8x32xf32>
    %13 = vector.shape_cast %12 : vector<8x32xf32> to vector<8x1x32xf32>
    %14 = vector.broadcast %13 : vector<8x1x32xf32> to vector<8x16x32xf32>
    %15 = arith.addf %9, %14 : vector<8x16x32xf32>
    %cst_13 = arith.constant 0.000000e+00 : f32
    %16 = vector.broadcast %cst_13 : f32 to vector<8x16x32xf32>
    %17 = arith.maximumf %15, %16 : vector<8x16x32xf32>
    %18 = vector.shape_cast %3 : vector<1x32xf32> to vector<1x1x32xf32>
    %19 = vector.broadcast %18 : vector<1x1x32xf32> to vector<8x16x32xf32>
    %20 = arith.mulf %17, %19 : vector<8x16x32xf32>
    %cst_14 = arith.constant dense<0.000000e+00> : vector<8x16xf32>
    %21 = vector.multi_reduction <add>, %20, %cst_14 [2] : vector<8x16x32xf32> to vector<8x16xf32>
    %cst_15 = arith.constant dense<0xFF800000> : vector<8xf32>
    %22 = vector.multi_reduction <maximumf>, %21, %cst_15 [1] : vector<8x16xf32> to vector<8xf32>
    %23 = vector.shape_cast %22 : vector<8xf32> to vector<8x1xf32>
    %24 = vector.broadcast %23 : vector<8x1xf32> to vector<8x16xf32>
    %25 = arith.subf %21, %24 : vector<8x16xf32>
    %26 = math.exp %25 : vector<8x16xf32>
    %cst_16 = arith.constant dense<0.000000e+00> : vector<8xf32>
    %27 = vector.multi_reduction <add>, %26, %cst_16 [1] : vector<8x16xf32> to vector<8xf32>
    %28 = vector.shape_cast %27 : vector<8xf32> to vector<8x1xf32>
    %29 = vector.broadcast %28 : vector<8x1xf32> to vector<8x16xf32>
    %30 = arith.divf %26, %29 : vector<8x16xf32>
    %c0_17 = arith.constant 0 : index
    %c0_18 = arith.constant 0 : index
    %31 = vector.load %arg7[%c0_17, %c0_18] : memref<8x16xf32, #tpu.memory_space<vmem>>, vector<8x16xf32>
    tpu.vector_store %arg7[%c0_17, %c0_18], %30 {strides = array<i32>} : memref<8x16xf32, #tpu.memory_space<vmem>>, vector<8x16xf32>,
    return
  }
  func.func @transform_0(%arg0: i32) -> (i32, i32, i32) {
    %c0_i32 = arith.constant 0 : i32
    %c0_i32_0 = arith.constant 0 : i32
    %c0_i32_1 = arith.constant 0 : i32
    return %arg0, %c0_i32, %c0_i32_0 : i32, i32, i32
  }
  func.func @transform_1(%arg0: i32) -> (i32, i32) {
    %c0_i32 = arith.constant 0 : i32
    %c0_i32_0 = arith.constant 0 : i32
    return %arg0, %c0_i32 : i32, i32
  }
  func.func @transform_2(%arg0: i32) -> (i32, i32) {
    %c0_i32 = arith.constant 0 : i32
    %c0_i32_0 = arith.constant 0 : i32
    %c0_i32_1 = arith.constant 0 : i32
    return %c0_i32, %c0_i32_0 : i32, i32
  }
  func.func @transform_3(%arg0: i32) -> (i32, i32) {
    %c0_i32 = arith.constant 0 : i32
    %c0_i32_0 = arith.constant 0 : i32
    %c0_i32_1 = arith.constant 0 : i32
    return %c0_i32, %c0_i32_0 : i32, i32
  }
  func.func @transform_4(%arg0: i32) -> (i32, i32) {
    %c0_i32 = arith.constant 0 : i32
    %c0_i32_0 = arith.constant 0 : i32
    %c0_i32_1 = arith.constant 0 : i32
    return %c0_i32, %c0_i32_0 : i32, i32
  }
  func.func @transform_5(%arg0: i32) -> (i32, i32) {
    %c0_i32 = arith.constant 0 : i32
    %c0_i32_0 = arith.constant 0 : i32
    %c0_i32_1 = arith.constant 0 : i32
    return %c0_i32, %c0_i32_0 : i32, i32
  }
  func.func @transform_6(%arg0: i32) -> (i32, i32) {
    %c0_i32 = arith.constant 0 : i32
    %c0_i32_0 = arith.constant 0 : i32
    return %arg0, %c0_i32 : i32, i32
  }
}

</mosaic_0001>

<llo_original>
// kernel: tpu_custom_call.1
$region0: #{tpu_custom_call.1}
  #allocation0 [shape = 'u32[]', space=smem, size = 0x4, offset = 0x4, fixed_abs, tag = 'smem constant byte address 0x4 - core index']
  #allocation1 [shape = 'u32[144,128]{1,0:T(1,128)}', space=vmem, size = 0x12000, scoped, tag = 'internal scratch']
  %s0 = inlined_call_operand.hbm [shape: f32[16,512], index: 0, kind: input, shape index: {}]
  %s1 = inlined_call_operand.hbm [shape: f32[16,32], index: 1, kind: input, shape index: {}]
  %s2 = inlined_call_operand.hbm [shape: f32[32,32], index: 2, kind: input, shape index: {}]
  %s3 = inlined_call_operand.hbm [shape: f32[32,32], index: 3, kind: input, shape index: {}]
  %s4 = inlined_call_operand.vmem [shape: f32[1,32], index: 4, kind: input, shape index: {}]
  %s5 = inlined_call_operand.vmem [shape: f32[1,32], index: 5, kind: input, shape index: {}]
  %s6 = inlined_call_operand.hbm [shape: f32[16,16], index: 6, kind: output, shape index: {}]
  %s7 = sld [smem:[#allocation0]]
  $region73: #{tpu_custom_call.1} parent=0
    _
  %s9 = ssub.s32 1, %s7
  %s10 = scalar_select 0, %s9, %s7
  $region1: #{tpu_custom_call.1} parent=0
    #allocation2 [shape = 'u8[32768]{0}', space=vmem, size = 0x8000, scoped, tag = 'input window, operand 0']
    #allocation3 [shape = 's32[2]{0}', space=sflag, size = 0x8, scoped, tag = 'scoped memory for tpu_custom_call.1']
    #allocation4 [shape = 's32[2]{0}', space=sflag, size = 0x8, scoped, tag = 'scoped memory for tpu_custom_call.1']
    #allocation5 [shape = 'u8[8192]{0}', space=vmem, size = 0x2000, scoped, tag = 'input window, operand 1']
    #allocation6 [shape = 's32[2]{0}', space=sflag, size = 0x8, scoped, tag = 'scoped memory for tpu_custom_call.1']
    #allocation7 [shape = 'u8[16384]{0}', space=vmem, size = 0x4000, scoped, tag = 'input window, operand 2, single buffered']
    #allocation8 [shape = 'u8[16384]{0}', space=vmem, size = 0x4000, scoped, tag = 'input window, operand 3, single buffered']
    #allocation9 [shape = 's32[1]{0}', space=sflag, size = 0x4, scoped, tag = 'scoped memory for tpu_custom_call.1']
    #allocation10 [shape = 'u8[8192]{0}', space=vmem, size = 0x2000, scoped, tag = 'output window, operand 0']
    %11 = vsyncpa [#allocation3], 0
    %s12 = scalar_lea.sflag [#allocation3], 1
    %13 = vsyncpa %s12, 0
    %14 = vsyncpa [#allocation6], 0
    %s15 = scalar_lea.sflag [#allocation6], 1
    %16 = vsyncpa %s15, 0
    %17 = vsyncpa [#allocation9], 0
    %18 = vsyncpa [#allocation4], 0
    %s19 = scalar_lea.sflag [#allocation4], 1
    %20 = vsyncpa %s19, 0
    loop: start=0, step=1, limit=4
    $region2: #{tpu_custom_call.1} parent=1 // loop_pre_header
      _
    $region3: #{tpu_custom_call.1} parent=1 // loop_header
      %s22 = sphi 0, %s26
      %p23 = scmp.ge.s32.totalorder %s22, 4
      %s32 = sphi 0, %s34
      %s35 = sphi 0, %s32
      %s36 = sphi 0, %s35
      %s52 = sphi 0, %s36
      %s58 = sphi 0, %s60
      %s61 = sphi 0, %s58
      %s62 = sphi 0, %s61
      %s78 = sphi 0, %s62
      %s82 = sphi 0, %s82
      %s84 = sphi 0, %s82
      %s85 = sphi 0, %s84
      %s99 = sphi 0, %s85
      %s103 = sphi 0, %s103
      %s105 = sphi 0, %s103
      %s106 = sphi 0, %s105
      %s120 = sphi 0, %s106
      %s124 = sphi 0, %s124
      %s126 = sphi 0, %s124
      %s127 = sphi 0, %s126
      %s141 = sphi 0, %s127
      %s145 = sphi 0, %s145
      %s147 = sphi 0, %s145
      %s148 = sphi 0, %s147
      %s162 = sphi 0, %s148
      %s168 = sphi 0, %s170
      %s171 = sphi 0, %s168
      %s172 = sphi 0, %s171
      %s188 = sphi 0, %s172
    $region4: #{tpu_custom_call.1} parent=1 // loop_header_branch
      %25 = sbr.rel (%p23) target = $region8
    $region5: #{tpu_custom_call.1} parent=1 // loop_body
      %s27 = ssub.s32 %s22, 1
      %s28 = ssub.s32 %s22, 2
      %s29 = sadd.s32 %s22, 1
      %s30 = ssub.s32 %s22, %s29
      %p31 = scmp.eq.s32.totalorder %s30, 0
      %s33 = sadd.s32 %s32, 1
      %s34 = scalar_select %p31, %s32, %s33
      %p37 = pneg %p31
      %p38 = scmp.eq.s32.totalorder %s22, 1
      %p39 = por %p37, %p38
      %p40 = scmp.ne.s32.totalorder %s32, %s35
      %p41 = scmp.eq.s32.totalorder %s22, 0
      %p42 = por %p40, %p41
      %p43 = scmp.ne.s32.totalorder %s32, %s35
      %p44 = scmp.eq.s32.totalorder %s27, 1
      %p45 = por %p43, %p44
      %p46 = scmp.ne.s32.totalorder %s35, %s36
      %p47 = scmp.eq.s32.totalorder %s27, 0
      %p48 = por %p46, %p47
      %p49 = scmp.ne.s32.totalorder %s35, %s36
      %p50 = scmp.eq.s32.totalorder %s28, 1
      %p51 = por %p49, %p50
      %p53 = scmp.ne.s32.totalorder %s36, %s52
      %p54 = scmp.eq.s32.totalorder %s28, 0
      %p55 = por %p53, %p54
      %s56 = ssub.s32 %s22, %s29
      %p57 = scmp.eq.s32.totalorder %s56, 0
      %s59 = sadd.s32 %s58, 1
      %s60 = scalar_select %p57, %s58, %s59
      %p63 = pneg %p57
      %p64 = scmp.eq.s32.totalorder %s22, 1
      %p65 = por %p63, %p64
      %p66 = scmp.ne.s32.totalorder %s58, %s61
      %p67 = scmp.eq.s32.totalorder %s22, 0
      %p68 = por %p66, %p67
      %p69 = scmp.ne.s32.totalorder %s58, %s61
      %p70 = scmp.eq.s32.totalorder %s27, 1
      %p71 = por %p69, %p70
      %p72 = scmp.ne.s32.totalorder %s61, %s62
      %p73 = scmp.eq.s32.totalorder %s27, 0
      %p74 = por %p72, %p73
      %p75 = scmp.ne.s32.totalorder %s61, %s62
      %p76 = scmp.eq.s32.totalorder %s28, 1
      %p77 = por %p75, %p76
      %p79 = scmp.ne.s32.totalorder %s62, %s78
      %p80 = scmp.eq.s32.totalorder %s28, 0
      %p81 = por %p79, %p80
      %s83 = sadd.s32 %s82, 1
      %p86 = scmp.eq.s32.totalorder %s22, 1
      %p87 = scmp.ne.s32.totalorder %s82, %s84
      %p88 = scmp.eq.s32.totalorder %s22, 0
      %p89 = por %p87, %p88
      %p90 = scmp.ne.s32.totalorder %s82, %s84
      %p91 = scmp.eq.s32.totalorder %s27, 1
      %p92 = por %p90, %p91
      %p93 = scmp.ne.s32.totalorder %s84, %s85
      %p94 = scmp.eq.s32.totalorder %s27, 0
      %p95 = por %p93, %p94
      %p96 = scmp.ne.s32.totalorder %s84, %s85
      %p97 = scmp.eq.s32.totalorder %s28, 1
      %p98 = por %p96, %p97
      %p100 = scmp.ne.s32.totalorder %s85, %s99
      %p101 = scmp.eq.s32.totalorder %s28, 0
      %p102 = por %p100, %p101
      %s104 = sadd.s32 %s103, 1
      %p107 = scmp.eq.s32.totalorder %s22, 1
      %p108 = scmp.ne.s32.totalorder %s103, %s105
      %p109 = scmp.eq.s32.totalorder %s22, 0
      %p110 = por %p108, %p109
      %p111 = scmp.ne.s32.totalorder %s103, %s105
      %p112 = scmp.eq.s32.totalorder %s27, 1
      %p113 = por %p111, %p112
      %p114 = scmp.ne.s32.totalorder %s105, %s106
      %p115 = scmp.eq.s32.totalorder %s27, 0
      %p116 = por %p114, %p115
      %p117 = scmp.ne.s32.totalorder %s105, %s106
      %p118 = scmp.eq.s32.totalorder %s28, 1
      %p119 = por %p117, %p118
      %p121 = scmp.ne.s32.totalorder %s106, %s120
      %p122 = scmp.eq.s32.totalorder %s28, 0
      %p123 = por %p121, %p122
      %s125 = sadd.s32 %s124, 1
      %p128 = scmp.eq.s32.totalorder %s22, 1
      %p129 = scmp.ne.s32.totalorder %s124, %s126
      %p130 = scmp.eq.s32.totalorder %s22, 0
      %p131 = por %p129, %p130
      %p132 = scmp.ne.s32.totalorder %s124, %s126
      %p133 = scmp.eq.s32.totalorder %s27, 1
      %p134 = por %p132, %p133
      %p135 = scmp.ne.s32.totalorder %s126, %s127
      %p136 = scmp.eq.s32.totalorder %s27, 0
      %p137 = por %p135, %p136
      %p138 = scmp.ne.s32.totalorder %s126, %s127
      %p139 = scmp.eq.s32.totalorder %s28, 1
      %p140 = por %p138, %p139
      %p142 = scmp.ne.s32.totalorder %s127, %s141
      %p143 = scmp.eq.s32.totalorder %s28, 0
      %p144 = por %p142, %p143
      %s146 = sadd.s32 %s145, 1
      %p149 = scmp.eq.s32.totalorder %s22, 1
      %p150 = scmp.ne.s32.totalorder %s145, %s147
      %p151 = scmp.eq.s32.totalorder %s22, 0
      %p152 = por %p150, %p151
      %p153 = scmp.ne.s32.totalorder %s145, %s147
      %p154 = scmp.eq.s32.totalorder %s27, 1
      %p155 = por %p153, %p154
      %p156 = scmp.ne.s32.totalorder %s147, %s148
      %p157 = scmp.eq.s32.totalorder %s27, 0
      %p158 = por %p156, %p157
      %p159 = scmp.ne.s32.totalorder %s147, %s148
      %p160 = scmp.eq.s32.totalorder %s28, 1
      %p161 = por %p159, %p160
      %p163 = scmp.ne.s32.totalorder %s148, %s162
      %p164 = scmp.eq.s32.totalorder %s28, 0
      %p165 = por %p163, %p164
      %s166 = ssub.s32 %s22, %s29
      %p167 = scmp.eq.s32.totalorder %s166, 0
      %s169 = sadd.s32 %s168, 1
      %s170 = scalar_select %p167, %s168, %s169
      %p173 = pneg %p167
      %p174 = scmp.eq.s32.totalorder %s22, 1
      %p175 = por %p173, %p174
      %p176 = scmp.ne.s32.totalorder %s168, %s171
      %p177 = scmp.eq.s32.totalorder %s22, 0
      %p178 = por %p176, %p177
      %p179 = scmp.ne.s32.totalorder %s168, %s171
      %p180 = scmp.eq.s32.totalorder %s27, 1
      %p181 = por %p179, %p180
      %p182 = scmp.ne.s32.totalorder %s171, %s172
      %p183 = scmp.eq.s32.totalorder %s27, 0
      %p184 = por %p182, %p183
      %p185 = scmp.ne.s32.totalorder %s171, %s172
      %p186 = scmp.eq.s32.totalorder %s28, 1
      %p187 = por %p185, %p186
      %p189 = scmp.ne.s32.totalorder %s172, %s188
      %p190 = scmp.eq.s32.totalorder %s28, 0
      %p191 = por %p189, %p190
      %p192 = scmp.le.s32.totalorder 1, %s22
      %p193 = scmp.lt.s32.totalorder %s22, 3
      %p194 = pnand %p192, %p193
      %p195 = pneg %p194
      // Predicated region
      $region9: #{tpu_custom_call.1} parent=5 // pred_check
        _
      $region10: #{tpu_custom_call.1} parent=5 // pred_check_branch
        %197 = sbr.rel (%p194) target = $region12
      $region11: #{tpu_custom_call.1} parent=5 // pred_region
        %s198 = ssub.s32 %s22, 1
        // Predicated region
        $region13: #{tpu_custom_call.1} parent=11 // pred_check
          %p199 = pneg %p95
        $region14: #{tpu_custom_call.1} parent=11 // pred_check_branch
          %201 = sbr.rel (%p199) target = $region16
        $region15: #{tpu_custom_call.1} parent=11 // pred_region
          %s203 = ssub.s32 512, 512
          %204 = vsyncadd [#allocation6], %s203
          %s205 = sshll.u32 [#allocation7], 4
          %s206 = int_to_ptr.vmem [resolvable:$true] %s205
          %211 = dma.hbm_to_vmem [thread:$0]  %s2, 512, %s206, [#allocation6], 128, 128, 8
        $region16: #{tpu_custom_call.1} parent=11 // pred_fallthru
          _
        // Predicated region
        $region17: #{tpu_custom_call.1} parent=11 // pred_check
          %p212 = pneg %p116
        $region18: #{tpu_custom_call.1} parent=11 // pred_check_branch
          %214 = sbr.rel (%p212) target = $region20
        $region19: #{tpu_custom_call.1} parent=11 // pred_region
          %s216 = ssub.s32 512, 512
          %217 = vsyncadd [#allocation9], %s216
          %s218 = sshll.u32 [#allocation8], 4
          %s219 = int_to_ptr.vmem [resolvable:$true] %s218
          %224 = dma.hbm_to_vmem [thread:$0]  %s3, 512, %s219, [#allocation9], 128, 128, 8
        $region20: #{tpu_custom_call.1} parent=11 // pred_fallthru
          _
        // Predicated region
        $region21: #{tpu_custom_call.1} parent=11 // pred_check
          %p225 = pneg %p137
        $region22: #{tpu_custom_call.1} parent=11 // pred_check_branch
          %227 = sbr.rel (%p225) target = $region24
        $region23: #{tpu_custom_call.1} parent=11 // pred_region
          _
        $region24: #{tpu_custom_call.1} parent=11 // pred_fallthru
          _
        // Predicated region
        $region25: #{tpu_custom_call.1} parent=11 // pred_check
          %p228 = pneg %p158
        $region26: #{tpu_custom_call.1} parent=11 // pred_check_branch
          %230 = sbr.rel (%p228) target = $region28
        $region27: #{tpu_custom_call.1} parent=11 // pred_region
          _
        $region28: #{tpu_custom_call.1} parent=11 // pred_fallthru
          _
      $region12: #{tpu_custom_call.1} parent=5 // pred_fallthru
        _
      %p231 = scmp.lt.s32.totalorder %s22, 2
      // Predicated region
      $region29: #{tpu_custom_call.1} parent=5 // pred_check
        %p232 = pneg %p231
      $region30: #{tpu_custom_call.1} parent=5 // pred_check_branch
        %234 = sbr.rel (%p232) target = $region32
      $region31: #{tpu_custom_call.1} parent=5 // pred_region
        // Predicated region
        $region33: #{tpu_custom_call.1} parent=31 // pred_check
          %p235 = pneg %p42
        $region34: #{tpu_custom_call.1} parent=31 // pred_check_branch
          %237 = sbr.rel (%p235) target = $region36
        $region35: #{tpu_custom_call.1} parent=31 // pred_region
          %s238 = sand.u32 %s32, 1
          %s239 = scalar_lea.sflag [#allocation3], %s238
          %s240 = sand.u32 %s32, 1
          %s241 = smul.addr %s240, 32
          %s242 = scalar_lea.vmem [#allocation2], %s241
          %s244 = ssub.s32 512, 512
          %245 = vsyncadd %s239, %s244
          %s246 = smul.addr %s22, 4
          %s247 = smul.addr %s246, 128
          %s248 = scalar_lea.hbm %s0, %s247
          %s250 = sshll.u32 %s242, 4
          %s251 = int_to_ptr.vmem [resolvable:$true] %s250
          %253 = dma.hbm_to_vmem [thread:$0]  %s248, 512, %s251, %s239
        $region36: #{tpu_custom_call.1} parent=31 // pred_fallthru
          _
        // Predicated region
        $region37: #{tpu_custom_call.1} parent=31 // pred_check
          %p254 = pneg %p68
        $region38: #{tpu_custom_call.1} parent=31 // pred_check_branch
          %256 = sbr.rel (%p254) target = $region40
        $region39: #{tpu_custom_call.1} parent=31 // pred_region
          %s257 = sand.u32 %s22, 1
          %s258 = scalar_lea.sflag [#allocation6], %s257
          %s259 = sand.u32 %s58, 1
          %s260 = smul.addr %s259, 8
          %s261 = scalar_lea.vmem [#allocation5], %s260
          %s263 = ssub.s32 128, 128
          %264 = vsyncadd %s258, %s263
          %s265 = smul.addr %s22, 128
          %s266 = scalar_lea.hbm %s1, %s265
          %s268 = sshll.u32 %s261, 4
          %s269 = int_to_ptr.vmem [resolvable:$true] %s268
          %271 = dma.hbm_to_vmem [thread:$0]  %s266, 128, %s269, %s258
        $region40: #{tpu_custom_call.1} parent=31 // pred_fallthru
          _
      $region32: #{tpu_custom_call.1} parent=5 // pred_fallthru
        _
      %p272 = scmp.le.s32.totalorder 1, %s22
      %p273 = scmp.lt.s32.totalorder %s22, 3
      %p274 = pnand %p272, %p273
      %p275 = pneg %p274
      // Predicated region
      $region41: #{tpu_custom_call.1} parent=5 // pred_check
        _
      $region42: #{tpu_custom_call.1} parent=5 // pred_check_branch
        %277 = sbr.rel (%p274) target = $region44
      $region43: #{tpu_custom_call.1} parent=5 // pred_region
        %s278 = ssub.s32 %s22, 1
        %s279 = sand.u32 %s35, 1
        %s280 = scalar_lea.sflag [#allocation3], %s279
        %s281 = sand.u32 %s35, 1
        %s282 = smul.addr %s281, 32
        %s283 = scalar_lea.vmem [#allocation2], %s282
        // Predicated region
        $region45: #{tpu_custom_call.1} parent=43 // pred_check
          %p284 = pneg %p48
        $region46: #{tpu_custom_call.1} parent=43 // pred_check_branch
          %286 = sbr.rel (%p284) target = $region48
        $region47: #{tpu_custom_call.1} parent=43 // pred_region
          %287 = dma.done %s280, 512
        $region48: #{tpu_custom_call.1} parent=43 // pred_fallthru
          _
        %s288 = sand.u32 %s27, 1
        %s289 = scalar_lea.sflag [#allocation6], %s288
        %s290 = sand.u32 %s61, 1
        %s291 = smul.addr %s290, 8
        %s292 = scalar_lea.vmem [#allocation5], %s291
        // Predicated region
        $region49: #{tpu_custom_call.1} parent=43 // pred_check
          %p293 = pneg %p74
        $region50: #{tpu_custom_call.1} parent=43 // pred_check_branch
          %295 = sbr.rel (%p293) target = $region52
        $region51: #{tpu_custom_call.1} parent=43 // pred_region
          %296 = dma.done %s289, 128
        $region52: #{tpu_custom_call.1} parent=43 // pred_fallthru
          _
        // Predicated region
        $region53: #{tpu_custom_call.1} parent=43 // pred_check
          %p297 = pneg %p95
        $region54: #{tpu_custom_call.1} parent=43 // pred_check_branch
          %299 = sbr.rel (%p297) target = $region56
        $region55: #{tpu_custom_call.1} parent=43 // pred_region
          %300 = dma.done [#allocation6], 512
        $region56: #{tpu_custom_call.1} parent=43 // pred_fallthru
          _
        // Predicated region
        $region57: #{tpu_custom_call.1} parent=43 // pred_check
          %p301 = pneg %p116
        $region58: #{tpu_custom_call.1} parent=43 // pred_check_branch
          %303 = sbr.rel (%p301) target = $region60
        $region59: #{tpu_custom_call.1} parent=43 // pred_region
          %304 = dma.done [#allocation9], 512
        $region60: #{tpu_custom_call.1} parent=43 // pred_fallthru
          _
        %s305 = sand.u32 %s35, 1
        %s306 = scalar_lea.sflag [#allocation3], %s305
        %s307 = sand.u32 %s35, 1
        %s308 = smul.addr %s307, 32
        %s309 = scalar_lea.vmem [#allocation2], %s308
        %p310 = pneg %p48
        %p311 = pneg %p45
        %s312 = sand.u32 %s27, 1
        %s313 = scalar_lea.sflag [#allocation6], %s312
        %s314 = sand.u32 %s61, 1
        %s315 = smul.addr %s314, 8
        %s316 = scalar_lea.vmem [#allocation5], %s315
        %p317 = pneg %p74
        %p318 = pneg %p71
        %p319 = pneg %p95
        %p320 = pneg %p92
        %p321 = pneg %p116
        %p322 = pneg %p113
        %p323 = pneg %p137
        %p324 = pneg %p134
        %p325 = pneg %p158
        %p326 = pneg %p155
        %p327 = pneg %p184
        %p328 = pneg %p181
        %s329 = sand.u32 %s171, 1
        %s330 = scalar_lea.sflag [#allocation4], %s329
        %s331 = sand.u32 %s171, 1
        %s332 = smul.addr %s331, 8
        %s333 = scalar_lea.vmem [#allocation10], %s332
        %v334 = vld [vmem:[#allocation7] sm:$0xff]
        %v335 = vld [vmem:[#allocation7 + $0x8] sm:$0xff]
        %v336 = vld [vmem:[#allocation7 + $0x10] sm:$0xff]
        %v337 = vld [vmem:[#allocation7 + $0x18] sm:$0xff]
        %v338 = vld [vmem:[#allocation8] sm:$0xff]
        %v339 = vld [vmem:[#allocation8 + $0x8] sm:$0xff]
        %v340 = vld [vmem:[#allocation8 + $0x10] sm:$0xff]
        %v341 = vld [vmem:[#allocation8 + $0x18] sm:$0xff]
        %v342 = vld [vmem:[%s4] sm:$0x1]
        %v343 = vld [vmem:[%s5] sm:$0x1]
        %v344 = vld [vmem:[%s283] sm:$0xff]
        %v345 = vld [vmem:[%s283 + $0x8] sm:$0xff]
        %v346 = vld [vmem:[%s283 + $0x10] sm:$0xff]
        %v347 = vld [vmem:[%s283 + $0x18] sm:$0xff]
        %v348 = vld [vmem:[%s292] sm:$0xff]
        %350 = vrot.lane.b32.xlu0 %v344, 112
        %v351 = vpop.permute.xlu0 %350
        %353 = vrot.lane.b32.xlu0 %v344, 96
        %v354 = vpop.permute.xlu0 %353
        %356 = vrot.lane.b32.xlu0 %v344, 80
        %v357 = vpop.permute.xlu0 %356
        %359 = vrot.lane.b32.xlu0 %v344, 64
        %v360 = vpop.permute.xlu0 %359
        %362 = vrot.lane.b32.xlu0 %v344, 48
        %v363 = vpop.permute.xlu0 %362
        %365 = vrot.lane.b32.xlu0 %v344, 32
        %v366 = vpop.permute.xlu0 %365
        %368 = vrot.lane.b32.xlu0 %v344, 16
        %v369 = vpop.permute.xlu0 %368
        %372 = vrot.lane.b32.xlu0 %v345, 112
        %v373 = vpop.permute.xlu0 %372
        %375 = vrot.lane.b32.xlu0 %v345, 96
        %v376 = vpop.permute.xlu0 %375
        %378 = vrot.lane.b32.xlu0 %v345, 80
        %v379 = vpop.permute.xlu0 %378
        %381 = vrot.lane.b32.xlu0 %v345, 64
        %v382 = vpop.permute.xlu0 %381
        %384 = vrot.lane.b32.xlu0 %v345, 48
        %v385 = vpop.permute.xlu0 %384
        %387 = vrot.lane.b32.xlu0 %v345, 32
        %v388 = vpop.permute.xlu0 %387
        %390 = vrot.lane.b32.xlu0 %v345, 16
        %v391 = vpop.permute.xlu0 %390
        %394 = vrot.lane.b32.xlu0 %v346, 112
        %v395 = vpop.permute.xlu0 %394
        %397 = vrot.lane.b32.xlu0 %v346, 96
        %v398 = vpop.permute.xlu0 %397
        %400 = vrot.lane.b32.xlu0 %v346, 80
        %v401 = vpop.permute.xlu0 %400
        %403 = vrot.lane.b32.xlu0 %v346, 64
        %v404 = vpop.permute.xlu0 %403
        %406 = vrot.lane.b32.xlu0 %v346, 48
        %v407 = vpop.permute.xlu0 %406
        %409 = vrot.lane.b32.xlu0 %v346, 32
        %v410 = vpop.permute.xlu0 %409
        %412 = vrot.lane.b32.xlu0 %v346, 16
        %v413 = vpop.permute.xlu0 %412
        %416 = vrot.lane.b32.xlu0 %v347, 112
        %v417 = vpop.permute.xlu0 %416
        %419 = vrot.lane.b32.xlu0 %v347, 96
        %v420 = vpop.permute.xlu0 %419
        %422 = vrot.lane.b32.xlu0 %v347, 80
        %v423 = vpop.permute.xlu0 %422
        %425 = vrot.lane.b32.xlu0 %v347, 64
        %v426 = vpop.permute.xlu0 %425
        %428 = vrot.lane.b32.xlu0 %v347, 48
        %v429 = vpop.permute.xlu0 %428
        %431 = vrot.lane.b32.xlu0 %v347, 32
        %v432 = vpop.permute.xlu0 %431
        %434 = vrot.lane.b32.xlu0 %v347, 16
        %v435 = vpop.permute.xlu0 %434
        %v437 = vcombine.low %v344, %v354
        %v438 = vcombine.high %v344, %v354
        %v440 = vunpack.c.l.s4 1983009808
        %v441 = vunpack.c.0.s8 %v440
        %v442 = vlaneseq
        %v443 = vshrl.u32 %v442, 7
        %v444 = vsub.s32 %v441, %v443
        %v445 = vrot.slane %v437, %v444
        %v447 = vunpack.c.l.s4 1983009808
        %v448 = vunpack.c.0.s8 %v447
        %v449 = vlaneseq
        %v450 = vshrl.u32 %v449, 7
        %v451 = vsub.s32 %v448, %v450
        %v452 = vrot.slane %v438, %v451
        %v453 = vcombine.low %v351, %v357
        %v454 = vcombine.high %v351, %v357
        %v456 = vunpack.c.l.s4 1983009808
        %v457 = vunpack.c.0.s8 %v456
        %v458 = vlaneseq
        %v459 = vshrl.u32 %v458, 7
        %v460 = vsub.s32 %v457, %v459
        %v461 = vrot.slane %v453, %v460
        %v463 = vunpack.c.l.s4 1983009808
        %v464 = vunpack.c.0.s8 %v463
        %v465 = vlaneseq
        %v466 = vshrl.u32 %v465, 7
        %v467 = vsub.s32 %v464, %v466
        %v468 = vrot.slane %v454, %v467
        %v469 = vcombine.low %v360, %v366
        %v470 = vcombine.high %v360, %v366
        %v472 = vunpack.c.l.s4 1983009808
        %v473 = vunpack.c.0.s8 %v472
        %v474 = vlaneseq
        %v475 = vshrl.u32 %v474, 7
        %v476 = vsub.s32 %v473, %v475
        %v477 = vrot.slane %v469, %v476
        %v479 = vunpack.c.l.s4 1983009808
        %v480 = vunpack.c.0.s8 %v479
        %v481 = vlaneseq
        %v482 = vshrl.u32 %v481, 7
        %v483 = vsub.s32 %v480, %v482
        %v484 = vrot.slane %v470, %v483
        %v485 = vcombine.low %v363, %v369
        %v486 = vcombine.high %v363, %v369
        %v488 = vunpack.c.l.s4 1983009808
        %v489 = vunpack.c.0.s8 %v488
        %v490 = vlaneseq
        %v491 = vshrl.u32 %v490, 7
        %v492 = vsub.s32 %v489, %v491
        %v493 = vrot.slane %v485, %v492
        %v495 = vunpack.c.l.s4 1983009808
        %v496 = vunpack.c.0.s8 %v495
        %v497 = vlaneseq
        %v498 = vshrl.u32 %v497, 7
        %v499 = vsub.s32 %v496, %v498
        %v500 = vrot.slane %v486, %v499
        %v501 = vcombine.low %v445, %v461
        %v502 = vcombine.high %v445, %v461
        %v504 = vunpack.c.l.s4 1934713408
        %v505 = vunpack.c.0.s8 %v504
        %v506 = vlaneseq
        %v507 = vshrl.u32 %v506, 7
        %v508 = vsub.s32 %v505, %v507
        %v509 = vrot.slane %v501, %v508
        %v511 = vunpack.c.l.s4 1934713408
        %v512 = vunpack.c.0.s8 %v511
        %v513 = vlaneseq
        %v514 = vshrl.u32 %v513, 7
        %v515 = vsub.s32 %v512, %v514
        %v516 = vrot.slane %v502, %v515
        %v517 = vcombine.low %v452, %v468
        %v518 = vcombine.high %v452, %v468
        %v520 = vunpack.c.l.s4 1934713408
        %v521 = vunpack.c.0.s8 %v520
        %v522 = vlaneseq
        %v523 = vshrl.u32 %v522, 7
        %v524 = vsub.s32 %v521, %v523
        %v525 = vrot.slane %v517, %v524
        %v527 = vunpack.c.l.s4 1934713408
        %v528 = vunpack.c.0.s8 %v527
        %v529 = vlaneseq
        %v530 = vshrl.u32 %v529, 7
        %v531 = vsub.s32 %v528, %v530
        %v532 = vrot.slane %v518, %v531
        %v533 = vcombine.low %v477, %v493
        %v534 = vcombine.high %v477, %v493
        %v536 = vunpack.c.l.s4 1934713408
        %v537 = vunpack.c.0.s8 %v536
        %v538 = vlaneseq
        %v539 = vshrl.u32 %v538, 7
        %v540 = vsub.s32 %v537, %v539
        %v541 = vrot.slane %v533, %v540
        %v543 = vunpack.c.l.s4 1934713408
        %v544 = vunpack.c.0.s8 %v543
        %v545 = vlaneseq
        %v546 = vshrl.u32 %v545, 7
        %v547 = vsub.s32 %v544, %v546
        %v548 = vrot.slane %v534, %v547
        %v549 = vcombine.low %v484, %v500
        %v550 = vcombine.high %v484, %v500
        %v552 = vunpack.c.l.s4 1934713408
        %v553 = vunpack.c.0.s8 %v552
        %v554 = vlaneseq
        %v555 = vshrl.u32 %v554, 7
        %v556 = vsub.s32 %v553, %v555
        %v557 = vrot.slane %v549, %v556
        %v559 = vunpack.c.l.s4 1934713408
        %v560 = vunpack.c.0.s8 %v559
        %v561 = vlaneseq
        %v562 = vshrl.u32 %v561, 7
        %v563 = vsub.s32 %v560, %v562
        %v564 = vrot.slane %v550, %v563
        %v565 = vcombine.low %v509, %v541
        %v566 = vcombine.high %v509, %v541
        %v567 = vcombine.low %v516, %v548
        %v568 = vcombine.high %v516, %v548
        %v569 = vcombine.low %v525, %v557
        %v570 = vcombine.high %v525, %v557
        %v571 = vcombine.low %v532, %v564
        %v572 = vcombine.high %v532, %v564
        %v573 = vcombine.low %v345, %v376
        %v574 = vcombine.high %v345, %v376
        %v576 = vunpack.c.l.s4 1983009808
        %v577 = vunpack.c.0.s8 %v576
        %v578 = vlaneseq
        %v579 = vshrl.u32 %v578, 7
        %v580 = vsub.s32 %v577, %v579
        %v581 = vrot.slane %v573, %v580
        %v583 = vunpack.c.l.s4 1983009808
        %v584 = vunpack.c.0.s8 %v583
        %v585 = vlaneseq
        %v586 = vshrl.u32 %v585, 7
        %v587 = vsub.s32 %v584, %v586
        %v588 = vrot.slane %v574, %v587
        %v589 = vcombine.low %v373, %v379
        %v590 = vcombine.high %v373, %v379
        %v592 = vunpack.c.l.s4 1983009808
        %v593 = vunpack.c.0.s8 %v592
        %v594 = vlaneseq
        %v595 = vshrl.u32 %v594, 7
        %v596 = vsub.s32 %v593, %v595
        %v597 = vrot.slane %v589, %v596
        %v599 = vunpack.c.l.s4 1983009808
        %v600 = vunpack.c.0.s8 %v599
        %v601 = vlaneseq
        %v602 = vshrl.u32 %v601, 7
        %v603 = vsub.s32 %v600, %v602
        %v604 = vrot.slane %v590, %v603
        %v605 = vcombine.low %v382, %v388
        %v606 = vcombine.high %v382, %v388
        %v608 = vunpack.c.l.s4 1983009808
        %v609 = vunpack.c.0.s8 %v608
        %v610 = vlaneseq
        %v611 = vshrl.u32 %v610, 7
        %v612 = vsub.s32 %v609, %v611
        %v613 = vrot.slane %v605, %v612
        %v615 = vunpack.c.l.s4 1983009808
        %v616 = vunpack.c.0.s8 %v615
        %v617 = vlaneseq
        %v618 = vshrl.u32 %v617, 7
        %v619 = vsub.s32 %v616, %v618
        %v620 = vrot.slane %v606, %v619
        %v621 = vcombine.low %v385, %v391
        %v622 = vcombine.high %v385, %v391
        %v624 = vunpack.c.l.s4 1983009808
        %v625 = vunpack.c.0.s8 %v624
        %v626 = vlaneseq
        %v627 = vshrl.u32 %v626, 7
        %v628 = vsub.s32 %v625, %v627
        %v629 = vrot.slane %v621, %v628
        %v631 = vunpack.c.l.s4 1983009808
        %v632 = vunpack.c.0.s8 %v631
        %v633 = vlaneseq
        %v634 = vshrl.u32 %v633, 7
        %v635 = vsub.s32 %v632, %v634
        %v636 = vrot.slane %v622, %v635
        %v637 = vcombine.low %v581, %v597
        %v638 = vcombine.high %v581, %v597
        %v640 = vunpack.c.l.s4 1934713408
        %v641 = vunpack.c.0.s8 %v640
        %v642 = vlaneseq
        %v643 = vshrl.u32 %v642, 7
        %v644 = vsub.s32 %v641, %v643
        %v645 = vrot.slane %v637, %v644
        %v647 = vunpack.c.l.s4 1934713408
        %v648 = vunpack.c.0.s8 %v647
        %v649 = vlaneseq
        %v650 = vshrl.u32 %v649, 7
        %v651 = vsub.s32 %v648, %v650
        %v652 = vrot.slane %v638, %v651
        %v653 = vcombine.low %v588, %v604
        %v654 = vcombine.high %v588, %v604
        %v656 = vunpack.c.l.s4 1934713408
        %v657 = vunpack.c.0.s8 %v656
        %v658 = vlaneseq
        %v659 = vshrl.u32 %v658, 7
        %v660 = vsub.s32 %v657, %v659
        %v661 = vrot.slane %v653, %v660
        %v663 = vunpack.c.l.s4 1934713408
        %v664 = vunpack.c.0.s8 %v663
        %v665 = vlaneseq
        %v666 = vshrl.u32 %v665, 7
        %v667 = vsub.s32 %v664, %v666
        %v668 = vrot.slane %v654, %v667
        %v669 = vcombine.low %v613, %v629
        %v670 = vcombine.high %v613, %v629
        %v672 = vunpack.c.l.s4 1934713408
        %v673 = vunpack.c.0.s8 %v672
        %v674 = vlaneseq
        %v675 = vshrl.u32 %v674, 7
        %v676 = vsub.s32 %v673, %v675
        %v677 = vrot.slane %v669, %v676
        %v679 = vunpack.c.l.s4 1934713408
        %v680 = vunpack.c.0.s8 %v679
        %v681 = vlaneseq
        %v682 = vshrl.u32 %v681, 7
        %v683 = vsub.s32 %v680, %v682
        %v684 = vrot.slane %v670, %v683
        %v685 = vcombine.low %v620, %v636
        %v686 = vcombine.high %v620, %v636
        %v688 = vunpack.c.l.s4 1934713408
        %v689 = vunpack.c.0.s8 %v688
        %v690 = vlaneseq
        %v691 = vshrl.u32 %v690, 7
        %v692 = vsub.s32 %v689, %v691
        %v693 = vrot.slane %v685, %v692
        %v695 = vunpack.c.l.s4 1934713408
        %v696 = vunpack.c.0.s8 %v695
        %v697 = vlaneseq
        %v698 = vshrl.u32 %v697, 7
        %v699 = vsub.s32 %v696, %v698
        %v700 = vrot.slane %v686, %v699
        %v701 = vcombine.low %v645, %v677
        %v702 = vcombine.high %v645, %v677
        %v703 = vcombine.low %v652, %v684
        %v704 = vcombine.high %v652, %v684
        %v705 = vcombine.low %v661, %v693
        %v706 = vcombine.high %v661, %v693
        %v707 = vcombine.low %v668, %v700
        %v708 = vcombine.high %v668, %v700
        %v709 = vcombine.low %v346, %v398
        %v710 = vcombine.high %v346, %v398
        %v712 = vunpack.c.l.s4 1983009808
        %v713 = vunpack.c.0.s8 %v712
        %v714 = vlaneseq
        %v715 = vshrl.u32 %v714, 7
        %v716 = vsub.s32 %v713, %v715
        %v717 = vrot.slane %v709, %v716
        %v719 = vunpack.c.l.s4 1983009808
        %v720 = vunpack.c.0.s8 %v719
        %v721 = vlaneseq
        %v722 = vshrl.u32 %v721, 7
        %v723 = vsub.s32 %v720, %v722
        %v724 = vrot.slane %v710, %v723
        %v725 = vcombine.low %v395, %v401
        %v726 = vcombine.high %v395, %v401
        %v728 = vunpack.c.l.s4 1983009808
        %v729 = vunpack.c.0.s8 %v728
        %v730 = vlaneseq
        %v731 = vshrl.u32 %v730, 7
        %v732 = vsub.s32 %v729, %v731
        %v733 = vrot.slane %v725, %v732
        %v735 = vunpack.c.l.s4 1983009808
        %v736 = vunpack.c.0.s8 %v735
        %v737 = vlaneseq
        %v738 = vshrl.u32 %v737, 7
        %v739 = vsub.s32 %v736, %v738
        %v740 = vrot.slane %v726, %v739
        %v741 = vcombine.low %v404, %v410
        %v742 = vcombine.high %v404, %v410
        %v744 = vunpack.c.l.s4 1983009808
        %v745 = vunpack.c.0.s8 %v744
        %v746 = vlaneseq
        %v747 = vshrl.u32 %v746, 7
        %v748 = vsub.s32 %v745, %v747
        %v749 = vrot.slane %v741, %v748
        %v751 = vunpack.c.l.s4 1983009808
        %v752 = vunpack.c.0.s8 %v751
        %v753 = vlaneseq
        %v754 = vshrl.u32 %v753, 7
        %v755 = vsub.s32 %v752, %v754
        %v756 = vrot.slane %v742, %v755
        %v757 = vcombine.low %v407, %v413
        %v758 = vcombine.high %v407, %v413
        %v760 = vunpack.c.l.s4 1983009808
        %v761 = vunpack.c.0.s8 %v760
        %v762 = vlaneseq
        %v763 = vshrl.u32 %v762, 7
        %v764 = vsub.s32 %v761, %v763
        %v765 = vrot.slane %v757, %v764
        %v767 = vunpack.c.l.s4 1983009808
        %v768 = vunpack.c.0.s8 %v767
        %v769 = vlaneseq
        %v770 = vshrl.u32 %v769, 7
        %v771 = vsub.s32 %v768, %v770
        %v772 = vrot.slane %v758, %v771
        %v773 = vcombine.low %v717, %v733
        %v774 = vcombine.high %v717, %v733
        %v776 = vunpack.c.l.s4 1934713408
        %v777 = vunpack.c.0.s8 %v776
        %v778 = vlaneseq
        %v779 = vshrl.u32 %v778, 7
        %v780 = vsub.s32 %v777, %v779
        %v781 = vrot.slane %v773, %v780
        %v783 = vunpack.c.l.s4 1934713408
        %v784 = vunpack.c.0.s8 %v783
        %v785 = vlaneseq
        %v786 = vshrl.u32 %v785, 7
        %v787 = vsub.s32 %v784, %v786
        %v788 = vrot.slane %v774, %v787
        %v789 = vcombine.low %v724, %v740
        %v790 = vcombine.high %v724, %v740
        %v792 = vunpack.c.l.s4 1934713408
        %v793 = vunpack.c.0.s8 %v792
        %v794 = vlaneseq
        %v795 = vshrl.u32 %v794, 7
        %v796 = vsub.s32 %v793, %v795
        %v797 = vrot.slane %v789, %v796
        %v799 = vunpack.c.l.s4 1934713408
        %v800 = vunpack.c.0.s8 %v799
        %v801 = vlaneseq
        %v802 = vshrl.u32 %v801, 7
        %v803 = vsub.s32 %v800, %v802
        %v804 = vrot.slane %v790, %v803
        %v805 = vcombine.low %v749, %v765
        %v806 = vcombine.high %v749, %v765
        %v808 = vunpack.c.l.s4 1934713408
        %v809 = vunpack.c.0.s8 %v808
        %v810 = vlaneseq
        %v811 = vshrl.u32 %v810, 7
        %v812 = vsub.s32 %v809, %v811
        %v813 = vrot.slane %v805, %v812
        %v815 = vunpack.c.l.s4 1934713408
        %v816 = vunpack.c.0.s8 %v815
        %v817 = vlaneseq
        %v818 = vshrl.u32 %v817, 7
        %v819 = vsub.s32 %v816, %v818
        %v820 = vrot.slane %v806, %v819
        %v821 = vcombine.low %v756, %v772
        %v822 = vcombine.high %v756, %v772
        %v824 = vunpack.c.l.s4 1934713408
        %v825 = vunpack.c.0.s8 %v824
        %v826 = vlaneseq
        %v827 = vshrl.u32 %v826, 7
        %v828 = vsub.s32 %v825, %v827
        %v829 = vrot.slane %v821, %v828
        %v831 = vunpack.c.l.s4 1934713408
        %v832 = vunpack.c.0.s8 %v831
        %v833 = vlaneseq
        %v834 = vshrl.u32 %v833, 7
        %v835 = vsub.s32 %v832, %v834
        %v836 = vrot.slane %v822, %v835
        %v837 = vcombine.low %v781, %v813
        %v838 = vcombine.high %v781, %v813
        %v839 = vcombine.low %v788, %v820
        %v840 = vcombine.high %v788, %v820
        %v841 = vcombine.low %v797, %v829
        %v842 = vcombine.high %v797, %v829
        %v843 = vcombine.low %v804, %v836
        %v844 = vcombine.high %v804, %v836
        %v845 = vcombine.low %v347, %v420
        %v846 = vcombine.high %v347, %v420
        %v848 = vunpack.c.l.s4 1983009808
        %v849 = vunpack.c.0.s8 %v848
        %v850 = vlaneseq
        %v851 = vshrl.u32 %v850, 7
        %v852 = vsub.s32 %v849, %v851
        %v853 = vrot.slane %v845, %v852
        %v855 = vunpack.c.l.s4 1983009808
        %v856 = vunpack.c.0.s8 %v855
        %v857 = vlaneseq
        %v858 = vshrl.u32 %v857, 7
        %v859 = vsub.s32 %v856, %v858
        %v860 = vrot.slane %v846, %v859
        %v861 = vcombine.low %v417, %v423
        %v862 = vcombine.high %v417, %v423
        %v864 = vunpack.c.l.s4 1983009808
        %v865 = vunpack.c.0.s8 %v864
        %v866 = vlaneseq
        %v867 = vshrl.u32 %v866, 7
        %v868 = vsub.s32 %v865, %v867
        %v869 = vrot.slane %v861, %v868
        %v871 = vunpack.c.l.s4 1983009808
        %v872 = vunpack.c.0.s8 %v871
        %v873 = vlaneseq
        %v874 = vshrl.u32 %v873, 7
        %v875 = vsub.s32 %v872, %v874
        %v876 = vrot.slane %v862, %v875
        %v877 = vcombine.low %v426, %v432
        %v878 = vcombine.high %v426, %v432
        %v880 = vunpack.c.l.s4 1983009808
        %v881 = vunpack.c.0.s8 %v880
        %v882 = vlaneseq
        %v883 = vshrl.u32 %v882, 7
        %v884 = vsub.s32 %v881, %v883
        %v885 = vrot.slane %v877, %v884
        %v887 = vunpack.c.l.s4 1983009808
        %v888 = vunpack.c.0.s8 %v887
        %v889 = vlaneseq
        %v890 = vshrl.u32 %v889, 7
        %v891 = vsub.s32 %v888, %v890
        %v892 = vrot.slane %v878, %v891
        %v893 = vcombine.low %v429, %v435
        %v894 = vcombine.high %v429, %v435
        %v896 = vunpack.c.l.s4 1983009808
        %v897 = vunpack.c.0.s8 %v896
        %v898 = vlaneseq
        %v899 = vshrl.u32 %v898, 7
        %v900 = vsub.s32 %v897, %v899
        %v901 = vrot.slane %v893, %v900
        %v903 = vunpack.c.l.s4 1983009808
        %v904 = vunpack.c.0.s8 %v903
        %v905 = vlaneseq
        %v906 = vshrl.u32 %v905, 7
        %v907 = vsub.s32 %v904, %v906
        %v908 = vrot.slane %v894, %v907
        %v909 = vcombine.low %v853, %v869
        %v910 = vcombine.high %v853, %v869
        %v912 = vunpack.c.l.s4 1934713408
        %v913 = vunpack.c.0.s8 %v912
        %v914 = vlaneseq
        %v915 = vshrl.u32 %v914, 7
        %v916 = vsub.s32 %v913, %v915
        %v917 = vrot.slane %v909, %v916
        %v919 = vunpack.c.l.s4 1934713408
        %v920 = vunpack.c.0.s8 %v919
        %v921 = vlaneseq
        %v922 = vshrl.u32 %v921, 7
        %v923 = vsub.s32 %v920, %v922
        %v924 = vrot.slane %v910, %v923
        %v925 = vcombine.low %v860, %v876
        %v926 = vcombine.high %v860, %v876
        %v928 = vunpack.c.l.s4 1934713408
        %v929 = vunpack.c.0.s8 %v928
        %v930 = vlaneseq
        %v931 = vshrl.u32 %v930, 7
        %v932 = vsub.s32 %v929, %v931
        %v933 = vrot.slane %v925, %v932
        %v935 = vunpack.c.l.s4 1934713408
        %v936 = vunpack.c.0.s8 %v935
        %v937 = vlaneseq
        %v938 = vshrl.u32 %v937, 7
        %v939 = vsub.s32 %v936, %v938
        %v940 = vrot.slane %v926, %v939
        %v941 = vcombine.low %v885, %v901
        %v942 = vcombine.high %v885, %v901
        %v944 = vunpack.c.l.s4 1934713408
        %v945 = vunpack.c.0.s8 %v944
        %v946 = vlaneseq
        %v947 = vshrl.u32 %v946, 7
        %v948 = vsub.s32 %v945, %v947
        %v949 = vrot.slane %v941, %v948
        %v951 = vunpack.c.l.s4 1934713408
        %v952 = vunpack.c.0.s8 %v951
        %v953 = vlaneseq
        %v954 = vshrl.u32 %v953, 7
        %v955 = vsub.s32 %v952, %v954
        %v956 = vrot.slane %v942, %v955
        %v957 = vcombine.low %v892, %v908
        %v958 = vcombine.high %v892, %v908
        %v960 = vunpack.c.l.s4 1934713408
        %v961 = vunpack.c.0.s8 %v960
        %v962 = vlaneseq
        %v963 = vshrl.u32 %v962, 7
        %v964 = vsub.s32 %v961, %v963
        %v965 = vrot.slane %v957, %v964
        %v967 = vunpack.c.l.s4 1934713408
        %v968 = vunpack.c.0.s8 %v967
        %v969 = vlaneseq
        %v970 = vshrl.u32 %v969, 7
        %v971 = vsub.s32 %v968, %v970
        %v972 = vrot.slane %v958, %v971
        %v973 = vcombine.low %v917, %v949
        %v974 = vcombine.high %v917, %v949
        %v975 = vcombine.low %v924, %v956
        %v976 = vcombine.high %v924, %v956
        %v977 = vcombine.low %v933, %v965
        %v978 = vcombine.high %v933, %v965
        %v979 = vcombine.low %v940, %v972
        %v980 = vcombine.high %v940, %v972
        %981 = vxpose.xlu0.b32.start [1/16] %v565, 128
        %982 = vxpose.xlu0.b32.cont [2/16] %v701, 128
        %983 = vxpose.xlu0.b32.cont [3/16] %v837, 128
        %984 = vxpose.xlu0.b32.cont [4/16] %v973, 128
        %985 = vxpose.xlu0.b32.cont [5/16] 0.0, 128
        %986 = vxpose.xlu0.b32.cont [6/16] 0.0, 128
        %987 = vxpose.xlu0.b32.cont [7/16] 0.0, 128
        %988 = vxpose.xlu0.b32.cont [8/16] 0.0, 128
        %989 = vxpose.xlu0.b32.cont [9/16] 0.0, 128
        %990 = vxpose.xlu0.b32.cont [10/16] 0.0, 128
        %991 = vxpose.xlu0.b32.cont [11/16] 0.0, 128
        %992 = vxpose.xlu0.b32.cont [12/16] 0.0, 128
        %993 = vxpose.xlu0.b32.cont [13/16] 0.0, 128
        %994 = vxpose.xlu0.b32.cont [14/16] 0.0, 128
        %995 = vxpose.xlu0.b32.cont [15/16] 0.0, 128
        %996 = vxpose.xlu0.b32.end [16/16] 0.0, 128
        %v997 = vpop.trf.xlu0
        %v998 = vpop.trf.xlu0
        %v999 = vpop.trf.xlu0
        %v1000 = vpop.trf.xlu0
        %v1001 = vpop.trf.xlu0
        %v1002 = vpop.trf.xlu0
        %v1003 = vpop.trf.xlu0
        %v1004 = vpop.trf.xlu0
        %v1005 = vpop.trf.xlu0
        %v1006 = vpop.trf.xlu0
        %v1007 = vpop.trf.xlu0
        %v1008 = vpop.trf.xlu0
        %v1009 = vpop.trf.xlu0
        %v1010 = vpop.trf.xlu0
        %v1011 = vpop.trf.xlu0
        %v1012 = vpop.trf.xlu0
        %1013 = vxpose.xlu0.b32.start [1/16] %v566, 128
        %1014 = vxpose.xlu0.b32.cont [2/16] %v702, 128
        %1015 = vxpose.xlu0.b32.cont [3/16] %v838, 128
        %1016 = vxpose.xlu0.b32.cont [4/16] %v974, 128
        %1017 = vxpose.xlu0.b32.cont [5/16] 0.0, 128
        %1018 = vxpose.xlu0.b32.cont [6/16] 0.0, 128
        %1019 = vxpose.xlu0.b32.cont [7/16] 0.0, 128
        %1020 = vxpose.xlu0.b32.cont [8/16] 0.0, 128
        %1021 = vxpose.xlu0.b32.cont [9/16] 0.0, 128
        %1022 = vxpose.xlu0.b32.cont [10/16] 0.0, 128
        %1023 = vxpose.xlu0.b32.cont [11/16] 0.0, 128
        %1024 = vxpose.xlu0.b32.cont [12/16] 0.0, 128
        %1025 = vxpose.xlu0.b32.cont [13/16] 0.0, 128
        %1026 = vxpose.xlu0.b32.cont [14/16] 0.0, 128
        %1027 = vxpose.xlu0.b32.cont [15/16] 0.0, 128
        %1028 = vxpose.xlu0.b32.end [16/16] 0.0, 128
        %v1029 = vpop.trf.xlu0
        %v1030 = vpop.trf.xlu0
        %v1031 = vpop.trf.xlu0
        %v1032 = vpop.trf.xlu0
        %v1033 = vpop.trf.xlu0
        %v1034 = vpop.trf.xlu0
        %v1035 = vpop.trf.xlu0
        %v1036 = vpop.trf.xlu0
        %v1037 = vpop.trf.xlu0
        %v1038 = vpop.trf.xlu0
        %v1039 = vpop.trf.xlu0
        %v1040 = vpop.trf.xlu0
        %v1041 = vpop.trf.xlu0
        %v1042 = vpop.trf.xlu0
        %v1043 = vpop.trf.xlu0
        %v1044 = vpop.trf.xlu0
        %1045 = vxpose.xlu0.b32.start [1/16] %v567, 128
        %1046 = vxpose.xlu0.b32.cont [2/16] %v703, 128
        %1047 = vxpose.xlu0.b32.cont [3/16] %v839, 128
        %1048 = vxpose.xlu0.b32.cont [4/16] %v975, 128
        %1049 = vxpose.xlu0.b32.cont [5/16] 0.0, 128
        %1050 = vxpose.xlu0.b32.cont [6/16] 0.0, 128
        %1051 = vxpose.xlu0.b32.cont [7/16] 0.0, 128
        %1052 = vxpose.xlu0.b32.cont [8/16] 0.0, 128
        %1053 = vxpose.xlu0.b32.cont [9/16] 0.0, 128
        %1054 = vxpose.xlu0.b32.cont [10/16] 0.0, 128
        %1055 = vxpose.xlu0.b32.cont [11/16] 0.0, 128
        %1056 = vxpose.xlu0.b32.cont [12/16] 0.0, 128
        %1057 = vxpose.xlu0.b32.cont [13/16] 0.0, 128
        %1058 = vxpose.xlu0.b32.cont [14/16] 0.0, 128
        %1059 = vxpose.xlu0.b32.cont [15/16] 0.0, 128
        %1060 = vxpose.xlu0.b32.end [16/16] 0.0, 128
        %v1061 = vpop.trf.xlu0
        %v1062 = vpop.trf.xlu0
        %v1063 = vpop.trf.xlu0
        %v1064 = vpop.trf.xlu0
        %v1065 = vpop.trf.xlu0
        %v1066 = vpop.trf.xlu0
        %v1067 = vpop.trf.xlu0
        %v1068 = vpop.trf.xlu0
        %v1069 = vpop.trf.xlu0
        %v1070 = vpop.trf.xlu0
        %v1071 = vpop.trf.xlu0
        %v1072 = vpop.trf.xlu0
        %v1073 = vpop.trf.xlu0
        %v1074 = vpop.trf.xlu0
        %v1075 = vpop.trf.xlu0
        %v1076 = vpop.trf.xlu0
        %1077 = vxpose.xlu0.b32.start [1/16] %v568, 128
        %1078 = vxpose.xlu0.b32.cont [2/16] %v704, 128
        %1079 = vxpose.xlu0.b32.cont [3/16] %v840, 128
        %1080 = vxpose.xlu0.b32.cont [4/16] %v976, 128
        %1081 = vxpose.xlu0.b32.cont [5/16] 0.0, 128
        %1082 = vxpose.xlu0.b32.cont [6/16] 0.0, 128
        %1083 = vxpose.xlu0.b32.cont [7/16] 0.0, 128
        %1084 = vxpose.xlu0.b32.cont [8/16] 0.0, 128
        %1085 = vxpose.xlu0.b32.cont [9/16] 0.0, 128
        %1086 = vxpose.xlu0.b32.cont [10/16] 0.0, 128
        %1087 = vxpose.xlu0.b32.cont [11/16] 0.0, 128
        %1088 = vxpose.xlu0.b32.cont [12/16] 0.0, 128
        %1089 = vxpose.xlu0.b32.cont [13/16] 0.0, 128
        %1090 = vxpose.xlu0.b32.cont [14/16] 0.0, 128
        %1091 = vxpose.xlu0.b32.cont [15/16] 0.0, 128
        %1092 = vxpose.xlu0.b32.end [16/16] 0.0, 128
        %v1093 = vpop.trf.xlu0
        %v1094 = vpop.trf.xlu0
        %v1095 = vpop.trf.xlu0
        %v1096 = vpop.trf.xlu0
        %v1097 = vpop.trf.xlu0
        %v1098 = vpop.trf.xlu0
        %v1099 = vpop.trf.xlu0
        %v1100 = vpop.trf.xlu0
        %v1101 = vpop.trf.xlu0
        %v1102 = vpop.trf.xlu0
        %v1103 = vpop.trf.xlu0
        %v1104 = vpop.trf.xlu0
        %v1105 = vpop.trf.xlu0
        %v1106 = vpop.trf.xlu0
        %v1107 = vpop.trf.xlu0
        %v1108 = vpop.trf.xlu0
        %1109 = vxpose.xlu0.b32.start [1/16] %v569, 128
        %1110 = vxpose.xlu0.b32.cont [2/16] %v705, 128
        %1111 = vxpose.xlu0.b32.cont [3/16] %v841, 128
        %1112 = vxpose.xlu0.b32.cont [4/16] %v977, 128
        %1113 = vxpose.xlu0.b32.cont [5/16] 0.0, 128
        %1114 = vxpose.xlu0.b32.cont [6/16] 0.0, 128
        %1115 = vxpose.xlu0.b32.cont [7/16] 0.0, 128
        %1116 = vxpose.xlu0.b32.cont [8/16] 0.0, 128
        %1117 = vxpose.xlu0.b32.cont [9/16] 0.0, 128
        %1118 = vxpose.xlu0.b32.cont [10/16] 0.0, 128
        %1119 = vxpose.xlu0.b32.cont [11/16] 0.0, 128
        %1120 = vxpose.xlu0.b32.cont [12/16] 0.0, 128
        %1121 = vxpose.xlu0.b32.cont [13/16] 0.0, 128
        %1122 = vxpose.xlu0.b32.cont [14/16] 0.0, 128
        %1123 = vxpose.xlu0.b32.cont [15/16] 0.0, 128
        %1124 = vxpose.xlu0.b32.end [16/16] 0.0, 128
        %v1125 = vpop.trf.xlu0
        %v1126 = vpop.trf.xlu0
        %v1127 = vpop.trf.xlu0
        %v1128 = vpop.trf.xlu0
        %v1129 = vpop.trf.xlu0
        %v1130 = vpop.trf.xlu0
        %v1131 = vpop.trf.xlu0
        %v1132 = vpop.trf.xlu0
        %v1133 = vpop.trf.xlu0
        %v1134 = vpop.trf.xlu0
        %v1135 = vpop.trf.xlu0
        %v1136 = vpop.trf.xlu0
        %v1137 = vpop.trf.xlu0
        %v1138 = vpop.trf.xlu0
        %v1139 = vpop.trf.xlu0
        %v1140 = vpop.trf.xlu0
        %1141 = vxpose.xlu0.b32.start [1/16] %v570, 128
        %1142 = vxpose.xlu0.b32.cont [2/16] %v706, 128
        %1143 = vxpose.xlu0.b32.cont [3/16] %v842, 128
        %1144 = vxpose.xlu0.b32.cont [4/16] %v978, 128
        %1145 = vxpose.xlu0.b32.cont [5/16] 0.0, 128
        %1146 = vxpose.xlu0.b32.cont [6/16] 0.0, 128
        %1147 = vxpose.xlu0.b32.cont [7/16] 0.0, 128
        %1148 = vxpose.xlu0.b32.cont [8/16] 0.0, 128
        %1149 = vxpose.xlu0.b32.cont [9/16] 0.0, 128
        %1150 = vxpose.xlu0.b32.cont [10/16] 0.0, 128
        %1151 = vxpose.xlu0.b32.cont [11/16] 0.0, 128
        %1152 = vxpose.xlu0.b32.cont [12/16] 0.0, 128
        %1153 = vxpose.xlu0.b32.cont [13/16] 0.0, 128
        %1154 = vxpose.xlu0.b32.cont [14/16] 0.0, 128
        %1155 = vxpose.xlu0.b32.cont [15/16] 0.0, 128
        %1156 = vxpose.xlu0.b32.end [16/16] 0.0, 128
        %v1157 = vpop.trf.xlu0
        %v1158 = vpop.trf.xlu0
        %v1159 = vpop.trf.xlu0
        %v1160 = vpop.trf.xlu0
        %v1161 = vpop.trf.xlu0
        %v1162 = vpop.trf.xlu0
        %v1163 = vpop.trf.xlu0
        %v1164 = vpop.trf.xlu0
        %v1165 = vpop.trf.xlu0
        %v1166 = vpop.trf.xlu0
        %v1167 = vpop.trf.xlu0
        %v1168 = vpop.trf.xlu0
        %v1169 = vpop.trf.xlu0
        %v1170 = vpop.trf.xlu0
        %v1171 = vpop.trf.xlu0
        %v1172 = vpop.trf.xlu0
        %1173 = vxpose.xlu0.b32.start [1/16] %v571, 128
        %1174 = vxpose.xlu0.b32.cont [2/16] %v707, 128
        %1175 = vxpose.xlu0.b32.cont [3/16] %v843, 128
        %1176 = vxpose.xlu0.b32.cont [4/16] %v979, 128
        %1177 = vxpose.xlu0.b32.cont [5/16] 0.0, 128
        %1178 = vxpose.xlu0.b32.cont [6/16] 0.0, 128
        %1179 = vxpose.xlu0.b32.cont [7/16] 0.0, 128
        %1180 = vxpose.xlu0.b32.cont [8/16] 0.0, 128
        %1181 = vxpose.xlu0.b32.cont [9/16] 0.0, 128
        %1182 = vxpose.xlu0.b32.cont [10/16] 0.0, 128
        %1183 = vxpose.xlu0.b32.cont [11/16] 0.0, 128
        %1184 = vxpose.xlu0.b32.cont [12/16] 0.0, 128
        %1185 = vxpose.xlu0.b32.cont [13/16] 0.0, 128
        %1186 = vxpose.xlu0.b32.cont [14/16] 0.0, 128
        %1187 = vxpose.xlu0.b32.cont [15/16] 0.0, 128
        %1188 = vxpose.xlu0.b32.end [16/16] 0.0, 128
        %v1189 = vpop.trf.xlu0
        %v1190 = vpop.trf.xlu0
        %v1191 = vpop.trf.xlu0
        %v1192 = vpop.trf.xlu0
        %v1193 = vpop.trf.xlu0
        %v1194 = vpop.trf.xlu0
        %v1195 = vpop.trf.xlu0
        %v1196 = vpop.trf.xlu0
        %v1197 = vpop.trf.xlu0
        %v1198 = vpop.trf.xlu0
        %v1199 = vpop.trf.xlu0
        %v1200 = vpop.trf.xlu0
        %v1201 = vpop.trf.xlu0
        %v1202 = vpop.trf.xlu0
        %v1203 = vpop.trf.xlu0
        %v1204 = vpop.trf.xlu0
        %1205 = vxpose.xlu0.b32.start [1/16] %v572, 128
        %1206 = vxpose.xlu0.b32.cont [2/16] %v708, 128
        %1207 = vxpose.xlu0.b32.cont [3/16] %v844, 128
        %1208 = vxpose.xlu0.b32.cont [4/16] %v980, 128
        %1209 = vxpose.xlu0.b32.cont [5/16] 0.0, 128
        %1210 = vxpose.xlu0.b32.cont [6/16] 0.0, 128
        %1211 = vxpose.xlu0.b32.cont [7/16] 0.0, 128
        %1212 = vxpose.xlu0.b32.cont [8/16] 0.0, 128
        %1213 = vxpose.xlu0.b32.cont [9/16] 0.0, 128
        %1214 = vxpose.xlu0.b32.cont [10/16] 0.0, 128
        %1215 = vxpose.xlu0.b32.cont [11/16] 0.0, 128
        %1216 = vxpose.xlu0.b32.cont [12/16] 0.0, 128
        %1217 = vxpose.xlu0.b32.cont [13/16] 0.0, 128
        %1218 = vxpose.xlu0.b32.cont [14/16] 0.0, 128
        %1219 = vxpose.xlu0.b32.cont [15/16] 0.0, 128
        %1220 = vxpose.xlu0.b32.end [16/16] 0.0, 128
        %v1221 = vpop.trf.xlu0
        %v1222 = vpop.trf.xlu0
        %v1223 = vpop.trf.xlu0
        %v1224 = vpop.trf.xlu0
        %v1225 = vpop.trf.xlu0
        %v1226 = vpop.trf.xlu0
        %v1227 = vpop.trf.xlu0
        %v1228 = vpop.trf.xlu0
        %v1229 = vpop.trf.xlu0
        %v1230 = vpop.trf.xlu0
        %v1231 = vpop.trf.xlu0
        %v1232 = vpop.trf.xlu0
        %v1233 = vpop.trf.xlu0
        %v1234 = vpop.trf.xlu0
        %v1235 = vpop.trf.xlu0
        %v1236 = vpop.trf.xlu0
        %vm1237 = vcmask 261120
        %v1239 = vsel %vm1237, %v997, 0
        %v1242 = vsel %vm1237, %v998, 0
        %v1245 = vsel %vm1237, %v1029, 0
        %v1248 = vsel %vm1237, %v1030, 0
        %v1251 = vsel %vm1237, %v1061, 0
        %v1254 = vsel %vm1237, %v1062, 0
        %v1257 = vsel %vm1237, %v1093, 0
        %v1260 = vsel %vm1237, %v1094, 0
        %v1263 = vsel %vm1237, %v1125, 0
        %v1266 = vsel %vm1237, %v1126, 0
        %v1269 = vsel %vm1237, %v1157, 0
        %v1272 = vsel %vm1237, %v1158, 0
        %v1275 = vsel %vm1237, %v1189, 0
        %v1278 = vsel %vm1237, %v1190, 0
        %v1281 = vsel %vm1237, %v1221, 0
        %v1284 = vsel %vm1237, %v1222, 0
        %1286 = vmatprep.subr.mxu0 0.0
        %1287 = vmatpush1.msra.mxu0 0.0
        %1288 = vmatprep.subr.mxu0 0.0
        %1289 = vmatpush1.msra.mxu0 0.0
        %1290 = vmatprep.subr.mxu0 0.0
        %1291 = vmatpush1.msra.mxu0 0.0
        %1292 = vmatprep.subr.mxu0 0.0
        %1293 = vmatpush1.msra.mxu0 0.0
        %1294 = vmatprep.subr.mxu0 0.0
        %1295 = vmatpush1.msra.mxu0 0.0
        %1296 = vmatprep.subr.mxu0 0.0
        %1297 = vmatpush1.msra.mxu0 0.0
        %1298 = vmatprep.subr.mxu0 0.0
        %1299 = vmatpush1.msra.mxu0 0.0
        %1300 = vmatprep.subr.mxu0 0.0
        %1301 = vmatpush1.msra.mxu0 0.0
        %1302 = vmatprep.subr.mxu0 0.0
        %1303 = vmatpush1.msra.mxu0 0.0
        %1304 = vmatprep.subr.mxu0 0.0
        %1305 = vmatpush1.msra.mxu0 0.0
        %1306 = vmatprep.subr.mxu0 0.0
        %1307 = vmatpush1.msra.mxu0 0.0
        %1308 = vmatprep.subr.mxu0 0.0
        %1309 = vmatpush1.msra.mxu0 0.0
        %1310 = vmatprep.subr.mxu0 0.0
        %1311 = vmatpush1.msra.mxu0 %v337
        %1312 = vmatprep.subr.mxu0 0.0
        %1313 = vmatpush1.msra.mxu0 %v336
        %1314 = vmatprep.subr.mxu0 0.0
        %1315 = vmatpush1.msra.mxu0 %v335
        %1316 = vmatprep.subr.mxu0 0.0
        %1317 = vmatpush1.msra.mxu0 %v334
        %1318 = vmatprep.subr.mxu0 0.0
        %1319 = vmatpush2.msra.mxu0 0.0
        %1320 = vmatprep.subr.mxu0 0.0
        %1321 = vmatpush2.msra.mxu0 0.0
        %1322 = vmatprep.subr.mxu0 0.0
        %1323 = vmatpush2.msra.mxu0 0.0
        %1324 = vmatprep.subr.mxu0 0.0
        %1325 = vmatpush2.msra.mxu0 0.0
        %1326 = vmatprep.subr.mxu0 0.0
        %1327 = vmatpush2.msra.mxu0 0.0
        %1328 = vmatprep.subr.mxu0 0.0
        %1329 = vmatpush2.msra.mxu0 0.0
        %1330 = vmatprep.subr.mxu0 0.0
        %1331 = vmatpush2.msra.mxu0 0.0
        %1332 = vmatprep.subr.mxu0 0.0
        %1333 = vmatpush2.msra.mxu0 0.0
        %1334 = vmatprep.subr.mxu0 0.0
        %1335 = vmatpush2.msra.mxu0 0.0
        %1336 = vmatprep.subr.mxu0 0.0
        %1337 = vmatpush2.msra.mxu0 0.0
        %1338 = vmatprep.subr.mxu0 0.0
        %1339 = vmatpush2.msra.mxu0 0.0
        %1340 = vmatprep.subr.mxu0 0.0
        %1341 = vmatpush2.msra.mxu0 0.0
        %1342 = vmatprep.subr.mxu0 0.0
        %1343 = vmatpush2.msra.mxu0 0.0
        %1344 = vmatprep.subr.mxu0 0.0
        %1345 = vmatpush2.msra.mxu0 0.0
        %1346 = vmatprep.subr.mxu0 0.0
        %1347 = vmatpush2.msra.mxu0 0.0
        %1348 = vmatprep.subr.mxu0 0.0
        %1349 = vmatpush2.msra.mxu0 0.0
        %1350 = vmatprep.mubr.f32.mxu0 0.0
        %1351 = vmatmul.mubr.f32.gmra.mxu0 %v1239
        %v1352 = vpop.f32.mrf.mxu0
        %v1353 = vadd.f32 0.0, %v1352
        %v1354 = vpop.f32.mrf.mxu0
        %1355 = vmatprep.mubr.f32.mxu0 0.0
        %1356 = vmatmul.mubr.f32.gmra.mxu0 %v1242
        %v1357 = vpop.f32.mrf.mxu0
        %v1358 = vadd.f32 0.0, %v1357
        %v1359 = vpop.f32.mrf.mxu0
        %1360 = vmatprep.mubr.f32.mxu0 0.0
        %1361 = vmatmul.mubr.f32.gmra.mxu0 %v1245
        %v1362 = vpop.f32.mrf.mxu0
        %v1363 = vadd.f32 0.0, %v1362
        %v1364 = vpop.f32.mrf.mxu0
        %1365 = vmatprep.mubr.f32.mxu0 0.0
        %1366 = vmatmul.mubr.f32.gmra.mxu0 %v1248
        %v1367 = vpop.f32.mrf.mxu0
        %v1368 = vadd.f32 0.0, %v1367
        %v1369 = vpop.f32.mrf.mxu0
        %1370 = vmatprep.mubr.f32.mxu0 0.0
        %1371 = vmatmul.mubr.f32.gmra.mxu0 %v1251
        %v1372 = vpop.f32.mrf.mxu0
        %v1373 = vadd.f32 0.0, %v1372
        %v1374 = vpop.f32.mrf.mxu0
        %1375 = vmatprep.mubr.f32.mxu0 0.0
        %1376 = vmatmul.mubr.f32.gmra.mxu0 %v1254
        %v1377 = vpop.f32.mrf.mxu0
        %v1378 = vadd.f32 0.0, %v1377
        %v1379 = vpop.f32.mrf.mxu0
        %1380 = vmatprep.mubr.f32.mxu0 0.0
        %1381 = vmatmul.mubr.f32.gmra.mxu0 %v1257
        %v1382 = vpop.f32.mrf.mxu0
        %v1383 = vadd.f32 0.0, %v1382
        %v1384 = vpop.f32.mrf.mxu0
        %1385 = vmatprep.mubr.f32.mxu0 0.0
        %1386 = vmatmul.mubr.f32.gmra.mxu0 %v1260
        %v1387 = vpop.f32.mrf.mxu0
        %v1388 = vadd.f32 0.0, %v1387
        %v1389 = vpop.f32.mrf.mxu0
        %1390 = vmatprep.mubr.f32.mxu0 0.0
        %1391 = vmatmul.mubr.f32.gmra.mxu0 %v1263
        %v1392 = vpop.f32.mrf.mxu0
        %v1393 = vadd.f32 0.0, %v1392
        %v1394 = vpop.f32.mrf.mxu0
        %1395 = vmatprep.mubr.f32.mxu0 0.0
        %1396 = vmatmul.mubr.f32.gmra.mxu0 %v1266
        %v1397 = vpop.f32.mrf.mxu0
        %v1398 = vadd.f32 0.0, %v1397
        %v1399 = vpop.f32.mrf.mxu0
        %1400 = vmatprep.mubr.f32.mxu0 0.0
        %1401 = vmatmul.mubr.f32.gmra.mxu0 %v1269
        %v1402 = vpop.f32.mrf.mxu0
        %v1403 = vadd.f32 0.0, %v1402
        %v1404 = vpop.f32.mrf.mxu0
        %1405 = vmatprep.mubr.f32.mxu0 0.0
        %1406 = vmatmul.mubr.f32.gmra.mxu0 %v1272
        %v1407 = vpop.f32.mrf.mxu0
        %v1408 = vadd.f32 0.0, %v1407
        %v1409 = vpop.f32.mrf.mxu0
        %1410 = vmatprep.mubr.f32.mxu0 0.0
        %1411 = vmatmul.mubr.f32.gmra.mxu0 %v1275
        %v1412 = vpop.f32.mrf.mxu0
        %v1413 = vadd.f32 0.0, %v1412
        %v1414 = vpop.f32.mrf.mxu0
        %1415 = vmatprep.mubr.f32.mxu0 0.0
        %1416 = vmatmul.mubr.f32.gmra.mxu0 %v1278
        %v1417 = vpop.f32.mrf.mxu0
        %v1418 = vadd.f32 0.0, %v1417
        %v1419 = vpop.f32.mrf.mxu0
        %1420 = vmatprep.mubr.f32.mxu0 0.0
        %1421 = vmatmul.mubr.f32.gmra.mxu0 %v1281
        %v1422 = vpop.f32.mrf.mxu0
        %v1423 = vadd.f32 0.0, %v1422
        %v1424 = vpop.f32.mrf.mxu0
        %1425 = vmatprep.mubr.f32.mxu0 0.0
        %1426 = vmatmul.mubr.f32.gmra.mxu0 %v1284
        %v1427 = vpop.f32.mrf.mxu0
        %v1428 = vadd.f32 0.0, %v1427
        %v1429 = vpop.f32.mrf.mxu0
        %1430 = vdwg.mxu0
        %v1432 = vlaneseq
        %v1433 = vshrl.u32 %v1432, 7
        %v1434 = vsub.s32 0, %v1433
        %v1435 = vrot.slane %v342, %v1434
        %v1438 = vsel %vm1237, %v348, 0
        %1440 = vmatprep.subr.mxu0 0.0
        %1441 = vmatpush1.msra.mxu0 0.0
        %1442 = vmatprep.subr.mxu0 0.0
        %1443 = vmatpush1.msra.mxu0 0.0
        %1444 = vmatprep.subr.mxu0 0.0
        %1445 = vmatpush1.msra.mxu0 0.0
        %1446 = vmatprep.subr.mxu0 0.0
        %1447 = vmatpush1.msra.mxu0 0.0
        %1448 = vmatprep.subr.mxu0 0.0
        %1449 = vmatpush1.msra.mxu0 0.0
        %1450 = vmatprep.subr.mxu0 0.0
        %1451 = vmatpush1.msra.mxu0 0.0
        %1452 = vmatprep.subr.mxu0 0.0
        %1453 = vmatpush1.msra.mxu0 0.0
        %1454 = vmatprep.subr.mxu0 0.0
        %1455 = vmatpush1.msra.mxu0 0.0
        %1456 = vmatprep.subr.mxu0 0.0
        %1457 = vmatpush1.msra.mxu0 0.0
        %1458 = vmatprep.subr.mxu0 0.0
        %1459 = vmatpush1.msra.mxu0 0.0
        %1460 = vmatprep.subr.mxu0 0.0
        %1461 = vmatpush1.msra.mxu0 0.0
        %1462 = vmatprep.subr.mxu0 0.0
        %1463 = vmatpush1.msra.mxu0 0.0
        %1464 = vmatprep.subr.mxu0 0.0
        %1465 = vmatpush1.msra.mxu0 %v341
        %1466 = vmatprep.subr.mxu0 0.0
        %1467 = vmatpush1.msra.mxu0 %v340
        %1468 = vmatprep.subr.mxu0 0.0
        %1469 = vmatpush1.msra.mxu0 %v339
        %1470 = vmatprep.subr.mxu0 0.0
        %1471 = vmatpush1.msra.mxu0 %v338
        %1472 = vmatprep.subr.mxu0 0.0
        %1473 = vmatpush2.msra.mxu0 0.0
        %1474 = vmatprep.subr.mxu0 0.0
        %1475 = vmatpush2.msra.mxu0 0.0
        %1476 = vmatprep.subr.mxu0 0.0
        %1477 = vmatpush2.msra.mxu0 0.0
        %1478 = vmatprep.subr.mxu0 0.0
        %1479 = vmatpush2.msra.mxu0 0.0
        %1480 = vmatprep.subr.mxu0 0.0
        %1481 = vmatpush2.msra.mxu0 0.0
        %1482 = vmatprep.subr.mxu0 0.0
        %1483 = vmatpush2.msra.mxu0 0.0
        %1484 = vmatprep.subr.mxu0 0.0
        %1485 = vmatpush2.msra.mxu0 0.0
        %1486 = vmatprep.subr.mxu0 0.0
        %1487 = vmatpush2.msra.mxu0 0.0
        %1488 = vmatprep.subr.mxu0 0.0
        %1489 = vmatpush2.msra.mxu0 0.0
        %1490 = vmatprep.subr.mxu0 0.0
        %1491 = vmatpush2.msra.mxu0 0.0
        %1492 = vmatprep.subr.mxu0 0.0
        %1493 = vmatpush2.msra.mxu0 0.0
        %1494 = vmatprep.subr.mxu0 0.0
        %1495 = vmatpush2.msra.mxu0 0.0
        %1496 = vmatprep.subr.mxu0 0.0
        %1497 = vmatpush2.msra.mxu0 0.0
        %1498 = vmatprep.subr.mxu0 0.0
        %1499 = vmatpush2.msra.mxu0 0.0
        %1500 = vmatprep.subr.mxu0 0.0
        %1501 = vmatpush2.msra.mxu0 0.0
        %1502 = vmatprep.subr.mxu0 0.0
        %1503 = vmatpush2.msra.mxu0 0.0
        %1504 = vmatprep.mubr.f32.mxu0 0.0
        %1505 = vmatmul.mubr.f32.gmra.mxu0 %v1438
        %v1506 = vpop.f32.mrf.mxu0
        %v1507 = vadd.f32 %v1435, %v1506
        %v1508 = vpop.f32.mrf.mxu0
        %1509 = vdwg.mxu0
        %v1511 = vcombine.high %v1507, %v1507
        %v1513 = vunpack.c.l.s4 1966171168
        %v1514 = vunpack.c.0.s8 %v1513
        %v1515 = vlaneseq
        %v1516 = vshrl.u32 %v1515, 7
        %v1517 = vsub.s32 %v1514, %v1516
        %v1518 = vrot.slane %v1507, %v1517
        %v1520 = vunpack.c.l.s4 1966171168
        %v1521 = vunpack.c.0.s8 %v1520
        %v1522 = vlaneseq
        %v1523 = vshrl.u32 %v1522, 7
        %v1524 = vsub.s32 %v1521, %v1523
        %v1525 = vrot.slane %v1511, %v1524
        %v1526 = vcombine.high %v1518, %v1518
        %v1527 = vcombine.high %v1525, %v1525
        %v1529 = vunpack.c.l.s4 1966171168
        %v1530 = vunpack.c.0.s8 %v1529
        %v1531 = vlaneseq
        %v1532 = vshrl.u32 %v1531, 7
        %v1533 = vsub.s32 %v1530, %v1532
        %v1534 = vrot.slane %v1518, %v1533
        %v1536 = vunpack.c.l.s4 1966171168
        %v1537 = vunpack.c.0.s8 %v1536
        %v1538 = vlaneseq
        %v1539 = vshrl.u32 %v1538, 7
        %v1540 = vsub.s32 %v1537, %v1539
        %v1541 = vrot.slane %v1525, %v1540
        %v1543 = vunpack.c.l.s4 1966171168
        %v1544 = vunpack.c.0.s8 %v1543
        %v1545 = vlaneseq
        %v1546 = vshrl.u32 %v1545, 7
        %v1547 = vsub.s32 %v1544, %v1546
        %v1548 = vrot.slane %v1526, %v1547
        %v1550 = vunpack.c.l.s4 1966171168
        %v1551 = vunpack.c.0.s8 %v1550
        %v1552 = vlaneseq
        %v1553 = vshrl.u32 %v1552, 7
        %v1554 = vsub.s32 %v1551, %v1553
        %v1555 = vrot.slane %v1527, %v1554
        %v1556 = vcombine.high %v1534, %v1534
        %v1557 = vcombine.high %v1541, %v1541
        %v1558 = vcombine.high %v1548, %v1548
        %v1559 = vcombine.high %v1555, %v1555
        %v1560 = vlaneseq
        %v1561 = vshrl.u32 %v1560, 7
        %v1562 = vsub.s32 0, %v1561
        %v1563 = vrot.slane %v1534, %v1562
        %v1564 = vlaneseq
        %v1565 = vshrl.u32 %v1564, 7
        %v1566 = vsub.s32 0, %v1565
        %v1567 = vrot.slane %v1548, %v1566
        %v1568 = vlaneseq
        %v1569 = vshrl.u32 %v1568, 7
        %v1570 = vsub.s32 0, %v1569
        %v1571 = vrot.slane %v1556, %v1570
        %v1572 = vlaneseq
        %v1573 = vshrl.u32 %v1572, 7
        %v1574 = vsub.s32 0, %v1573
        %v1575 = vrot.slane %v1558, %v1574
        %v1576 = vlaneseq
        %v1577 = vshrl.u32 %v1576, 7
        %v1578 = vsub.s32 0, %v1577
        %v1579 = vrot.slane %v1541, %v1578
        %v1580 = vlaneseq
        %v1581 = vshrl.u32 %v1580, 7
        %v1582 = vsub.s32 0, %v1581
        %v1583 = vrot.slane %v1555, %v1582
        %v1584 = vlaneseq
        %v1585 = vshrl.u32 %v1584, 7
        %v1586 = vsub.s32 0, %v1585
        %v1587 = vrot.slane %v1557, %v1586
        %v1588 = vlaneseq
        %v1589 = vshrl.u32 %v1588, 7
        %v1590 = vsub.s32 0, %v1589
        %v1591 = vrot.slane %v1559, %v1590
        %v1600 = vadd.f32 %v1353, %v1563
        %v1601 = vadd.f32 %v1358, %v1563
        %v1602 = vadd.f32 %v1363, %v1567
        %v1603 = vadd.f32 %v1368, %v1567
        %v1604 = vadd.f32 %v1373, %v1571
        %v1605 = vadd.f32 %v1378, %v1571
        %v1606 = vadd.f32 %v1383, %v1575
        %v1607 = vadd.f32 %v1388, %v1575
        %v1608 = vadd.f32 %v1393, %v1579
        %v1609 = vadd.f32 %v1398, %v1579
        %v1610 = vadd.f32 %v1403, %v1583
        %v1611 = vadd.f32 %v1408, %v1583
        %v1612 = vadd.f32 %v1413, %v1587
        %v1613 = vadd.f32 %v1418, %v1587
        %v1614 = vadd.f32 %v1423, %v1591
        %v1615 = vadd.f32 %v1428, %v1591
        %v1616 = vmax.f32 %v1600, 0.0
        %v1617 = vmax.f32 %v1601, 0.0
        %v1618 = vmax.f32 %v1602, 0.0
        %v1619 = vmax.f32 %v1603, 0.0
        %v1620 = vmax.f32 %v1604, 0.0
        %v1621 = vmax.f32 %v1605, 0.0
        %v1622 = vmax.f32 %v1606, 0.0
        %v1623 = vmax.f32 %v1607, 0.0
        %v1624 = vmax.f32 %v1608, 0.0
        %v1625 = vmax.f32 %v1609, 0.0
        %v1626 = vmax.f32 %v1610, 0.0
        %v1627 = vmax.f32 %v1611, 0.0
        %v1628 = vmax.f32 %v1612, 0.0
        %v1629 = vmax.f32 %v1613, 0.0
        %v1630 = vmax.f32 %v1614, 0.0
        %v1631 = vmax.f32 %v1615, 0.0
        %v1633 = vlaneseq
        %v1634 = vshrl.u32 %v1633, 7
        %v1635 = vsub.s32 0, %v1634
        %v1636 = vrot.slane %v343, %v1635
        %v1638 = vmul.f32 %v1616, %v1636
        %v1639 = vmul.f32 %v1617, %v1636
        %v1640 = vmul.f32 %v1618, %v1636
        %v1641 = vmul.f32 %v1619, %v1636
        %v1642 = vmul.f32 %v1620, %v1636
        %v1643 = vmul.f32 %v1621, %v1636
        %v1644 = vmul.f32 %v1622, %v1636
        %v1645 = vmul.f32 %v1623, %v1636
        %v1646 = vmul.f32 %v1624, %v1636
        %v1647 = vmul.f32 %v1625, %v1636
        %v1648 = vmul.f32 %v1626, %v1636
        %v1649 = vmul.f32 %v1627, %v1636
        %v1650 = vmul.f32 %v1628, %v1636
        %v1651 = vmul.f32 %v1629, %v1636
        %v1652 = vmul.f32 %v1630, %v1636
        %v1653 = vmul.f32 %v1631, %v1636
        %v1654 = vsel %vm1237, %v1638, 0.0
        %1655 = vadd.xlane.f32.xlu0 %v1654
        %v1656 = vpop.xlane.xlu0 %1655
        %v1657 = vsel %vm1237, %v1639, 0.0
        %1658 = vadd.xlane.f32.xlu0 %v1657
        %v1659 = vpop.xlane.xlu0 %1658
        %v1660 = vsel %vm1237, %v1640, 0.0
        %1661 = vadd.xlane.f32.xlu0 %v1660
        %v1662 = vpop.xlane.xlu0 %1661
        %v1663 = vsel %vm1237, %v1641, 0.0
        %1664 = vadd.xlane.f32.xlu0 %v1663
        %v1665 = vpop.xlane.xlu0 %1664
        %v1666 = vsel %vm1237, %v1642, 0.0
        %1667 = vadd.xlane.f32.xlu0 %v1666
        %v1668 = vpop.xlane.xlu0 %1667
        %v1669 = vsel %vm1237, %v1643, 0.0
        %1670 = vadd.xlane.f32.xlu0 %v1669
        %v1671 = vpop.xlane.xlu0 %1670
        %v1672 = vsel %vm1237, %v1644, 0.0
        %1673 = vadd.xlane.f32.xlu0 %v1672
        %v1674 = vpop.xlane.xlu0 %1673
        %v1675 = vsel %vm1237, %v1645, 0.0
        %1676 = vadd.xlane.f32.xlu0 %v1675
        %v1677 = vpop.xlane.xlu0 %1676
        %v1678 = vsel %vm1237, %v1646, 0.0
        %1679 = vadd.xlane.f32.xlu0 %v1678
        %v1680 = vpop.xlane.xlu0 %1679
        %v1681 = vsel %vm1237, %v1647, 0.0
        %1682 = vadd.xlane.f32.xlu0 %v1681
        %v1683 = vpop.xlane.xlu0 %1682
        %v1684 = vsel %vm1237, %v1648, 0.0
        %1685 = vadd.xlane.f32.xlu0 %v1684
        %v1686 = vpop.xlane.xlu0 %1685
        %v1687 = vsel %vm1237, %v1649, 0.0
        %1688 = vadd.xlane.f32.xlu0 %v1687
        %v1689 = vpop.xlane.xlu0 %1688
        %v1690 = vsel %vm1237, %v1650, 0.0
        %1691 = vadd.xlane.f32.xlu0 %v1690
        %v1692 = vpop.xlane.xlu0 %1691
        %v1693 = vsel %vm1237, %v1651, 0.0
        %1694 = vadd.xlane.f32.xlu0 %v1693
        %v1695 = vpop.xlane.xlu0 %1694
        %v1696 = vsel %vm1237, %v1652, 0.0
        %1697 = vadd.xlane.f32.xlu0 %v1696
        %v1698 = vpop.xlane.xlu0 %1697
        %v1699 = vsel %vm1237, %v1653, 0.0
        %1700 = vadd.xlane.f32.xlu0 %v1699
        %v1701 = vpop.xlane.xlu0 %1700
        %v1718 = vlaneseq
        %v1719 = vand.u32 %v1718, 127
        %v1720 = vlaneseq
        %v1721 = vshrl.u32 %v1720, 7
        %v1722 = vsub.s32 %v1719, %v1721
        %v1723 = vrot.slane %v1656, %v1722
        %v1724 = vadd.s32 %v1719, 4294967288
        %v1725 = vlaneseq
        %v1726 = vshrl.u32 %v1725, 7
        %v1727 = vsub.s32 %v1724, %v1726
        %v1728 = vrot.slane %v1659, %v1727
        %vm1729 = vcmask 130112
        %v1730 = vsel %vm1729, %v1728, %v1723
        %v1731 = vlaneseq
        %v1732 = vshrl.u32 %v1731, 7
        %v1733 = vsub.s32 %v1719, %v1732
        %v1734 = vrot.slane %v1662, %v1733
        %v1735 = vlaneseq
        %v1736 = vshrl.u32 %v1735, 7
        %v1737 = vsub.s32 %v1724, %v1736
        %v1738 = vrot.slane %v1665, %v1737
        %v1739 = vsel %vm1729, %v1738, %v1734
        %v1740 = vlaneseq
        %v1741 = vshrl.u32 %v1740, 7
        %v1742 = vsub.s32 %v1719, %v1741
        %v1743 = vrot.slane %v1668, %v1742
        %v1744 = vlaneseq
        %v1745 = vshrl.u32 %v1744, 7
        %v1746 = vsub.s32 %v1724, %v1745
        %v1747 = vrot.slane %v1671, %v1746
        %v1748 = vsel %vm1729, %v1747, %v1743
        %v1749 = vlaneseq
        %v1750 = vshrl.u32 %v1749, 7
        %v1751 = vsub.s32 %v1719, %v1750
        %v1752 = vrot.slane %v1674, %v1751
        %v1753 = vlaneseq
        %v1754 = vshrl.u32 %v1753, 7
        %v1755 = vsub.s32 %v1724, %v1754
        %v1756 = vrot.slane %v1677, %v1755
        %v1757 = vsel %vm1729, %v1756, %v1752
        %v1758 = vlaneseq
        %v1759 = vshrl.u32 %v1758, 7
        %v1760 = vsub.s32 %v1719, %v1759
        %v1761 = vrot.slane %v1680, %v1760
        %v1762 = vlaneseq
        %v1763 = vshrl.u32 %v1762, 7
        %v1764 = vsub.s32 %v1724, %v1763
        %v1765 = vrot.slane %v1683, %v1764
        %v1766 = vsel %vm1729, %v1765, %v1761
        %v1767 = vlaneseq
        %v1768 = vshrl.u32 %v1767, 7
        %v1769 = vsub.s32 %v1719, %v1768
        %v1770 = vrot.slane %v1686, %v1769
        %v1771 = vlaneseq
        %v1772 = vshrl.u32 %v1771, 7
        %v1773 = vsub.s32 %v1724, %v1772
        %v1774 = vrot.slane %v1689, %v1773
        %v1775 = vsel %vm1729, %v1774, %v1770
        %v1776 = vlaneseq
        %v1777 = vshrl.u32 %v1776, 7
        %v1778 = vsub.s32 %v1719, %v1777
        %v1779 = vrot.slane %v1692, %v1778
        %v1780 = vlaneseq
        %v1781 = vshrl.u32 %v1780, 7
        %v1782 = vsub.s32 %v1724, %v1781
        %v1783 = vrot.slane %v1695, %v1782
        %v1784 = vsel %vm1729, %v1783, %v1779
        %v1785 = vlaneseq
        %v1786 = vshrl.u32 %v1785, 7
        %v1787 = vsub.s32 %v1719, %v1786
        %v1788 = vrot.slane %v1698, %v1787
        %v1789 = vlaneseq
        %v1790 = vshrl.u32 %v1789, 7
        %v1791 = vsub.s32 %v1724, %v1790
        %v1792 = vrot.slane %v1701, %v1791
        %v1793 = vsel %vm1729, %v1792, %v1788
        %vm1794 = vcmask 1041409
        %v1795 = vsel %vm1794, %v1739, %v1730
        %vm1796 = vcmask 1042434
        %v1797 = vsel %vm1796, %v1748, %v1795
        %vm1798 = vcmask 1043459
        %v1799 = vsel %vm1798, %v1757, %v1797
        %vm1800 = vcmask 1044484
        %v1801 = vsel %vm1800, %v1766, %v1799
        %vm1802 = vcmask 1045509
        %v1803 = vsel %vm1802, %v1775, %v1801
        %vm1804 = vcmask 1046534
        %v1805 = vsel %vm1804, %v1784, %v1803
        %vm1806 = vcmask 1047559
        %v1807 = vsel %vm1806, %v1793, %v1805
        %vm1809 = vcmask 130048
        %v1810 = vsel %vm1809, %v1807, -inf
        %1811 = vmax.xlane.f32.xlu0 %v1810
        %v1812 = vpop.xlane.xlu0 %1811
        %v1814 = vlaneseq
        %v1815 = vshrl.u32 %v1814, 7
        %v1816 = vsub.s32 0, %v1815
        %v1817 = vrot.slane %v1812, %v1816
        %v1818 = vlaneseq
        %v1819 = vshrl.u32 %v1818, 7
        %v1820 = vsub.s32 1, %v1819
        %v1821 = vrot.slane %v1812, %v1820
        %v1822 = vlaneseq
        %v1823 = vshrl.u32 %v1822, 7
        %v1824 = vsub.s32 2, %v1823
        %v1825 = vrot.slane %v1812, %v1824
        %v1826 = vlaneseq
        %v1827 = vshrl.u32 %v1826, 7
        %v1828 = vsub.s32 3, %v1827
        %v1829 = vrot.slane %v1812, %v1828
        %v1830 = vlaneseq
        %v1831 = vshrl.u32 %v1830, 7
        %v1832 = vsub.s32 4, %v1831
        %v1833 = vrot.slane %v1812, %v1832
        %v1834 = vlaneseq
        %v1835 = vshrl.u32 %v1834, 7
        %v1836 = vsub.s32 5, %v1835
        %v1837 = vrot.slane %v1812, %v1836
        %v1838 = vlaneseq
        %v1839 = vshrl.u32 %v1838, 7
        %v1840 = vsub.s32 6, %v1839
        %v1841 = vrot.slane %v1812, %v1840
        %v1842 = vlaneseq
        %v1843 = vshrl.u32 %v1842, 7
        %v1844 = vsub.s32 7, %v1843
        %v1845 = vrot.slane %v1812, %v1844
        %v1854 = vsub.f32 %v1656, %v1817
        %v1855 = vsub.f32 %v1659, %v1817
        %v1856 = vsub.f32 %v1662, %v1821
        %v1857 = vsub.f32 %v1665, %v1821
        %v1858 = vsub.f32 %v1668, %v1825
        %v1859 = vsub.f32 %v1671, %v1825
        %v1860 = vsub.f32 %v1674, %v1829
        %v1861 = vsub.f32 %v1677, %v1829
        %v1862 = vsub.f32 %v1680, %v1833
        %v1863 = vsub.f32 %v1683, %v1833
        %v1864 = vsub.f32 %v1686, %v1837
        %v1865 = vsub.f32 %v1689, %v1837
        %v1866 = vsub.f32 %v1692, %v1841
        %v1867 = vsub.f32 %v1695, %v1841
        %v1868 = vsub.f32 %v1698, %v1845
        %v1869 = vsub.f32 %v1701, %v1845
        %v1870 = vmul.f32 %v1854, 1.442695
        %v1871 = vpow.pop %v1870
        %v1872 = vmul.f32 %v1855, 1.442695
        %v1873 = vpow.pop %v1872
        %v1874 = vmul.f32 %v1856, 1.442695
        %v1875 = vpow.pop %v1874
        %v1876 = vmul.f32 %v1857, 1.442695
        %v1877 = vpow.pop %v1876
        %v1878 = vmul.f32 %v1858, 1.442695
        %v1879 = vpow.pop %v1878
        %v1880 = vmul.f32 %v1859, 1.442695
        %v1881 = vpow.pop %v1880
        %v1882 = vmul.f32 %v1860, 1.442695
        %v1883 = vpow.pop %v1882
        %v1884 = vmul.f32 %v1861, 1.442695
        %v1885 = vpow.pop %v1884
        %v1886 = vmul.f32 %v1862, 1.442695
        %v1887 = vpow.pop %v1886
        %v1888 = vmul.f32 %v1863, 1.442695
        %v1889 = vpow.pop %v1888
        %v1890 = vmul.f32 %v1864, 1.442695
        %v1891 = vpow.pop %v1890
        %v1892 = vmul.f32 %v1865, 1.442695
        %v1893 = vpow.pop %v1892
        %v1894 = vmul.f32 %v1866, 1.442695
        %v1895 = vpow.pop %v1894
        %v1896 = vmul.f32 %v1867, 1.442695
        %v1897 = vpow.pop %v1896
        %v1898 = vmul.f32 %v1868, 1.442695
        %v1899 = vpow.pop %v1898
        %v1900 = vmul.f32 %v1869, 1.442695
        %v1901 = vpow.pop %v1900
        %1918 = vset.pattern.permute.xlu0 0
        %1919 = vperm.xlu0 %1918, %v1871
        %v1920 = vpop.permute.xlu0 %1919
        %1921 = vset.pattern.permute.xlu0 0
        %1922 = vperm.xlu0 %1921, %v1873
        %v1923 = vpop.permute.xlu0 %1922
        %1924 = vset.pattern.permute.xlu0 0
        %1925 = vperm.xlu0 %1924, %v1875
        %v1926 = vpop.permute.xlu0 %1925
        %1927 = vset.pattern.permute.xlu0 0
        %1928 = vperm.xlu0 %1927, %v1877
        %v1929 = vpop.permute.xlu0 %1928
        %1930 = vset.pattern.permute.xlu0 0
        %1931 = vperm.xlu0 %1930, %v1879
        %v1932 = vpop.permute.xlu0 %1931
        %1933 = vset.pattern.permute.xlu0 0
        %1934 = vperm.xlu0 %1933, %v1881
        %v1935 = vpop.permute.xlu0 %1934
        %1936 = vset.pattern.permute.xlu0 0
        %1937 = vperm.xlu0 %1936, %v1883
        %v1938 = vpop.permute.xlu0 %1937
        %1939 = vset.pattern.permute.xlu0 0
        %1940 = vperm.xlu0 %1939, %v1885
        %v1941 = vpop.permute.xlu0 %1940
        %1942 = vset.pattern.permute.xlu0 0
        %1943 = vperm.xlu0 %1942, %v1887
        %v1944 = vpop.permute.xlu0 %1943
        %1945 = vset.pattern.permute.xlu0 0
        %1946 = vperm.xlu0 %1945, %v1889
        %v1947 = vpop.permute.xlu0 %1946
        %1948 = vset.pattern.permute.xlu0 0
        %1949 = vperm.xlu0 %1948, %v1891
        %v1950 = vpop.permute.xlu0 %1949
        %1951 = vset.pattern.permute.xlu0 0
        %1952 = vperm.xlu0 %1951, %v1893
        %v1953 = vpop.permute.xlu0 %1952
        %1954 = vset.pattern.permute.xlu0 0
        %1955 = vperm.xlu0 %1954, %v1895
        %v1956 = vpop.permute.xlu0 %1955
        %1957 = vset.pattern.permute.xlu0 0
        %1958 = vperm.xlu0 %1957, %v1897
        %v1959 = vpop.permute.xlu0 %1958
        %1960 = vset.pattern.permute.xlu0 0
        %1961 = vperm.xlu0 %1960, %v1899
        %v1962 = vpop.permute.xlu0 %1961
        %1963 = vset.pattern.permute.xlu0 0
        %1964 = vperm.xlu0 %1963, %v1901
        %v1965 = vpop.permute.xlu0 %1964
        %v1966 = vlaneseq
        %v1967 = vshrl.u32 %v1966, 7
        %v1968 = vsub.s32 %v1719, %v1967
        %v1969 = vrot.slane %v1920, %v1968
        %v1970 = vlaneseq
        %v1971 = vshrl.u32 %v1970, 7
        %v1972 = vsub.s32 %v1724, %v1971
        %v1973 = vrot.slane %v1923, %v1972
        %v1974 = vsel %vm1729, %v1973, %v1969
        %v1975 = vlaneseq
        %v1976 = vshrl.u32 %v1975, 7
        %v1977 = vsub.s32 %v1719, %v1976
        %v1978 = vrot.slane %v1926, %v1977
        %v1979 = vlaneseq
        %v1980 = vshrl.u32 %v1979, 7
        %v1981 = vsub.s32 %v1724, %v1980
        %v1982 = vrot.slane %v1929, %v1981
        %v1983 = vsel %vm1729, %v1982, %v1978
        %v1984 = vlaneseq
        %v1985 = vshrl.u32 %v1984, 7
        %v1986 = vsub.s32 %v1719, %v1985
        %v1987 = vrot.slane %v1932, %v1986
        %v1988 = vlaneseq
        %v1989 = vshrl.u32 %v1988, 7
        %v1990 = vsub.s32 %v1724, %v1989
        %v1991 = vrot.slane %v1935, %v1990
        %v1992 = vsel %vm1729, %v1991, %v1987
        %v1993 = vlaneseq
        %v1994 = vshrl.u32 %v1993, 7
        %v1995 = vsub.s32 %v1719, %v1994
        %v1996 = vrot.slane %v1938, %v1995
        %v1997 = vlaneseq
        %v1998 = vshrl.u32 %v1997, 7
        %v1999 = vsub.s32 %v1724, %v1998
        %v2000 = vrot.slane %v1941, %v1999
        %v2001 = vsel %vm1729, %v2000, %v1996
        %v2002 = vlaneseq
        %v2003 = vshrl.u32 %v2002, 7
        %v2004 = vsub.s32 %v1719, %v2003
        %v2005 = vrot.slane %v1944, %v2004
        %v2006 = vlaneseq
        %v2007 = vshrl.u32 %v2006, 7
        %v2008 = vsub.s32 %v1724, %v2007
        %v2009 = vrot.slane %v1947, %v2008
        %v2010 = vsel %vm1729, %v2009, %v2005
        %v2011 = vlaneseq
        %v2012 = vshrl.u32 %v2011, 7
        %v2013 = vsub.s32 %v1719, %v2012
        %v2014 = vrot.slane %v1950, %v2013
        %v2015 = vlaneseq
        %v2016 = vshrl.u32 %v2015, 7
        %v2017 = vsub.s32 %v1724, %v2016
        %v2018 = vrot.slane %v1953, %v2017
        %v2019 = vsel %vm1729, %v2018, %v2014
        %v2020 = vlaneseq
        %v2021 = vshrl.u32 %v2020, 7
        %v2022 = vsub.s32 %v1719, %v2021
        %v2023 = vrot.slane %v1956, %v2022
        %v2024 = vlaneseq
        %v2025 = vshrl.u32 %v2024, 7
        %v2026 = vsub.s32 %v1724, %v2025
        %v2027 = vrot.slane %v1959, %v2026
        %v2028 = vsel %vm1729, %v2027, %v2023
        %v2029 = vlaneseq
        %v2030 = vshrl.u32 %v2029, 7
        %v2031 = vsub.s32 %v1719, %v2030
        %v2032 = vrot.slane %v1962, %v2031
        %v2033 = vlaneseq
        %v2034 = vshrl.u32 %v2033, 7
        %v2035 = vsub.s32 %v1724, %v2034
        %v2036 = vrot.slane %v1965, %v2035
        %v2037 = vsel %vm1729, %v2036, %v2032
        %v2038 = vsel %vm1794, %v1983, %v1974
        %v2039 = vsel %vm1796, %v1992, %v2038
        %v2040 = vsel %vm1798, %v2001, %v2039
        %v2041 = vsel %vm1800, %v2010, %v2040
        %v2042 = vsel %vm1802, %v2019, %v2041
        %v2043 = vsel %vm1804, %v2028, %v2042
        %v2044 = vsel %vm1806, %v2037, %v2043
        %v2046 = vsel %vm1809, %v2044, 0.0
        %2047 = vadd.xlane.f32.xlu0 %v2046
        %v2048 = vpop.xlane.xlu0 %2047
        %v2050 = vlaneseq
        %v2051 = vshrl.u32 %v2050, 7
        %v2052 = vsub.s32 0, %v2051
        %v2053 = vrot.slane %v2048, %v2052
        %v2054 = vlaneseq
        %v2055 = vshrl.u32 %v2054, 7
        %v2056 = vsub.s32 1, %v2055
        %v2057 = vrot.slane %v2048, %v2056
        %v2058 = vlaneseq
        %v2059 = vshrl.u32 %v2058, 7
        %v2060 = vsub.s32 2, %v2059
        %v2061 = vrot.slane %v2048, %v2060
        %v2062 = vlaneseq
        %v2063 = vshrl.u32 %v2062, 7
        %v2064 = vsub.s32 3, %v2063
        %v2065 = vrot.slane %v2048, %v2064
        %v2066 = vlaneseq
        %v2067 = vshrl.u32 %v2066, 7
        %v2068 = vsub.s32 4, %v2067
        %v2069 = vrot.slane %v2048, %v2068
        %v2070 = vlaneseq
        %v2071 = vshrl.u32 %v2070, 7
        %v2072 = vsub.s32 5, %v2071
        %v2073 = vrot.slane %v2048, %v2072
        %v2074 = vlaneseq
        %v2075 = vshrl.u32 %v2074, 7
        %v2076 = vsub.s32 6, %v2075
        %v2077 = vrot.slane %v2048, %v2076
        %v2078 = vlaneseq
        %v2079 = vshrl.u32 %v2078, 7
        %v2080 = vsub.s32 7, %v2079
        %v2081 = vrot.slane %v2048, %v2080
        %v2090 = vrcp.pop %v2053
        %v2091 = vmul.f32 %v1871, %v2090
        %v2092 = vmul.f32 %v1873, %v2090
        %v2093 = vrcp.pop %v2057
        %v2094 = vmul.f32 %v1875, %v2093
        %v2095 = vmul.f32 %v1877, %v2093
        %v2096 = vrcp.pop %v2061
        %v2097 = vmul.f32 %v1879, %v2096
        %v2098 = vmul.f32 %v1881, %v2096
        %v2099 = vrcp.pop %v2065
        %v2100 = vmul.f32 %v1883, %v2099
        %v2101 = vmul.f32 %v1885, %v2099
        %v2102 = vrcp.pop %v2069
        %v2103 = vmul.f32 %v1887, %v2102
        %v2104 = vmul.f32 %v1889, %v2102
        %v2105 = vrcp.pop %v2073
        %v2106 = vmul.f32 %v1891, %v2105
        %v2107 = vmul.f32 %v1893, %v2105
        %v2108 = vrcp.pop %v2077
        %v2109 = vmul.f32 %v1895, %v2108
        %v2110 = vmul.f32 %v1897, %v2108
        %v2111 = vrcp.pop %v2081
        %v2112 = vmul.f32 %v1899, %v2111
        %v2113 = vmul.f32 %v1901, %v2111
        %2130 = vset.pattern.permute.xlu0 0
        %2131 = vperm.xlu0 %2130, %v2091
        %v2132 = vpop.permute.xlu0 %2131
        %2133 = vset.pattern.permute.xlu0 0
        %2134 = vperm.xlu0 %2133, %v2092
        %v2135 = vpop.permute.xlu0 %2134
        %2136 = vset.pattern.permute.xlu0 0
        %2137 = vperm.xlu0 %2136, %v2094
        %v2138 = vpop.permute.xlu0 %2137
        %2139 = vset.pattern.permute.xlu0 0
        %2140 = vperm.xlu0 %2139, %v2095
        %v2141 = vpop.permute.xlu0 %2140
        %2142 = vset.pattern.permute.xlu0 0
        %2143 = vperm.xlu0 %2142, %v2097
        %v2144 = vpop.permute.xlu0 %2143
        %2145 = vset.pattern.permute.xlu0 0
        %2146 = vperm.xlu0 %2145, %v2098
        %v2147 = vpop.permute.xlu0 %2146
        %2148 = vset.pattern.permute.xlu0 0
        %2149 = vperm.xlu0 %2148, %v2100
        %v2150 = vpop.permute.xlu0 %2149
        %2151 = vset.pattern.permute.xlu0 0
        %2152 = vperm.xlu0 %2151, %v2101
        %v2153 = vpop.permute.xlu0 %2152
        %2154 = vset.pattern.permute.xlu0 0
        %2155 = vperm.xlu0 %2154, %v2103
        %v2156 = vpop.permute.xlu0 %2155
        %2157 = vset.pattern.permute.xlu0 0
        %2158 = vperm.xlu0 %2157, %v2104
        %v2159 = vpop.permute.xlu0 %2158
        %2160 = vset.pattern.permute.xlu0 0
        %2161 = vperm.xlu0 %2160, %v2106
        %v2162 = vpop.permute.xlu0 %2161
        %2163 = vset.pattern.permute.xlu0 0
        %2164 = vperm.xlu0 %2163, %v2107
        %v2165 = vpop.permute.xlu0 %2164
        %2166 = vset.pattern.permute.xlu0 0
        %2167 = vperm.xlu0 %2166, %v2109
        %v2168 = vpop.permute.xlu0 %2167
        %2169 = vset.pattern.permute.xlu0 0
        %2170 = vperm.xlu0 %2169, %v2110
        %v2171 = vpop.permute.xlu0 %2170
        %2172 = vset.pattern.permute.xlu0 0
        %2173 = vperm.xlu0 %2172, %v2112
        %v2174 = vpop.permute.xlu0 %2173
        %2175 = vset.pattern.permute.xlu0 0
        %2176 = vperm.xlu0 %2175, %v2113
        %v2177 = vpop.permute.xlu0 %2176
        %v2178 = vlaneseq
        %v2179 = vshrl.u32 %v2178, 7
        %v2180 = vsub.s32 %v1719, %v2179
        %v2181 = vrot.slane %v2132, %v2180
        %v2182 = vlaneseq
        %v2183 = vshrl.u32 %v2182, 7
        %v2184 = vsub.s32 %v1724, %v2183
        %v2185 = vrot.slane %v2135, %v2184
        %v2186 = vsel %vm1729, %v2185, %v2181
        %v2187 = vlaneseq
        %v2188 = vshrl.u32 %v2187, 7
        %v2189 = vsub.s32 %v1719, %v2188
        %v2190 = vrot.slane %v2138, %v2189
        %v2191 = vlaneseq
        %v2192 = vshrl.u32 %v2191, 7
        %v2193 = vsub.s32 %v1724, %v2192
        %v2194 = vrot.slane %v2141, %v2193
        %v2195 = vsel %vm1729, %v2194, %v2190
        %v2196 = vlaneseq
        %v2197 = vshrl.u32 %v2196, 7
        %v2198 = vsub.s32 %v1719, %v2197
        %v2199 = vrot.slane %v2144, %v2198
        %v2200 = vlaneseq
        %v2201 = vshrl.u32 %v2200, 7
        %v2202 = vsub.s32 %v1724, %v2201
        %v2203 = vrot.slane %v2147, %v2202
        %v2204 = vsel %vm1729, %v2203, %v2199
        %v2205 = vlaneseq
        %v2206 = vshrl.u32 %v2205, 7
        %v2207 = vsub.s32 %v1719, %v2206
        %v2208 = vrot.slane %v2150, %v2207
        %v2209 = vlaneseq
        %v2210 = vshrl.u32 %v2209, 7
        %v2211 = vsub.s32 %v1724, %v2210
        %v2212 = vrot.slane %v2153, %v2211
        %v2213 = vsel %vm1729, %v2212, %v2208
        %v2214 = vlaneseq
        %v2215 = vshrl.u32 %v2214, 7
        %v2216 = vsub.s32 %v1719, %v2215
        %v2217 = vrot.slane %v2156, %v2216
        %v2218 = vlaneseq
        %v2219 = vshrl.u32 %v2218, 7
        %v2220 = vsub.s32 %v1724, %v2219
        %v2221 = vrot.slane %v2159, %v2220
        %v2222 = vsel %vm1729, %v2221, %v2217
        %v2223 = vlaneseq
        %v2224 = vshrl.u32 %v2223, 7
        %v2225 = vsub.s32 %v1719, %v2224
        %v2226 = vrot.slane %v2162, %v2225
        %v2227 = vlaneseq
        %v2228 = vshrl.u32 %v2227, 7
        %v2229 = vsub.s32 %v1724, %v2228
        %v2230 = vrot.slane %v2165, %v2229
        %v2231 = vsel %vm1729, %v2230, %v2226
        %v2232 = vlaneseq
        %v2233 = vshrl.u32 %v2232, 7
        %v2234 = vsub.s32 %v1719, %v2233
        %v2235 = vrot.slane %v2168, %v2234
        %v2236 = vlaneseq
        %v2237 = vshrl.u32 %v2236, 7
        %v2238 = vsub.s32 %v1724, %v2237
        %v2239 = vrot.slane %v2171, %v2238
        %v2240 = vsel %vm1729, %v2239, %v2235
        %v2241 = vlaneseq
        %v2242 = vshrl.u32 %v2241, 7
        %v2243 = vsub.s32 %v1719, %v2242
        %v2244 = vrot.slane %v2174, %v2243
        %v2245 = vlaneseq
        %v2246 = vshrl.u32 %v2245, 7
        %v2247 = vsub.s32 %v1724, %v2246
        %v2248 = vrot.slane %v2177, %v2247
        %v2249 = vsel %vm1729, %v2248, %v2244
        %v2250 = vsel %vm1794, %v2195, %v2186
        %v2251 = vsel %vm1796, %v2204, %v2250
        %v2252 = vsel %vm1798, %v2213, %v2251
        %v2253 = vsel %vm1800, %v2222, %v2252
        %v2254 = vsel %vm1802, %v2231, %v2253
        %v2255 = vsel %vm1804, %v2240, %v2254
        %v2256 = vsel %vm1806, %v2249, %v2255
        %2258 = vst.msk [vmem:[%s333] sm:$0xff] %vm1809, %v2256
        %s2259 = sand.u32 %s171, 1
        %s2260 = scalar_lea.sflag [#allocation4], %s2259
        %s2261 = sand.u32 %s171, 1
        %s2262 = smul.addr %s2261, 8
        %s2263 = scalar_lea.vmem [#allocation10], %s2262
        // Predicated region
        $region61: #{tpu_custom_call.1} parent=43 // pred_check
          %p2264 = pneg %p181
        $region62: #{tpu_custom_call.1} parent=43 // pred_check_branch
          %2266 = sbr.rel (%p2264) target = $region64
        $region63: #{tpu_custom_call.1} parent=43 // pred_region
          %s2268 = ssub.s32 128, 128
          %2269 = vsyncadd %s2260, %s2268
          %s2270 = smul.addr %s27, 128
          %s2271 = scalar_lea.hbm %s6, %s2270
          %s2273 = sshll.u32 %s2263, 4
          %s2274 = int_to_ptr.vmem [resolvable:$true] %s2273
          %2276 = dma.vmem_to_hbm [thread:$0]  %s2274, 128, %s2271, %s2260
        $region64: #{tpu_custom_call.1} parent=43 // pred_fallthru
          _
      $region44: #{tpu_custom_call.1} parent=5 // pred_fallthru
        _
      %p2277 = scmp.le.s32.totalorder 2, %s22
      // Predicated region
      $region65: #{tpu_custom_call.1} parent=5 // pred_check
        %p2278 = pneg %p2277
      $region66: #{tpu_custom_call.1} parent=5 // pred_check_branch
        %2280 = sbr.rel (%p2278) target = $region68
      $region67: #{tpu_custom_call.1} parent=5 // pred_region
        %s2281 = ssub.s32 %s22, 2
        // Predicated region
        $region69: #{tpu_custom_call.1} parent=67 // pred_check
          %p2282 = pneg %p187
        $region70: #{tpu_custom_call.1} parent=67 // pred_check_branch
          %2284 = sbr.rel (%p2282) target = $region72
        $region71: #{tpu_custom_call.1} parent=67 // pred_region
          %s2285 = sand.u32 %s172, 1
          %s2286 = scalar_lea.sflag [#allocation4], %s2285
          %s2287 = sand.u32 %s172, 1
          %s2288 = smul.addr %s2287, 8
          %s2289 = scalar_lea.vmem [#allocation10], %s2288
          %2290 = dma.done %s2286, 128
        $region72: #{tpu_custom_call.1} parent=67 // pred_fallthru
          _
      $region68: #{tpu_custom_call.1} parent=5 // pred_fallthru
        _
    $region6: #{tpu_custom_call.1} parent=1 // loop_footer
      %s26 = sadd.s32 1, %s22
    $region7: #{tpu_custom_call.1} parent=1 // loop_footer_branch
      %21 = sbr.rel target = $region3
    $region8: #{tpu_custom_call.1} parent=1 // loop_exit
      _
    %2291 = vsyncpa [#allocation3], 1
    %s2292 = scalar_lea.sflag [#allocation3], 1
    %2293 = vsyncpa %s2292, 1
    %2294 = vsyncpa [#allocation6], 1
    %s2295 = scalar_lea.sflag [#allocation6], 1
    %2296 = vsyncpa %s2295, 1
    %2297 = vsyncpa [#allocation9], 1
    %2298 = vsyncpa [#allocation4], 1
    %s2299 = scalar_lea.sflag [#allocation4], 1
    %2300 = vsyncpa %s2299, 1

// kernel: tpu_custom_call.1
$region0: #{tpu_custom_call.1}
  #allocation0 [shape = 'u32[]', space=smem, size = 0x4, offset = 0x4, fixed_abs, tag = 'smem constant byte address 0x4 - core index']
  #allocation1 [shape = 'u32[144,128]{1,0:T(1,128)}', space=vmem, size = 0x12000, scoped, tag = 'internal scratch']
  %s0 = inlined_call_operand.vmem [shape: f32[16,32,16], index: 0, kind: input, shape index: {}]
  %s1 = inlined_call_operand.vmem [shape: f32[16,32], index: 1, kind: input, shape index: {}]
  %s2 = inlined_call_operand.vmem [shape: f32[32,32], index: 2, kind: input, shape index: {}]
  %s3 = inlined_call_operand.vmem [shape: f32[32,32], index: 3, kind: input, shape index: {}]
  %s4 = inlined_call_operand.vmem [shape: f32[1,32], index: 4, kind: input, shape index: {}]
  %s5 = inlined_call_operand.vmem [shape: f32[1,32], index: 5, kind: input, shape index: {}]
  %s6 = inlined_call_operand.hbm [shape: f32[16,16], index: 6, kind: output, shape index: {}]
  %s7 = sld [smem:[#allocation0]]
  $region57: #{tpu_custom_call.1} parent=0
    _
  %s9 = ssub.s32 1, %s7
  %s10 = scalar_select 0, %s9, %s7
  $region1: #{tpu_custom_call.1} parent=0
    #allocation2 [shape = 'u8[8192]{0}', space=vmem, size = 0x2000, scoped, tag = 'output window, operand 0']
    #allocation3 [shape = 's32[2]{0}', space=sflag, size = 0x8, scoped, tag = 'scoped memory for tpu_custom_call.1']
    %11 = vsyncpa [#allocation3], 0
    %s12 = scalar_lea.sflag [#allocation3], 1
    %13 = vsyncpa %s12, 0
    loop: start=0, step=1, limit=4
    $region2: #{tpu_custom_call.1} parent=1 // loop_pre_header
      _
    $region3: #{tpu_custom_call.1} parent=1 // loop_header
      %s15 = sphi 0, %s19
      %p16 = scmp.ge.s32.totalorder %s15, 4
      %s25 = sphi 0, %s27
      %s28 = sphi 0, %s25
      %s29 = sphi 0, %s28
      %s45 = sphi 0, %s29
      %s51 = sphi 0, %s53
      %s54 = sphi 0, %s51
      %s55 = sphi 0, %s54
      %s71 = sphi 0, %s55
      %s75 = sphi 0, %s75
      %s77 = sphi 0, %s75
      %s78 = sphi 0, %s77
      %s92 = sphi 0, %s78
      %s96 = sphi 0, %s96
      %s98 = sphi 0, %s96
      %s99 = sphi 0, %s98
      %s113 = sphi 0, %s99
      %s117 = sphi 0, %s117
      %s119 = sphi 0, %s117
      %s120 = sphi 0, %s119
      %s134 = sphi 0, %s120
      %s138 = sphi 0, %s138
      %s140 = sphi 0, %s138
      %s141 = sphi 0, %s140
      %s155 = sphi 0, %s141
      %s161 = sphi 0, %s163
      %s164 = sphi 0, %s161
      %s165 = sphi 0, %s164
      %s181 = sphi 0, %s165
    $region4: #{tpu_custom_call.1} parent=1 // loop_header_branch
      %18 = sbr.rel (%p16) target = $region8
    $region5: #{tpu_custom_call.1} parent=1 // loop_body
      %s20 = ssub.s32 %s15, 1
      %s21 = ssub.s32 %s15, 2
      %s22 = sadd.s32 %s15, 1
      %s23 = ssub.s32 %s15, %s22
      %p24 = scmp.eq.s32.totalorder %s23, 0
      %s26 = sadd.s32 %s25, 1
      %s27 = scalar_select %p24, %s25, %s26
      %p30 = pneg %p24
      %p31 = scmp.eq.s32.totalorder %s15, 1
      %p32 = por %p30, %p31
      %p33 = scmp.ne.s32.totalorder %s25, %s28
      %p34 = scmp.eq.s32.totalorder %s15, 0
      %p35 = por %p33, %p34
      %p36 = scmp.ne.s32.totalorder %s25, %s28
      %p37 = scmp.eq.s32.totalorder %s20, 1
      %p38 = por %p36, %p37
      %p39 = scmp.ne.s32.totalorder %s28, %s29
      %p40 = scmp.eq.s32.totalorder %s20, 0
      %p41 = por %p39, %p40
      %p42 = scmp.ne.s32.totalorder %s28, %s29
      %p43 = scmp.eq.s32.totalorder %s21, 1
      %p44 = por %p42, %p43
      %p46 = scmp.ne.s32.totalorder %s29, %s45
      %p47 = scmp.eq.s32.totalorder %s21, 0
      %p48 = por %p46, %p47
      %s49 = ssub.s32 %s15, %s22
      %p50 = scmp.eq.s32.totalorder %s49, 0
      %s52 = sadd.s32 %s51, 1
      %s53 = scalar_select %p50, %s51, %s52
      %p56 = pneg %p50
      %p57 = scmp.eq.s32.totalorder %s15, 1
      %p58 = por %p56, %p57
      %p59 = scmp.ne.s32.totalorder %s51, %s54
      %p60 = scmp.eq.s32.totalorder %s15, 0
      %p61 = por %p59, %p60
      %p62 = scmp.ne.s32.totalorder %s51, %s54
      %p63 = scmp.eq.s32.totalorder %s20, 1
      %p64 = por %p62, %p63
      %p65 = scmp.ne.s32.totalorder %s54, %s55
      %p66 = scmp.eq.s32.totalorder %s20, 0
      %p67 = por %p65, %p66
      %p68 = scmp.ne.s32.totalorder %s54, %s55
      %p69 = scmp.eq.s32.totalorder %s21, 1
      %p70 = por %p68, %p69
      %p72 = scmp.ne.s32.totalorder %s55, %s71
      %p73 = scmp.eq.s32.totalorder %s21, 0
      %p74 = por %p72, %p73
      %s76 = sadd.s32 %s75, 1
      %p79 = scmp.eq.s32.totalorder %s15, 1
      %p80 = scmp.ne.s32.totalorder %s75, %s77
      %p81 = scmp.eq.s32.totalorder %s15, 0
      %p82 = por %p80, %p81
      %p83 = scmp.ne.s32.totalorder %s75, %s77
      %p84 = scmp.eq.s32.totalorder %s20, 1
      %p85 = por %p83, %p84
      %p86 = scmp.ne.s32.totalorder %s77, %s78
      %p87 = scmp.eq.s32.totalorder %s20, 0
      %p88 = por %p86, %p87
      %p89 = scmp.ne.s32.totalorder %s77, %s78
      %p90 = scmp.eq.s32.totalorder %s21, 1
      %p91 = por %p89, %p90
      %p93 = scmp.ne.s32.totalorder %s78, %s92
      %p94 = scmp.eq.s32.totalorder %s21, 0
      %p95 = por %p93, %p94
      %s97 = sadd.s32 %s96, 1
      %p100 = scmp.eq.s32.totalorder %s15, 1
      %p101 = scmp.ne.s32.totalorder %s96, %s98
      %p102 = scmp.eq.s32.totalorder %s15, 0
      %p103 = por %p101, %p102
      %p104 = scmp.ne.s32.totalorder %s96, %s98
      %p105 = scmp.eq.s32.totalorder %s20, 1
      %p106 = por %p104, %p105
      %p107 = scmp.ne.s32.totalorder %s98, %s99
      %p108 = scmp.eq.s32.totalorder %s20, 0
      %p109 = por %p107, %p108
      %p110 = scmp.ne.s32.totalorder %s98, %s99
      %p111 = scmp.eq.s32.totalorder %s21, 1
      %p112 = por %p110, %p111
      %p114 = scmp.ne.s32.totalorder %s99, %s113
      %p115 = scmp.eq.s32.totalorder %s21, 0
      %p116 = por %p114, %p115
      %s118 = sadd.s32 %s117, 1
      %p121 = scmp.eq.s32.totalorder %s15, 1
      %p122 = scmp.ne.s32.totalorder %s117, %s119
      %p123 = scmp.eq.s32.totalorder %s15, 0
      %p124 = por %p122, %p123
      %p125 = scmp.ne.s32.totalorder %s117, %s119
      %p126 = scmp.eq.s32.totalorder %s20, 1
      %p127 = por %p125, %p126
      %p128 = scmp.ne.s32.totalorder %s119, %s120
      %p129 = scmp.eq.s32.totalorder %s20, 0
      %p130 = por %p128, %p129
      %p131 = scmp.ne.s32.totalorder %s119, %s120
      %p132 = scmp.eq.s32.totalorder %s21, 1
      %p133 = por %p131, %p132
      %p135 = scmp.ne.s32.totalorder %s120, %s134
      %p136 = scmp.eq.s32.totalorder %s21, 0
      %p137 = por %p135, %p136
      %s139 = sadd.s32 %s138, 1
      %p142 = scmp.eq.s32.totalorder %s15, 1
      %p143 = scmp.ne.s32.totalorder %s138, %s140
      %p144 = scmp.eq.s32.totalorder %s15, 0
      %p145 = por %p143, %p144
      %p146 = scmp.ne.s32.totalorder %s138, %s140
      %p147 = scmp.eq.s32.totalorder %s20, 1
      %p148 = por %p146, %p147
      %p149 = scmp.ne.s32.totalorder %s140, %s141
      %p150 = scmp.eq.s32.totalorder %s20, 0
      %p151 = por %p149, %p150
      %p152 = scmp.ne.s32.totalorder %s140, %s141
      %p153 = scmp.eq.s32.totalorder %s21, 1
      %p154 = por %p152, %p153
      %p156 = scmp.ne.s32.totalorder %s141, %s155
      %p157 = scmp.eq.s32.totalorder %s21, 0
      %p158 = por %p156, %p157
      %s159 = ssub.s32 %s15, %s22
      %p160 = scmp.eq.s32.totalorder %s159, 0
      %s162 = sadd.s32 %s161, 1
      %s163 = scalar_select %p160, %s161, %s162
      %p166 = pneg %p160
      %p167 = scmp.eq.s32.totalorder %s15, 1
      %p168 = por %p166, %p167
      %p169 = scmp.ne.s32.totalorder %s161, %s164
      %p170 = scmp.eq.s32.totalorder %s15, 0
      %p171 = por %p169, %p170
      %p172 = scmp.ne.s32.totalorder %s161, %s164
      %p173 = scmp.eq.s32.totalorder %s20, 1
      %p174 = por %p172, %p173
      %p175 = scmp.ne.s32.totalorder %s164, %s165
      %p176 = scmp.eq.s32.totalorder %s20, 0
      %p177 = por %p175, %p176
      %p178 = scmp.ne.s32.totalorder %s164, %s165
      %p179 = scmp.eq.s32.totalorder %s21, 1
      %p180 = por %p178, %p179
      %p182 = scmp.ne.s32.totalorder %s165, %s181
      %p183 = scmp.eq.s32.totalorder %s21, 0
      %p184 = por %p182, %p183
      %p185 = scmp.le.s32.totalorder 1, %s15
      %p186 = scmp.lt.s32.totalorder %s15, 3
      %p187 = pnand %p185, %p186
      %p188 = pneg %p187
      // Predicated region
      $region9: #{tpu_custom_call.1} parent=5 // pred_check
        _
      $region10: #{tpu_custom_call.1} parent=5 // pred_check_branch
        %190 = sbr.rel (%p187) target = $region12
      $region11: #{tpu_custom_call.1} parent=5 // pred_region
        %s191 = ssub.s32 %s15, 1
        // Predicated region
        $region13: #{tpu_custom_call.1} parent=11 // pred_check
          %p192 = pneg %p88
        $region14: #{tpu_custom_call.1} parent=11 // pred_check_branch
          %194 = sbr.rel (%p192) target = $region16
        $region15: #{tpu_custom_call.1} parent=11 // pred_region
          _
        $region16: #{tpu_custom_call.1} parent=11 // pred_fallthru
          _
        // Predicated region
        $region17: #{tpu_custom_call.1} parent=11 // pred_check
          %p195 = pneg %p109
        $region18: #{tpu_custom_call.1} parent=11 // pred_check_branch
          %197 = sbr.rel (%p195) target = $region20
        $region19: #{tpu_custom_call.1} parent=11 // pred_region
          _
        $region20: #{tpu_custom_call.1} parent=11 // pred_fallthru
          _
        // Predicated region
        $region21: #{tpu_custom_call.1} parent=11 // pred_check
          %p198 = pneg %p130
        $region22: #{tpu_custom_call.1} parent=11 // pred_check_branch
          %200 = sbr.rel (%p198) target = $region24
        $region23: #{tpu_custom_call.1} parent=11 // pred_region
          _
        $region24: #{tpu_custom_call.1} parent=11 // pred_fallthru
          _
        // Predicated region
        $region25: #{tpu_custom_call.1} parent=11 // pred_check
          %p201 = pneg %p151
        $region26: #{tpu_custom_call.1} parent=11 // pred_check_branch
          %203 = sbr.rel (%p201) target = $region28
        $region27: #{tpu_custom_call.1} parent=11 // pred_region
          _
        $region28: #{tpu_custom_call.1} parent=11 // pred_fallthru
          _
      $region12: #{tpu_custom_call.1} parent=5 // pred_fallthru
        _
      %p204 = scmp.lt.s32.totalorder %s15, 2
      // Predicated region
      $region29: #{tpu_custom_call.1} parent=5 // pred_check
        %p205 = pneg %p204
      $region30: #{tpu_custom_call.1} parent=5 // pred_check_branch
        %207 = sbr.rel (%p205) target = $region32
      $region31: #{tpu_custom_call.1} parent=5 // pred_region
        // Predicated region
        $region33: #{tpu_custom_call.1} parent=31 // pred_check
          %p208 = pneg %p35
        $region34: #{tpu_custom_call.1} parent=31 // pred_check_branch
          %210 = sbr.rel (%p208) target = $region36
        $region35: #{tpu_custom_call.1} parent=31 // pred_region
          %s211 = smul.u32 8, %s15
          %p212 = scmp.lt.s32.totalorder %s211, 15
          %s213 = scalar_select %p212, %s211, 15
          %s214 = smul.addr %s213, 4
          %s215 = smul.addr %s214, 8
          %s216 = scalar_lea.vmem %s0, %s215
          %s217 = smul.u32 8, %s15
        $region36: #{tpu_custom_call.1} parent=31 // pred_fallthru
          _
        // Predicated region
        $region37: #{tpu_custom_call.1} parent=31 // pred_check
          %p218 = pneg %p61
        $region38: #{tpu_custom_call.1} parent=31 // pred_check_branch
          %220 = sbr.rel (%p218) target = $region40
        $region39: #{tpu_custom_call.1} parent=31 // pred_region
          %p221 = scmp.lt.s32.totalorder %s15, 1
          %s222 = scalar_select %p221, %s15, 1
          %s223 = smul.addr %s222, 8
          %s224 = scalar_lea.vmem %s1, %s223
        $region40: #{tpu_custom_call.1} parent=31 // pred_fallthru
          _
      $region32: #{tpu_custom_call.1} parent=5 // pred_fallthru
        _
      %p225 = scmp.le.s32.totalorder 1, %s15
      %p226 = scmp.lt.s32.totalorder %s15, 3
      %p227 = pnand %p225, %p226
      %p228 = pneg %p227
      // Predicated region
      $region41: #{tpu_custom_call.1} parent=5 // pred_check
        _
      $region42: #{tpu_custom_call.1} parent=5 // pred_check_branch
        %230 = sbr.rel (%p227) target = $region44
      $region43: #{tpu_custom_call.1} parent=5 // pred_region
        %s231 = ssub.s32 %s15, 1
        %s232 = smul.u32 8, %s20
        %p233 = scmp.lt.s32.totalorder %s232, 15
        %s234 = scalar_select %p233, %s232, 15
        %s235 = smul.addr %s234, 4
        %s236 = smul.addr %s235, 8
        %s237 = scalar_lea.vmem %s0, %s236
        %p238 = pneg %p41
        %p239 = pneg %p38
        %p240 = scmp.lt.s32.totalorder %s20, 1
        %s241 = scalar_select %p240, %s20, 1
        %s242 = smul.addr %s241, 8
        %s243 = scalar_lea.vmem %s1, %s242
        %p244 = pneg %p67
        %p245 = pneg %p64
        %p246 = pneg %p88
        %p247 = pneg %p85
        %p248 = pneg %p109
        %p249 = pneg %p106
        %p250 = pneg %p130
        %p251 = pneg %p127
        %p252 = pneg %p151
        %p253 = pneg %p148
        %p254 = pneg %p177
        %p255 = pneg %p174
        %s256 = sand.u32 %s164, 1
        %s257 = scalar_lea.sflag [#allocation3], %s256
        %s258 = sand.u32 %s164, 1
        %s259 = smul.addr %s258, 8
        %s260 = scalar_lea.vmem [#allocation2], %s259
        %s261 = smul.u32 8, %s20
        %p262 = scmp.lt.s32.totalorder %s261, 15
        %s263 = scalar_select %p262, %s261, 15
        %s264 = smul.addr %s263, 4
        %s265 = smul.addr %s264, 8
        %s266 = scalar_lea.vmem %s0, %s265
        %s267 = smul.u32 8, %s20
        %p268 = scmp.lt.s32.totalorder %s20, 1
        %s269 = scalar_select %p268, %s20, 1
        %s270 = smul.addr %s269, 8
        %s271 = scalar_lea.vmem %s1, %s270
        %v272 = vld [vmem:[%s2] sm:$0xff]
        %v273 = vld [vmem:[%s2 + $0x8] sm:$0xff]
        %v274 = vld [vmem:[%s2 + $0x10] sm:$0xff]
        %v275 = vld [vmem:[%s2 + $0x18] sm:$0xff]
        %v276 = vld [vmem:[%s3] sm:$0xff]
        %v277 = vld [vmem:[%s3 + $0x8] sm:$0xff]
        %v278 = vld [vmem:[%s3 + $0x10] sm:$0xff]
        %v279 = vld [vmem:[%s3 + $0x18] sm:$0xff]
        %v280 = vld [vmem:[%s4] sm:$0x1]
        %v281 = vld [vmem:[%s5] sm:$0x1]
        %v282 = vld [vmem:[%s266] sm:$0xff]
        %v283 = vld [vmem:[%s266 + $0x8] sm:$0xff]
        %v284 = vld [vmem:[%s266 + $0x10] sm:$0xff]
        %v285 = vld [vmem:[%s266 + $0x18] sm:$0xff]
        %v286 = vld [vmem:[%s266 + $0x20] sm:$0xff]
        %v287 = vld [vmem:[%s266 + $0x28] sm:$0xff]
        %v288 = vld [vmem:[%s266 + $0x30] sm:$0xff]
        %v289 = vld [vmem:[%s266 + $0x38] sm:$0xff]
        %v290 = vld [vmem:[%s266 + $0x40] sm:$0xff]
        %v291 = vld [vmem:[%s266 + $0x48] sm:$0xff]
        %v292 = vld [vmem:[%s266 + $0x50] sm:$0xff]
        %v293 = vld [vmem:[%s266 + $0x58] sm:$0xff]
        %v294 = vld [vmem:[%s266 + $0x60] sm:$0xff]
        %v295 = vld [vmem:[%s266 + $0x68] sm:$0xff]
        %v296 = vld [vmem:[%s266 + $0x70] sm:$0xff]
        %v297 = vld [vmem:[%s266 + $0x78] sm:$0xff]
        %v298 = vld [vmem:[%s266 + $0x80] sm:$0xff]
        %v299 = vld [vmem:[%s266 + $0x88] sm:$0xff]
        %v300 = vld [vmem:[%s266 + $0x90] sm:$0xff]
        %v301 = vld [vmem:[%s266 + $0x98] sm:$0xff]
        %v302 = vld [vmem:[%s266 + $0xa0] sm:$0xff]
        %v303 = vld [vmem:[%s266 + $0xa8] sm:$0xff]
        %v304 = vld [vmem:[%s266 + $0xb0] sm:$0xff]
        %v305 = vld [vmem:[%s266 + $0xb8] sm:$0xff]
        %v306 = vld [vmem:[%s266 + $0xc0] sm:$0xff]
        %v307 = vld [vmem:[%s266 + $0xc8] sm:$0xff]
        %v308 = vld [vmem:[%s266 + $0xd0] sm:$0xff]
        %v309 = vld [vmem:[%s266 + $0xd8] sm:$0xff]
        %v310 = vld [vmem:[%s266 + $0xe0] sm:$0xff]
        %v311 = vld [vmem:[%s266 + $0xe8] sm:$0xff]
        %v312 = vld [vmem:[%s266 + $0xf0] sm:$0xff]
        %v313 = vld [vmem:[%s266 + $0xf8] sm:$0xff]
        %v314 = vld [vmem:[%s271] sm:$0xff]
        %315 = vxpose.xlu0.b32.start [1/16] %v282, 128
        %316 = vxpose.xlu0.b32.cont [2/16] %v283, 128
        %317 = vxpose.xlu0.b32.cont [3/16] %v284, 128
        %318 = vxpose.xlu0.b32.cont [4/16] %v285, 128
        %319 = vxpose.xlu0.b32.cont [5/16] 0.0, 128
        %320 = vxpose.xlu0.b32.cont [6/16] 0.0, 128
        %321 = vxpose.xlu0.b32.cont [7/16] 0.0, 128
        %322 = vxpose.xlu0.b32.cont [8/16] 0.0, 128
        %323 = vxpose.xlu0.b32.cont [9/16] 0.0, 128
        %324 = vxpose.xlu0.b32.cont [10/16] 0.0, 128
        %325 = vxpose.xlu0.b32.cont [11/16] 0.0, 128
        %326 = vxpose.xlu0.b32.cont [12/16] 0.0, 128
        %327 = vxpose.xlu0.b32.cont [13/16] 0.0, 128
        %328 = vxpose.xlu0.b32.cont [14/16] 0.0, 128
        %329 = vxpose.xlu0.b32.cont [15/16] 0.0, 128
        %330 = vxpose.xlu0.b32.end [16/16] 0.0, 128
        %v331 = vpop.trf.xlu0
        %v332 = vpop.trf.xlu0
        %v333 = vpop.trf.xlu0
        %v334 = vpop.trf.xlu0
        %v335 = vpop.trf.xlu0
        %v336 = vpop.trf.xlu0
        %v337 = vpop.trf.xlu0
        %v338 = vpop.trf.xlu0
        %v339 = vpop.trf.xlu0
        %v340 = vpop.trf.xlu0
        %v341 = vpop.trf.xlu0
        %v342 = vpop.trf.xlu0
        %v343 = vpop.trf.xlu0
        %v344 = vpop.trf.xlu0
        %v345 = vpop.trf.xlu0
        %v346 = vpop.trf.xlu0
        %347 = vxpose.xlu0.b32.start [1/16] %v286, 128
        %348 = vxpose.xlu0.b32.cont [2/16] %v287, 128
        %349 = vxpose.xlu0.b32.cont [3/16] %v288, 128
        %350 = vxpose.xlu0.b32.cont [4/16] %v289, 128
        %351 = vxpose.xlu0.b32.cont [5/16] 0.0, 128
        %352 = vxpose.xlu0.b32.cont [6/16] 0.0, 128
        %353 = vxpose.xlu0.b32.cont [7/16] 0.0, 128
        %354 = vxpose.xlu0.b32.cont [8/16] 0.0, 128
        %355 = vxpose.xlu0.b32.cont [9/16] 0.0, 128
        %356 = vxpose.xlu0.b32.cont [10/16] 0.0, 128
        %357 = vxpose.xlu0.b32.cont [11/16] 0.0, 128
        %358 = vxpose.xlu0.b32.cont [12/16] 0.0, 128
        %359 = vxpose.xlu0.b32.cont [13/16] 0.0, 128
        %360 = vxpose.xlu0.b32.cont [14/16] 0.0, 128
        %361 = vxpose.xlu0.b32.cont [15/16] 0.0, 128
        %362 = vxpose.xlu0.b32.end [16/16] 0.0, 128
        %v363 = vpop.trf.xlu0
        %v364 = vpop.trf.xlu0
        %v365 = vpop.trf.xlu0
        %v366 = vpop.trf.xlu0
        %v367 = vpop.trf.xlu0
        %v368 = vpop.trf.xlu0
        %v369 = vpop.trf.xlu0
        %v370 = vpop.trf.xlu0
        %v371 = vpop.trf.xlu0
        %v372 = vpop.trf.xlu0
        %v373 = vpop.trf.xlu0
        %v374 = vpop.trf.xlu0
        %v375 = vpop.trf.xlu0
        %v376 = vpop.trf.xlu0
        %v377 = vpop.trf.xlu0
        %v378 = vpop.trf.xlu0
        %379 = vxpose.xlu0.b32.start [1/16] %v290, 128
        %380 = vxpose.xlu0.b32.cont [2/16] %v291, 128
        %381 = vxpose.xlu0.b32.cont [3/16] %v292, 128
        %382 = vxpose.xlu0.b32.cont [4/16] %v293, 128
        %383 = vxpose.xlu0.b32.cont [5/16] 0.0, 128
        %384 = vxpose.xlu0.b32.cont [6/16] 0.0, 128
        %385 = vxpose.xlu0.b32.cont [7/16] 0.0, 128
        %386 = vxpose.xlu0.b32.cont [8/16] 0.0, 128
        %387 = vxpose.xlu0.b32.cont [9/16] 0.0, 128
        %388 = vxpose.xlu0.b32.cont [10/16] 0.0, 128
        %389 = vxpose.xlu0.b32.cont [11/16] 0.0, 128
        %390 = vxpose.xlu0.b32.cont [12/16] 0.0, 128
        %391 = vxpose.xlu0.b32.cont [13/16] 0.0, 128
        %392 = vxpose.xlu0.b32.cont [14/16] 0.0, 128
        %393 = vxpose.xlu0.b32.cont [15/16] 0.0, 128
        %394 = vxpose.xlu0.b32.end [16/16] 0.0, 128
        %v395 = vpop.trf.xlu0
        %v396 = vpop.trf.xlu0
        %v397 = vpop.trf.xlu0
        %v398 = vpop.trf.xlu0
        %v399 = vpop.trf.xlu0
        %v400 = vpop.trf.xlu0
        %v401 = vpop.trf.xlu0
        %v402 = vpop.trf.xlu0
        %v403 = vpop.trf.xlu0
        %v404 = vpop.trf.xlu0
        %v405 = vpop.trf.xlu0
        %v406 = vpop.trf.xlu0
        %v407 = vpop.trf.xlu0
        %v408 = vpop.trf.xlu0
        %v409 = vpop.trf.xlu0
        %v410 = vpop.trf.xlu0
        %411 = vxpose.xlu0.b32.start [1/16] %v294, 128
        %412 = vxpose.xlu0.b32.cont [2/16] %v295, 128
        %413 = vxpose.xlu0.b32.cont [3/16] %v296, 128
        %414 = vxpose.xlu0.b32.cont [4/16] %v297, 128
        %415 = vxpose.xlu0.b32.cont [5/16] 0.0, 128
        %416 = vxpose.xlu0.b32.cont [6/16] 0.0, 128
        %417 = vxpose.xlu0.b32.cont [7/16] 0.0, 128
        %418 = vxpose.xlu0.b32.cont [8/16] 0.0, 128
        %419 = vxpose.xlu0.b32.cont [9/16] 0.0, 128
        %420 = vxpose.xlu0.b32.cont [10/16] 0.0, 128
        %421 = vxpose.xlu0.b32.cont [11/16] 0.0, 128
        %422 = vxpose.xlu0.b32.cont [12/16] 0.0, 128
        %423 = vxpose.xlu0.b32.cont [13/16] 0.0, 128
        %424 = vxpose.xlu0.b32.cont [14/16] 0.0, 128
        %425 = vxpose.xlu0.b32.cont [15/16] 0.0, 128
        %426 = vxpose.xlu0.b32.end [16/16] 0.0, 128
        %v427 = vpop.trf.xlu0
        %v428 = vpop.trf.xlu0
        %v429 = vpop.trf.xlu0
        %v430 = vpop.trf.xlu0
        %v431 = vpop.trf.xlu0
        %v432 = vpop.trf.xlu0
        %v433 = vpop.trf.xlu0
        %v434 = vpop.trf.xlu0
        %v435 = vpop.trf.xlu0
        %v436 = vpop.trf.xlu0
        %v437 = vpop.trf.xlu0
        %v438 = vpop.trf.xlu0
        %v439 = vpop.trf.xlu0
        %v440 = vpop.trf.xlu0
        %v441 = vpop.trf.xlu0
        %v442 = vpop.trf.xlu0
        %443 = vxpose.xlu0.b32.start [1/16] %v298, 128
        %444 = vxpose.xlu0.b32.cont [2/16] %v299, 128
        %445 = vxpose.xlu0.b32.cont [3/16] %v300, 128
        %446 = vxpose.xlu0.b32.cont [4/16] %v301, 128
        %447 = vxpose.xlu0.b32.cont [5/16] 0.0, 128
        %448 = vxpose.xlu0.b32.cont [6/16] 0.0, 128
        %449 = vxpose.xlu0.b32.cont [7/16] 0.0, 128
        %450 = vxpose.xlu0.b32.cont [8/16] 0.0, 128
        %451 = vxpose.xlu0.b32.cont [9/16] 0.0, 128
        %452 = vxpose.xlu0.b32.cont [10/16] 0.0, 128
        %453 = vxpose.xlu0.b32.cont [11/16] 0.0, 128
        %454 = vxpose.xlu0.b32.cont [12/16] 0.0, 128
        %455 = vxpose.xlu0.b32.cont [13/16] 0.0, 128
        %456 = vxpose.xlu0.b32.cont [14/16] 0.0, 128
        %457 = vxpose.xlu0.b32.cont [15/16] 0.0, 128
        %458 = vxpose.xlu0.b32.end [16/16] 0.0, 128
        %v459 = vpop.trf.xlu0
        %v460 = vpop.trf.xlu0
        %v461 = vpop.trf.xlu0
        %v462 = vpop.trf.xlu0
        %v463 = vpop.trf.xlu0
        %v464 = vpop.trf.xlu0
        %v465 = vpop.trf.xlu0
        %v466 = vpop.trf.xlu0
        %v467 = vpop.trf.xlu0
        %v468 = vpop.trf.xlu0
        %v469 = vpop.trf.xlu0
        %v470 = vpop.trf.xlu0
        %v471 = vpop.trf.xlu0
        %v472 = vpop.trf.xlu0
        %v473 = vpop.trf.xlu0
        %v474 = vpop.trf.xlu0
        %475 = vxpose.xlu0.b32.start [1/16] %v302, 128
        %476 = vxpose.xlu0.b32.cont [2/16] %v303, 128
        %477 = vxpose.xlu0.b32.cont [3/16] %v304, 128
        %478 = vxpose.xlu0.b32.cont [4/16] %v305, 128
        %479 = vxpose.xlu0.b32.cont [5/16] 0.0, 128
        %480 = vxpose.xlu0.b32.cont [6/16] 0.0, 128
        %481 = vxpose.xlu0.b32.cont [7/16] 0.0, 128
        %482 = vxpose.xlu0.b32.cont [8/16] 0.0, 128
        %483 = vxpose.xlu0.b32.cont [9/16] 0.0, 128
        %484 = vxpose.xlu0.b32.cont [10/16] 0.0, 128
        %485 = vxpose.xlu0.b32.cont [11/16] 0.0, 128
        %486 = vxpose.xlu0.b32.cont [12/16] 0.0, 128
        %487 = vxpose.xlu0.b32.cont [13/16] 0.0, 128
        %488 = vxpose.xlu0.b32.cont [14/16] 0.0, 128
        %489 = vxpose.xlu0.b32.cont [15/16] 0.0, 128
        %490 = vxpose.xlu0.b32.end [16/16] 0.0, 128
        %v491 = vpop.trf.xlu0
        %v492 = vpop.trf.xlu0
        %v493 = vpop.trf.xlu0
        %v494 = vpop.trf.xlu0
        %v495 = vpop.trf.xlu0
        %v496 = vpop.trf.xlu0
        %v497 = vpop.trf.xlu0
        %v498 = vpop.trf.xlu0
        %v499 = vpop.trf.xlu0
        %v500 = vpop.trf.xlu0
        %v501 = vpop.trf.xlu0
        %v502 = vpop.trf.xlu0
        %v503 = vpop.trf.xlu0
        %v504 = vpop.trf.xlu0
        %v505 = vpop.trf.xlu0
        %v506 = vpop.trf.xlu0
        %507 = vxpose.xlu0.b32.start [1/16] %v306, 128
        %508 = vxpose.xlu0.b32.cont [2/16] %v307, 128
        %509 = vxpose.xlu0.b32.cont [3/16] %v308, 128
        %510 = vxpose.xlu0.b32.cont [4/16] %v309, 128
        %511 = vxpose.xlu0.b32.cont [5/16] 0.0, 128
        %512 = vxpose.xlu0.b32.cont [6/16] 0.0, 128
        %513 = vxpose.xlu0.b32.cont [7/16] 0.0, 128
        %514 = vxpose.xlu0.b32.cont [8/16] 0.0, 128
        %515 = vxpose.xlu0.b32.cont [9/16] 0.0, 128
        %516 = vxpose.xlu0.b32.cont [10/16] 0.0, 128
        %517 = vxpose.xlu0.b32.cont [11/16] 0.0, 128
        %518 = vxpose.xlu0.b32.cont [12/16] 0.0, 128
        %519 = vxpose.xlu0.b32.cont [13/16] 0.0, 128
        %520 = vxpose.xlu0.b32.cont [14/16] 0.0, 128
        %521 = vxpose.xlu0.b32.cont [15/16] 0.0, 128
        %522 = vxpose.xlu0.b32.end [16/16] 0.0, 128
        %v523 = vpop.trf.xlu0
        %v524 = vpop.trf.xlu0
        %v525 = vpop.trf.xlu0
        %v526 = vpop.trf.xlu0
        %v527 = vpop.trf.xlu0
        %v528 = vpop.trf.xlu0
        %v529 = vpop.trf.xlu0
        %v530 = vpop.trf.xlu0
        %v531 = vpop.trf.xlu0
        %v532 = vpop.trf.xlu0
        %v533 = vpop.trf.xlu0
        %v534 = vpop.trf.xlu0
        %v535 = vpop.trf.xlu0
        %v536 = vpop.trf.xlu0
        %v537 = vpop.trf.xlu0
        %v538 = vpop.trf.xlu0
        %539 = vxpose.xlu0.b32.start [1/16] %v310, 128
        %540 = vxpose.xlu0.b32.cont [2/16] %v311, 128
        %541 = vxpose.xlu0.b32.cont [3/16] %v312, 128
        %542 = vxpose.xlu0.b32.cont [4/16] %v313, 128
        %543 = vxpose.xlu0.b32.cont [5/16] 0.0, 128
        %544 = vxpose.xlu0.b32.cont [6/16] 0.0, 128
        %545 = vxpose.xlu0.b32.cont [7/16] 0.0, 128
        %546 = vxpose.xlu0.b32.cont [8/16] 0.0, 128
        %547 = vxpose.xlu0.b32.cont [9/16] 0.0, 128
        %548 = vxpose.xlu0.b32.cont [10/16] 0.0, 128
        %549 = vxpose.xlu0.b32.cont [11/16] 0.0, 128
        %550 = vxpose.xlu0.b32.cont [12/16] 0.0, 128
        %551 = vxpose.xlu0.b32.cont [13/16] 0.0, 128
        %552 = vxpose.xlu0.b32.cont [14/16] 0.0, 128
        %553 = vxpose.xlu0.b32.cont [15/16] 0.0, 128
        %554 = vxpose.xlu0.b32.end [16/16] 0.0, 128
        %v555 = vpop.trf.xlu0
        %v556 = vpop.trf.xlu0
        %v557 = vpop.trf.xlu0
        %v558 = vpop.trf.xlu0
        %v559 = vpop.trf.xlu0
        %v560 = vpop.trf.xlu0
        %v561 = vpop.trf.xlu0
        %v562 = vpop.trf.xlu0
        %v563 = vpop.trf.xlu0
        %v564 = vpop.trf.xlu0
        %v565 = vpop.trf.xlu0
        %v566 = vpop.trf.xlu0
        %v567 = vpop.trf.xlu0
        %v568 = vpop.trf.xlu0
        %v569 = vpop.trf.xlu0
        %v570 = vpop.trf.xlu0
        %vm571 = vcmask 261120
        %v573 = vsel %vm571, %v331, 0
        %v576 = vsel %vm571, %v332, 0
        %v579 = vsel %vm571, %v363, 0
        %v582 = vsel %vm571, %v364, 0
        %v585 = vsel %vm571, %v395, 0
        %v588 = vsel %vm571, %v396, 0
        %v591 = vsel %vm571, %v427, 0
        %v594 = vsel %vm571, %v428, 0
        %v597 = vsel %vm571, %v459, 0
        %v600 = vsel %vm571, %v460, 0
        %v603 = vsel %vm571, %v491, 0
        %v606 = vsel %vm571, %v492, 0
        %v609 = vsel %vm571, %v523, 0
        %v612 = vsel %vm571, %v524, 0
        %v615 = vsel %vm571, %v555, 0
        %v618 = vsel %vm571, %v556, 0
        %620 = vmatprep.subr.mxu0 0.0
        %621 = vmatpush1.msra.mxu0 0.0
        %622 = vmatprep.subr.mxu0 0.0
        %623 = vmatpush1.msra.mxu0 0.0
        %624 = vmatprep.subr.mxu0 0.0
        %625 = vmatpush1.msra.mxu0 0.0
        %626 = vmatprep.subr.mxu0 0.0
        %627 = vmatpush1.msra.mxu0 0.0
        %628 = vmatprep.subr.mxu0 0.0
        %629 = vmatpush1.msra.mxu0 0.0
        %630 = vmatprep.subr.mxu0 0.0
        %631 = vmatpush1.msra.mxu0 0.0
        %632 = vmatprep.subr.mxu0 0.0
        %633 = vmatpush1.msra.mxu0 0.0
        %634 = vmatprep.subr.mxu0 0.0
        %635 = vmatpush1.msra.mxu0 0.0
        %636 = vmatprep.subr.mxu0 0.0
        %637 = vmatpush1.msra.mxu0 0.0
        %638 = vmatprep.subr.mxu0 0.0
        %639 = vmatpush1.msra.mxu0 0.0
        %640 = vmatprep.subr.mxu0 0.0
        %641 = vmatpush1.msra.mxu0 0.0
        %642 = vmatprep.subr.mxu0 0.0
        %643 = vmatpush1.msra.mxu0 0.0
        %644 = vmatprep.subr.mxu0 0.0
        %645 = vmatpush1.msra.mxu0 %v275
        %646 = vmatprep.subr.mxu0 0.0
        %647 = vmatpush1.msra.mxu0 %v274
        %648 = vmatprep.subr.mxu0 0.0
        %649 = vmatpush1.msra.mxu0 %v273
        %650 = vmatprep.subr.mxu0 0.0
        %651 = vmatpush1.msra.mxu0 %v272
        %652 = vmatprep.subr.mxu0 0.0
        %653 = vmatpush2.msra.mxu0 0.0
        %654 = vmatprep.subr.mxu0 0.0
        %655 = vmatpush2.msra.mxu0 0.0
        %656 = vmatprep.subr.mxu0 0.0
        %657 = vmatpush2.msra.mxu0 0.0
        %658 = vmatprep.subr.mxu0 0.0
        %659 = vmatpush2.msra.mxu0 0.0
        %660 = vmatprep.subr.mxu0 0.0
        %661 = vmatpush2.msra.mxu0 0.0
        %662 = vmatprep.subr.mxu0 0.0
        %663 = vmatpush2.msra.mxu0 0.0
        %664 = vmatprep.subr.mxu0 0.0
        %665 = vmatpush2.msra.mxu0 0.0
        %666 = vmatprep.subr.mxu0 0.0
        %667 = vmatpush2.msra.mxu0 0.0
        %668 = vmatprep.subr.mxu0 0.0
        %669 = vmatpush2.msra.mxu0 0.0
        %670 = vmatprep.subr.mxu0 0.0
        %671 = vmatpush2.msra.mxu0 0.0
        %672 = vmatprep.subr.mxu0 0.0
        %673 = vmatpush2.msra.mxu0 0.0
        %674 = vmatprep.subr.mxu0 0.0
        %675 = vmatpush2.msra.mxu0 0.0
        %676 = vmatprep.subr.mxu0 0.0
        %677 = vmatpush2.msra.mxu0 0.0
        %678 = vmatprep.subr.mxu0 0.0
        %679 = vmatpush2.msra.mxu0 0.0
        %680 = vmatprep.subr.mxu0 0.0
        %681 = vmatpush2.msra.mxu0 0.0
        %682 = vmatprep.subr.mxu0 0.0
        %683 = vmatpush2.msra.mxu0 0.0
        %684 = vmatprep.mubr.f32.mxu0 0.0
        %685 = vmatmul.mubr.f32.gmra.mxu0 %v573
        %v686 = vpop.f32.mrf.mxu0
        %v687 = vadd.f32 0.0, %v686
        %v688 = vpop.f32.mrf.mxu0
        %689 = vmatprep.mubr.f32.mxu0 0.0
        %690 = vmatmul.mubr.f32.gmra.mxu0 %v576
        %v691 = vpop.f32.mrf.mxu0
        %v692 = vadd.f32 0.0, %v691
        %v693 = vpop.f32.mrf.mxu0
        %694 = vmatprep.mubr.f32.mxu0 0.0
        %695 = vmatmul.mubr.f32.gmra.mxu0 %v579
        %v696 = vpop.f32.mrf.mxu0
        %v697 = vadd.f32 0.0, %v696
        %v698 = vpop.f32.mrf.mxu0
        %699 = vmatprep.mubr.f32.mxu0 0.0
        %700 = vmatmul.mubr.f32.gmra.mxu0 %v582
        %v701 = vpop.f32.mrf.mxu0
        %v702 = vadd.f32 0.0, %v701
        %v703 = vpop.f32.mrf.mxu0
        %704 = vmatprep.mubr.f32.mxu0 0.0
        %705 = vmatmul.mubr.f32.gmra.mxu0 %v585
        %v706 = vpop.f32.mrf.mxu0
        %v707 = vadd.f32 0.0, %v706
        %v708 = vpop.f32.mrf.mxu0
        %709 = vmatprep.mubr.f32.mxu0 0.0
        %710 = vmatmul.mubr.f32.gmra.mxu0 %v588
        %v711 = vpop.f32.mrf.mxu0
        %v712 = vadd.f32 0.0, %v711
        %v713 = vpop.f32.mrf.mxu0
        %714 = vmatprep.mubr.f32.mxu0 0.0
        %715 = vmatmul.mubr.f32.gmra.mxu0 %v591
        %v716 = vpop.f32.mrf.mxu0
        %v717 = vadd.f32 0.0, %v716
        %v718 = vpop.f32.mrf.mxu0
        %719 = vmatprep.mubr.f32.mxu0 0.0
        %720 = vmatmul.mubr.f32.gmra.mxu0 %v594
        %v721 = vpop.f32.mrf.mxu0
        %v722 = vadd.f32 0.0, %v721
        %v723 = vpop.f32.mrf.mxu0
        %724 = vmatprep.mubr.f32.mxu0 0.0
        %725 = vmatmul.mubr.f32.gmra.mxu0 %v597
        %v726 = vpop.f32.mrf.mxu0
        %v727 = vadd.f32 0.0, %v726
        %v728 = vpop.f32.mrf.mxu0
        %729 = vmatprep.mubr.f32.mxu0 0.0
        %730 = vmatmul.mubr.f32.gmra.mxu0 %v600
        %v731 = vpop.f32.mrf.mxu0
        %v732 = vadd.f32 0.0, %v731
        %v733 = vpop.f32.mrf.mxu0
        %734 = vmatprep.mubr.f32.mxu0 0.0
        %735 = vmatmul.mubr.f32.gmra.mxu0 %v603
        %v736 = vpop.f32.mrf.mxu0
        %v737 = vadd.f32 0.0, %v736
        %v738 = vpop.f32.mrf.mxu0
        %739 = vmatprep.mubr.f32.mxu0 0.0
        %740 = vmatmul.mubr.f32.gmra.mxu0 %v606
        %v741 = vpop.f32.mrf.mxu0
        %v742 = vadd.f32 0.0, %v741
        %v743 = vpop.f32.mrf.mxu0
        %744 = vmatprep.mubr.f32.mxu0 0.0
        %745 = vmatmul.mubr.f32.gmra.mxu0 %v609
        %v746 = vpop.f32.mrf.mxu0
        %v747 = vadd.f32 0.0, %v746
        %v748 = vpop.f32.mrf.mxu0
        %749 = vmatprep.mubr.f32.mxu0 0.0
        %750 = vmatmul.mubr.f32.gmra.mxu0 %v612
        %v751 = vpop.f32.mrf.mxu0
        %v752 = vadd.f32 0.0, %v751
        %v753 = vpop.f32.mrf.mxu0
        %754 = vmatprep.mubr.f32.mxu0 0.0
        %755 = vmatmul.mubr.f32.gmra.mxu0 %v615
        %v756 = vpop.f32.mrf.mxu0
        %v757 = vadd.f32 0.0, %v756
        %v758 = vpop.f32.mrf.mxu0
        %759 = vmatprep.mubr.f32.mxu0 0.0
        %760 = vmatmul.mubr.f32.gmra.mxu0 %v618
        %v761 = vpop.f32.mrf.mxu0
        %v762 = vadd.f32 0.0, %v761
        %v763 = vpop.f32.mrf.mxu0
        %764 = vdwg.mxu0
        %v766 = vlaneseq
        %v767 = vshrl.u32 %v766, 7
        %v768 = vsub.s32 0, %v767
        %v769 = vrot.slane %v280, %v768
        %v772 = vsel %vm571, %v314, 0
        %774 = vmatprep.subr.mxu0 0.0
        %775 = vmatpush1.msra.mxu0 0.0
        %776 = vmatprep.subr.mxu0 0.0
        %777 = vmatpush1.msra.mxu0 0.0
        %778 = vmatprep.subr.mxu0 0.0
        %779 = vmatpush1.msra.mxu0 0.0
        %780 = vmatprep.subr.mxu0 0.0
        %781 = vmatpush1.msra.mxu0 0.0
        %782 = vmatprep.subr.mxu0 0.0
        %783 = vmatpush1.msra.mxu0 0.0
        %784 = vmatprep.subr.mxu0 0.0
        %785 = vmatpush1.msra.mxu0 0.0
        %786 = vmatprep.subr.mxu0 0.0
        %787 = vmatpush1.msra.mxu0 0.0
        %788 = vmatprep.subr.mxu0 0.0
        %789 = vmatpush1.msra.mxu0 0.0
        %790 = vmatprep.subr.mxu0 0.0
        %791 = vmatpush1.msra.mxu0 0.0
        %792 = vmatprep.subr.mxu0 0.0
        %793 = vmatpush1.msra.mxu0 0.0
        %794 = vmatprep.subr.mxu0 0.0
        %795 = vmatpush1.msra.mxu0 0.0
        %796 = vmatprep.subr.mxu0 0.0
        %797 = vmatpush1.msra.mxu0 0.0
        %798 = vmatprep.subr.mxu0 0.0
        %799 = vmatpush1.msra.mxu0 %v279
        %800 = vmatprep.subr.mxu0 0.0
        %801 = vmatpush1.msra.mxu0 %v278
        %802 = vmatprep.subr.mxu0 0.0
        %803 = vmatpush1.msra.mxu0 %v277
        %804 = vmatprep.subr.mxu0 0.0
        %805 = vmatpush1.msra.mxu0 %v276
        %806 = vmatprep.subr.mxu0 0.0
        %807 = vmatpush2.msra.mxu0 0.0
        %808 = vmatprep.subr.mxu0 0.0
        %809 = vmatpush2.msra.mxu0 0.0
        %810 = vmatprep.subr.mxu0 0.0
        %811 = vmatpush2.msra.mxu0 0.0
        %812 = vmatprep.subr.mxu0 0.0
        %813 = vmatpush2.msra.mxu0 0.0
        %814 = vmatprep.subr.mxu0 0.0
        %815 = vmatpush2.msra.mxu0 0.0
        %816 = vmatprep.subr.mxu0 0.0
        %817 = vmatpush2.msra.mxu0 0.0
        %818 = vmatprep.subr.mxu0 0.0
        %819 = vmatpush2.msra.mxu0 0.0
        %820 = vmatprep.subr.mxu0 0.0
        %821 = vmatpush2.msra.mxu0 0.0
        %822 = vmatprep.subr.mxu0 0.0
        %823 = vmatpush2.msra.mxu0 0.0
        %824 = vmatprep.subr.mxu0 0.0
        %825 = vmatpush2.msra.mxu0 0.0
        %826 = vmatprep.subr.mxu0 0.0
        %827 = vmatpush2.msra.mxu0 0.0
        %828 = vmatprep.subr.mxu0 0.0
        %829 = vmatpush2.msra.mxu0 0.0
        %830 = vmatprep.subr.mxu0 0.0
        %831 = vmatpush2.msra.mxu0 0.0
        %832 = vmatprep.subr.mxu0 0.0
        %833 = vmatpush2.msra.mxu0 0.0
        %834 = vmatprep.subr.mxu0 0.0
        %835 = vmatpush2.msra.mxu0 0.0
        %836 = vmatprep.subr.mxu0 0.0
        %837 = vmatpush2.msra.mxu0 0.0
        %838 = vmatprep.mubr.f32.mxu0 0.0
        %839 = vmatmul.mubr.f32.gmra.mxu0 %v772
        %v840 = vpop.f32.mrf.mxu0
        %v841 = vadd.f32 %v769, %v840
        %v842 = vpop.f32.mrf.mxu0
        %843 = vdwg.mxu0
        %v845 = vcombine.high %v841, %v841
        %v847 = vunpack.c.l.s4 1966171168
        %v848 = vunpack.c.0.s8 %v847
        %v849 = vlaneseq
        %v850 = vshrl.u32 %v849, 7
        %v851 = vsub.s32 %v848, %v850
        %v852 = vrot.slane %v841, %v851
        %v854 = vunpack.c.l.s4 1966171168
        %v855 = vunpack.c.0.s8 %v854
        %v856 = vlaneseq
        %v857 = vshrl.u32 %v856, 7
        %v858 = vsub.s32 %v855, %v857
        %v859 = vrot.slane %v845, %v858
        %v860 = vcombine.high %v852, %v852
        %v861 = vcombine.high %v859, %v859
        %v863 = vunpack.c.l.s4 1966171168
        %v864 = vunpack.c.0.s8 %v863
        %v865 = vlaneseq
        %v866 = vshrl.u32 %v865, 7
        %v867 = vsub.s32 %v864, %v866
        %v868 = vrot.slane %v852, %v867
        %v870 = vunpack.c.l.s4 1966171168
        %v871 = vunpack.c.0.s8 %v870
        %v872 = vlaneseq
        %v873 = vshrl.u32 %v872, 7
        %v874 = vsub.s32 %v871, %v873
        %v875 = vrot.slane %v859, %v874
        %v877 = vunpack.c.l.s4 1966171168
        %v878 = vunpack.c.0.s8 %v877
        %v879 = vlaneseq
        %v880 = vshrl.u32 %v879, 7
        %v881 = vsub.s32 %v878, %v880
        %v882 = vrot.slane %v860, %v881
        %v884 = vunpack.c.l.s4 1966171168
        %v885 = vunpack.c.0.s8 %v884
        %v886 = vlaneseq
        %v887 = vshrl.u32 %v886, 7
        %v888 = vsub.s32 %v885, %v887
        %v889 = vrot.slane %v861, %v888
        %v890 = vcombine.high %v868, %v868
        %v891 = vcombine.high %v875, %v875
        %v892 = vcombine.high %v882, %v882
        %v893 = vcombine.high %v889, %v889
        %v894 = vlaneseq
        %v895 = vshrl.u32 %v894, 7
        %v896 = vsub.s32 0, %v895
        %v897 = vrot.slane %v868, %v896
        %v898 = vlaneseq
        %v899 = vshrl.u32 %v898, 7
        %v900 = vsub.s32 0, %v899
        %v901 = vrot.slane %v882, %v900
        %v902 = vlaneseq
        %v903 = vshrl.u32 %v902, 7
        %v904 = vsub.s32 0, %v903
        %v905 = vrot.slane %v890, %v904
        %v906 = vlaneseq
        %v907 = vshrl.u32 %v906, 7
        %v908 = vsub.s32 0, %v907
        %v909 = vrot.slane %v892, %v908
        %v910 = vlaneseq
        %v911 = vshrl.u32 %v910, 7
        %v912 = vsub.s32 0, %v911
        %v913 = vrot.slane %v875, %v912
        %v914 = vlaneseq
        %v915 = vshrl.u32 %v914, 7
        %v916 = vsub.s32 0, %v915
        %v917 = vrot.slane %v889, %v916
        %v918 = vlaneseq
        %v919 = vshrl.u32 %v918, 7
        %v920 = vsub.s32 0, %v919
        %v921 = vrot.slane %v891, %v920
        %v922 = vlaneseq
        %v923 = vshrl.u32 %v922, 7
        %v924 = vsub.s32 0, %v923
        %v925 = vrot.slane %v893, %v924
        %v934 = vadd.f32 %v687, %v897
        %v935 = vadd.f32 %v692, %v897
        %v936 = vadd.f32 %v697, %v901
        %v937 = vadd.f32 %v702, %v901
        %v938 = vadd.f32 %v707, %v905
        %v939 = vadd.f32 %v712, %v905
        %v940 = vadd.f32 %v717, %v909
        %v941 = vadd.f32 %v722, %v909
        %v942 = vadd.f32 %v727, %v913
        %v943 = vadd.f32 %v732, %v913
        %v944 = vadd.f32 %v737, %v917
        %v945 = vadd.f32 %v742, %v917
        %v946 = vadd.f32 %v747, %v921
        %v947 = vadd.f32 %v752, %v921
        %v948 = vadd.f32 %v757, %v925
        %v949 = vadd.f32 %v762, %v925
        %v950 = vmax.f32 %v934, 0.0
        %v951 = vmax.f32 %v935, 0.0
        %v952 = vmax.f32 %v936, 0.0
        %v953 = vmax.f32 %v937, 0.0
        %v954 = vmax.f32 %v938, 0.0
        %v955 = vmax.f32 %v939, 0.0
        %v956 = vmax.f32 %v940, 0.0
        %v957 = vmax.f32 %v941, 0.0
        %v958 = vmax.f32 %v942, 0.0
        %v959 = vmax.f32 %v943, 0.0
        %v960 = vmax.f32 %v944, 0.0
        %v961 = vmax.f32 %v945, 0.0
        %v962 = vmax.f32 %v946, 0.0
        %v963 = vmax.f32 %v947, 0.0
        %v964 = vmax.f32 %v948, 0.0
        %v965 = vmax.f32 %v949, 0.0
        %v967 = vlaneseq
        %v968 = vshrl.u32 %v967, 7
        %v969 = vsub.s32 0, %v968
        %v970 = vrot.slane %v281, %v969
        %v972 = vmul.f32 %v950, %v970
        %v973 = vmul.f32 %v951, %v970
        %v974 = vmul.f32 %v952, %v970
        %v975 = vmul.f32 %v953, %v970
        %v976 = vmul.f32 %v954, %v970
        %v977 = vmul.f32 %v955, %v970
        %v978 = vmul.f32 %v956, %v970
        %v979 = vmul.f32 %v957, %v970
        %v980 = vmul.f32 %v958, %v970
        %v981 = vmul.f32 %v959, %v970
        %v982 = vmul.f32 %v960, %v970
        %v983 = vmul.f32 %v961, %v970
        %v984 = vmul.f32 %v962, %v970
        %v985 = vmul.f32 %v963, %v970
        %v986 = vmul.f32 %v964, %v970
        %v987 = vmul.f32 %v965, %v970
        %v988 = vsel %vm571, %v972, 0.0
        %989 = vadd.xlane.f32.xlu0 %v988
        %v990 = vpop.xlane.xlu0 %989
        %v991 = vsel %vm571, %v973, 0.0
        %992 = vadd.xlane.f32.xlu0 %v991
        %v993 = vpop.xlane.xlu0 %992
        %v994 = vsel %vm571, %v974, 0.0
        %995 = vadd.xlane.f32.xlu0 %v994
        %v996 = vpop.xlane.xlu0 %995
        %v997 = vsel %vm571, %v975, 0.0
        %998 = vadd.xlane.f32.xlu0 %v997
        %v999 = vpop.xlane.xlu0 %998
        %v1000 = vsel %vm571, %v976, 0.0
        %1001 = vadd.xlane.f32.xlu0 %v1000
        %v1002 = vpop.xlane.xlu0 %1001
        %v1003 = vsel %vm571, %v977, 0.0
        %1004 = vadd.xlane.f32.xlu0 %v1003
        %v1005 = vpop.xlane.xlu0 %1004
        %v1006 = vsel %vm571, %v978, 0.0
        %1007 = vadd.xlane.f32.xlu0 %v1006
        %v1008 = vpop.xlane.xlu0 %1007
        %v1009 = vsel %vm571, %v979, 0.0
        %1010 = vadd.xlane.f32.xlu0 %v1009
        %v1011 = vpop.xlane.xlu0 %1010
        %v1012 = vsel %vm571, %v980, 0.0
        %1013 = vadd.xlane.f32.xlu0 %v1012
        %v1014 = vpop.xlane.xlu0 %1013
        %v1015 = vsel %vm571, %v981, 0.0
        %1016 = vadd.xlane.f32.xlu0 %v1015
        %v1017 = vpop.xlane.xlu0 %1016
        %v1018 = vsel %vm571, %v982, 0.0
        %1019 = vadd.xlane.f32.xlu0 %v1018
        %v1020 = vpop.xlane.xlu0 %1019
        %v1021 = vsel %vm571, %v983, 0.0
        %1022 = vadd.xlane.f32.xlu0 %v1021
        %v1023 = vpop.xlane.xlu0 %1022
        %v1024 = vsel %vm571, %v984, 0.0
        %1025 = vadd.xlane.f32.xlu0 %v1024
        %v1026 = vpop.xlane.xlu0 %1025
        %v1027 = vsel %vm571, %v985, 0.0
        %1028 = vadd.xlane.f32.xlu0 %v1027
        %v1029 = vpop.xlane.xlu0 %1028
        %v1030 = vsel %vm571, %v986, 0.0
        %1031 = vadd.xlane.f32.xlu0 %v1030
        %v1032 = vpop.xlane.xlu0 %1031
        %v1033 = vsel %vm571, %v987, 0.0
        %1034 = vadd.xlane.f32.xlu0 %v1033
        %v1035 = vpop.xlane.xlu0 %1034
        %v1052 = vlaneseq
        %v1053 = vand.u32 %v1052, 127
        %v1054 = vlaneseq
        %v1055 = vshrl.u32 %v1054, 7
        %v1056 = vsub.s32 %v1053, %v1055
        %v1057 = vrot.slane %v990, %v1056
        %v1058 = vadd.s32 %v1053, 4294967288
        %v1059 = vlaneseq
        %v1060 = vshrl.u32 %v1059, 7
        %v1061 = vsub.s32 %v1058, %v1060
        %v1062 = vrot.slane %v993, %v1061
        %vm1063 = vcmask 130112
        %v1064 = vsel %vm1063, %v1062, %v1057
        %v1065 = vlaneseq
        %v1066 = vshrl.u32 %v1065, 7
        %v1067 = vsub.s32 %v1053, %v1066
        %v1068 = vrot.slane %v996, %v1067
        %v1069 = vlaneseq
        %v1070 = vshrl.u32 %v1069, 7
        %v1071 = vsub.s32 %v1058, %v1070
        %v1072 = vrot.slane %v999, %v1071
        %v1073 = vsel %vm1063, %v1072, %v1068
        %v1074 = vlaneseq
        %v1075 = vshrl.u32 %v1074, 7
        %v1076 = vsub.s32 %v1053, %v1075
        %v1077 = vrot.slane %v1002, %v1076
        %v1078 = vlaneseq
        %v1079 = vshrl.u32 %v1078, 7
        %v1080 = vsub.s32 %v1058, %v1079
        %v1081 = vrot.slane %v1005, %v1080
        %v1082 = vsel %vm1063, %v1081, %v1077
        %v1083 = vlaneseq
        %v1084 = vshrl.u32 %v1083, 7
        %v1085 = vsub.s32 %v1053, %v1084
        %v1086 = vrot.slane %v1008, %v1085
        %v1087 = vlaneseq
        %v1088 = vshrl.u32 %v1087, 7
        %v1089 = vsub.s32 %v1058, %v1088
        %v1090 = vrot.slane %v1011, %v1089
        %v1091 = vsel %vm1063, %v1090, %v1086
        %v1092 = vlaneseq
        %v1093 = vshrl.u32 %v1092, 7
        %v1094 = vsub.s32 %v1053, %v1093
        %v1095 = vrot.slane %v1014, %v1094
        %v1096 = vlaneseq
        %v1097 = vshrl.u32 %v1096, 7
        %v1098 = vsub.s32 %v1058, %v1097
        %v1099 = vrot.slane %v1017, %v1098
        %v1100 = vsel %vm1063, %v1099, %v1095
        %v1101 = vlaneseq
        %v1102 = vshrl.u32 %v1101, 7
        %v1103 = vsub.s32 %v1053, %v1102
        %v1104 = vrot.slane %v1020, %v1103
        %v1105 = vlaneseq
        %v1106 = vshrl.u32 %v1105, 7
        %v1107 = vsub.s32 %v1058, %v1106
        %v1108 = vrot.slane %v1023, %v1107
        %v1109 = vsel %vm1063, %v1108, %v1104
        %v1110 = vlaneseq
        %v1111 = vshrl.u32 %v1110, 7
        %v1112 = vsub.s32 %v1053, %v1111
        %v1113 = vrot.slane %v1026, %v1112
        %v1114 = vlaneseq
        %v1115 = vshrl.u32 %v1114, 7
        %v1116 = vsub.s32 %v1058, %v1115
        %v1117 = vrot.slane %v1029, %v1116
        %v1118 = vsel %vm1063, %v1117, %v1113
        %v1119 = vlaneseq
        %v1120 = vshrl.u32 %v1119, 7
        %v1121 = vsub.s32 %v1053, %v1120
        %v1122 = vrot.slane %v1032, %v1121
        %v1123 = vlaneseq
        %v1124 = vshrl.u32 %v1123, 7
        %v1125 = vsub.s32 %v1058, %v1124
        %v1126 = vrot.slane %v1035, %v1125
        %v1127 = vsel %vm1063, %v1126, %v1122
        %vm1128 = vcmask 1041409
        %v1129 = vsel %vm1128, %v1073, %v1064
        %vm1130 = vcmask 1042434
        %v1131 = vsel %vm1130, %v1082, %v1129
        %vm1132 = vcmask 1043459
        %v1133 = vsel %vm1132, %v1091, %v1131
        %vm1134 = vcmask 1044484
        %v1135 = vsel %vm1134, %v1100, %v1133
        %vm1136 = vcmask 1045509
        %v1137 = vsel %vm1136, %v1109, %v1135
        %vm1138 = vcmask 1046534
        %v1139 = vsel %vm1138, %v1118, %v1137
        %vm1140 = vcmask 1047559
        %v1141 = vsel %vm1140, %v1127, %v1139
        %vm1143 = vcmask 130048
        %v1144 = vsel %vm1143, %v1141, -inf
        %1145 = vmax.xlane.f32.xlu0 %v1144
        %v1146 = vpop.xlane.xlu0 %1145
        %v1148 = vlaneseq
        %v1149 = vshrl.u32 %v1148, 7
        %v1150 = vsub.s32 0, %v1149
        %v1151 = vrot.slane %v1146, %v1150
        %v1152 = vlaneseq
        %v1153 = vshrl.u32 %v1152, 7
        %v1154 = vsub.s32 1, %v1153
        %v1155 = vrot.slane %v1146, %v1154
        %v1156 = vlaneseq
        %v1157 = vshrl.u32 %v1156, 7
        %v1158 = vsub.s32 2, %v1157
        %v1159 = vrot.slane %v1146, %v1158
        %v1160 = vlaneseq
        %v1161 = vshrl.u32 %v1160, 7
        %v1162 = vsub.s32 3, %v1161
        %v1163 = vrot.slane %v1146, %v1162
        %v1164 = vlaneseq
        %v1165 = vshrl.u32 %v1164, 7
        %v1166 = vsub.s32 4, %v1165
        %v1167 = vrot.slane %v1146, %v1166
        %v1168 = vlaneseq
        %v1169 = vshrl.u32 %v1168, 7
        %v1170 = vsub.s32 5, %v1169
        %v1171 = vrot.slane %v1146, %v1170
        %v1172 = vlaneseq
        %v1173 = vshrl.u32 %v1172, 7
        %v1174 = vsub.s32 6, %v1173
        %v1175 = vrot.slane %v1146, %v1174
        %v1176 = vlaneseq
        %v1177 = vshrl.u32 %v1176, 7
        %v1178 = vsub.s32 7, %v1177
        %v1179 = vrot.slane %v1146, %v1178
        %v1188 = vsub.f32 %v990, %v1151
        %v1189 = vsub.f32 %v993, %v1151
        %v1190 = vsub.f32 %v996, %v1155
        %v1191 = vsub.f32 %v999, %v1155
        %v1192 = vsub.f32 %v1002, %v1159
        %v1193 = vsub.f32 %v1005, %v1159
        %v1194 = vsub.f32 %v1008, %v1163
        %v1195 = vsub.f32 %v1011, %v1163
        %v1196 = vsub.f32 %v1014, %v1167
        %v1197 = vsub.f32 %v1017, %v1167
        %v1198 = vsub.f32 %v1020, %v1171
        %v1199 = vsub.f32 %v1023, %v1171
        %v1200 = vsub.f32 %v1026, %v1175
        %v1201 = vsub.f32 %v1029, %v1175
        %v1202 = vsub.f32 %v1032, %v1179
        %v1203 = vsub.f32 %v1035, %v1179
        %v1204 = vmul.f32 %v1188, 1.442695
        %v1205 = vpow.pop %v1204
        %v1206 = vmul.f32 %v1189, 1.442695
        %v1207 = vpow.pop %v1206
        %v1208 = vmul.f32 %v1190, 1.442695
        %v1209 = vpow.pop %v1208
        %v1210 = vmul.f32 %v1191, 1.442695
        %v1211 = vpow.pop %v1210
        %v1212 = vmul.f32 %v1192, 1.442695
        %v1213 = vpow.pop %v1212
        %v1214 = vmul.f32 %v1193, 1.442695
        %v1215 = vpow.pop %v1214
        %v1216 = vmul.f32 %v1194, 1.442695
        %v1217 = vpow.pop %v1216
        %v1218 = vmul.f32 %v1195, 1.442695
        %v1219 = vpow.pop %v1218
        %v1220 = vmul.f32 %v1196, 1.442695
        %v1221 = vpow.pop %v1220
        %v1222 = vmul.f32 %v1197, 1.442695
        %v1223 = vpow.pop %v1222
        %v1224 = vmul.f32 %v1198, 1.442695
        %v1225 = vpow.pop %v1224
        %v1226 = vmul.f32 %v1199, 1.442695
        %v1227 = vpow.pop %v1226
        %v1228 = vmul.f32 %v1200, 1.442695
        %v1229 = vpow.pop %v1228
        %v1230 = vmul.f32 %v1201, 1.442695
        %v1231 = vpow.pop %v1230
        %v1232 = vmul.f32 %v1202, 1.442695
        %v1233 = vpow.pop %v1232
        %v1234 = vmul.f32 %v1203, 1.442695
        %v1235 = vpow.pop %v1234
        %1252 = vset.pattern.permute.xlu0 0
        %1253 = vperm.xlu0 %1252, %v1205
        %v1254 = vpop.permute.xlu0 %1253
        %1255 = vset.pattern.permute.xlu0 0
        %1256 = vperm.xlu0 %1255, %v1207
        %v1257 = vpop.permute.xlu0 %1256
        %1258 = vset.pattern.permute.xlu0 0
        %1259 = vperm.xlu0 %1258, %v1209
        %v1260 = vpop.permute.xlu0 %1259
        %1261 = vset.pattern.permute.xlu0 0
        %1262 = vperm.xlu0 %1261, %v1211
        %v1263 = vpop.permute.xlu0 %1262
        %1264 = vset.pattern.permute.xlu0 0
        %1265 = vperm.xlu0 %1264, %v1213
        %v1266 = vpop.permute.xlu0 %1265
        %1267 = vset.pattern.permute.xlu0 0
        %1268 = vperm.xlu0 %1267, %v1215
        %v1269 = vpop.permute.xlu0 %1268
        %1270 = vset.pattern.permute.xlu0 0
        %1271 = vperm.xlu0 %1270, %v1217
        %v1272 = vpop.permute.xlu0 %1271
        %1273 = vset.pattern.permute.xlu0 0
        %1274 = vperm.xlu0 %1273, %v1219
        %v1275 = vpop.permute.xlu0 %1274
        %1276 = vset.pattern.permute.xlu0 0
        %1277 = vperm.xlu0 %1276, %v1221
        %v1278 = vpop.permute.xlu0 %1277
        %1279 = vset.pattern.permute.xlu0 0
        %1280 = vperm.xlu0 %1279, %v1223
        %v1281 = vpop.permute.xlu0 %1280
        %1282 = vset.pattern.permute.xlu0 0
        %1283 = vperm.xlu0 %1282, %v1225
        %v1284 = vpop.permute.xlu0 %1283
        %1285 = vset.pattern.permute.xlu0 0
        %1286 = vperm.xlu0 %1285, %v1227
        %v1287 = vpop.permute.xlu0 %1286
        %1288 = vset.pattern.permute.xlu0 0
        %1289 = vperm.xlu0 %1288, %v1229
        %v1290 = vpop.permute.xlu0 %1289
        %1291 = vset.pattern.permute.xlu0 0
        %1292 = vperm.xlu0 %1291, %v1231
        %v1293 = vpop.permute.xlu0 %1292
        %1294 = vset.pattern.permute.xlu0 0
        %1295 = vperm.xlu0 %1294, %v1233
        %v1296 = vpop.permute.xlu0 %1295
        %1297 = vset.pattern.permute.xlu0 0
        %1298 = vperm.xlu0 %1297, %v1235
        %v1299 = vpop.permute.xlu0 %1298
        %v1300 = vlaneseq
        %v1301 = vshrl.u32 %v1300, 7
        %v1302 = vsub.s32 %v1053, %v1301
        %v1303 = vrot.slane %v1254, %v1302
        %v1304 = vlaneseq
        %v1305 = vshrl.u32 %v1304, 7
        %v1306 = vsub.s32 %v1058, %v1305
        %v1307 = vrot.slane %v1257, %v1306
        %v1308 = vsel %vm1063, %v1307, %v1303
        %v1309 = vlaneseq
        %v1310 = vshrl.u32 %v1309, 7
        %v1311 = vsub.s32 %v1053, %v1310
        %v1312 = vrot.slane %v1260, %v1311
        %v1313 = vlaneseq
        %v1314 = vshrl.u32 %v1313, 7
        %v1315 = vsub.s32 %v1058, %v1314
        %v1316 = vrot.slane %v1263, %v1315
        %v1317 = vsel %vm1063, %v1316, %v1312
        %v1318 = vlaneseq
        %v1319 = vshrl.u32 %v1318, 7
        %v1320 = vsub.s32 %v1053, %v1319
        %v1321 = vrot.slane %v1266, %v1320
        %v1322 = vlaneseq
        %v1323 = vshrl.u32 %v1322, 7
        %v1324 = vsub.s32 %v1058, %v1323
        %v1325 = vrot.slane %v1269, %v1324
        %v1326 = vsel %vm1063, %v1325, %v1321
        %v1327 = vlaneseq
        %v1328 = vshrl.u32 %v1327, 7
        %v1329 = vsub.s32 %v1053, %v1328
        %v1330 = vrot.slane %v1272, %v1329
        %v1331 = vlaneseq
        %v1332 = vshrl.u32 %v1331, 7
        %v1333 = vsub.s32 %v1058, %v1332
        %v1334 = vrot.slane %v1275, %v1333
        %v1335 = vsel %vm1063, %v1334, %v1330
        %v1336 = vlaneseq
        %v1337 = vshrl.u32 %v1336, 7
        %v1338 = vsub.s32 %v1053, %v1337
        %v1339 = vrot.slane %v1278, %v1338
        %v1340 = vlaneseq
        %v1341 = vshrl.u32 %v1340, 7
        %v1342 = vsub.s32 %v1058, %v1341
        %v1343 = vrot.slane %v1281, %v1342
        %v1344 = vsel %vm1063, %v1343, %v1339
        %v1345 = vlaneseq
        %v1346 = vshrl.u32 %v1345, 7
        %v1347 = vsub.s32 %v1053, %v1346
        %v1348 = vrot.slane %v1284, %v1347
        %v1349 = vlaneseq
        %v1350 = vshrl.u32 %v1349, 7
        %v1351 = vsub.s32 %v1058, %v1350
        %v1352 = vrot.slane %v1287, %v1351
        %v1353 = vsel %vm1063, %v1352, %v1348
        %v1354 = vlaneseq
        %v1355 = vshrl.u32 %v1354, 7
        %v1356 = vsub.s32 %v1053, %v1355
        %v1357 = vrot.slane %v1290, %v1356
        %v1358 = vlaneseq
        %v1359 = vshrl.u32 %v1358, 7
        %v1360 = vsub.s32 %v1058, %v1359
        %v1361 = vrot.slane %v1293, %v1360
        %v1362 = vsel %vm1063, %v1361, %v1357
        %v1363 = vlaneseq
        %v1364 = vshrl.u32 %v1363, 7
        %v1365 = vsub.s32 %v1053, %v1364
        %v1366 = vrot.slane %v1296, %v1365
        %v1367 = vlaneseq
        %v1368 = vshrl.u32 %v1367, 7
        %v1369 = vsub.s32 %v1058, %v1368
        %v1370 = vrot.slane %v1299, %v1369
        %v1371 = vsel %vm1063, %v1370, %v1366
        %v1372 = vsel %vm1128, %v1317, %v1308
        %v1373 = vsel %vm1130, %v1326, %v1372
        %v1374 = vsel %vm1132, %v1335, %v1373
        %v1375 = vsel %vm1134, %v1344, %v1374
        %v1376 = vsel %vm1136, %v1353, %v1375
        %v1377 = vsel %vm1138, %v1362, %v1376
        %v1378 = vsel %vm1140, %v1371, %v1377
        %v1380 = vsel %vm1143, %v1378, 0.0
        %1381 = vadd.xlane.f32.xlu0 %v1380
        %v1382 = vpop.xlane.xlu0 %1381
        %v1384 = vlaneseq
        %v1385 = vshrl.u32 %v1384, 7
        %v1386 = vsub.s32 0, %v1385
        %v1387 = vrot.slane %v1382, %v1386
        %v1388 = vlaneseq
        %v1389 = vshrl.u32 %v1388, 7
        %v1390 = vsub.s32 1, %v1389
        %v1391 = vrot.slane %v1382, %v1390
        %v1392 = vlaneseq
        %v1393 = vshrl.u32 %v1392, 7
        %v1394 = vsub.s32 2, %v1393
        %v1395 = vrot.slane %v1382, %v1394
        %v1396 = vlaneseq
        %v1397 = vshrl.u32 %v1396, 7
        %v1398 = vsub.s32 3, %v1397
        %v1399 = vrot.slane %v1382, %v1398
        %v1400 = vlaneseq
        %v1401 = vshrl.u32 %v1400, 7
        %v1402 = vsub.s32 4, %v1401
        %v1403 = vrot.slane %v1382, %v1402
        %v1404 = vlaneseq
        %v1405 = vshrl.u32 %v1404, 7
        %v1406 = vsub.s32 5, %v1405
        %v1407 = vrot.slane %v1382, %v1406
        %v1408 = vlaneseq
        %v1409 = vshrl.u32 %v1408, 7
        %v1410 = vsub.s32 6, %v1409
        %v1411 = vrot.slane %v1382, %v1410
        %v1412 = vlaneseq
        %v1413 = vshrl.u32 %v1412, 7
        %v1414 = vsub.s32 7, %v1413
        %v1415 = vrot.slane %v1382, %v1414
        %v1424 = vrcp.pop %v1387
        %v1425 = vmul.f32 %v1205, %v1424
        %v1426 = vmul.f32 %v1207, %v1424
        %v1427 = vrcp.pop %v1391
        %v1428 = vmul.f32 %v1209, %v1427
        %v1429 = vmul.f32 %v1211, %v1427
        %v1430 = vrcp.pop %v1395
        %v1431 = vmul.f32 %v1213, %v1430
        %v1432 = vmul.f32 %v1215, %v1430
        %v1433 = vrcp.pop %v1399
        %v1434 = vmul.f32 %v1217, %v1433
        %v1435 = vmul.f32 %v1219, %v1433
        %v1436 = vrcp.pop %v1403
        %v1437 = vmul.f32 %v1221, %v1436
        %v1438 = vmul.f32 %v1223, %v1436
        %v1439 = vrcp.pop %v1407
        %v1440 = vmul.f32 %v1225, %v1439
        %v1441 = vmul.f32 %v1227, %v1439
        %v1442 = vrcp.pop %v1411
        %v1443 = vmul.f32 %v1229, %v1442
        %v1444 = vmul.f32 %v1231, %v1442
        %v1445 = vrcp.pop %v1415
        %v1446 = vmul.f32 %v1233, %v1445
        %v1447 = vmul.f32 %v1235, %v1445
        %1464 = vset.pattern.permute.xlu0 0
        %1465 = vperm.xlu0 %1464, %v1425
        %v1466 = vpop.permute.xlu0 %1465
        %1467 = vset.pattern.permute.xlu0 0
        %1468 = vperm.xlu0 %1467, %v1426
        %v1469 = vpop.permute.xlu0 %1468
        %1470 = vset.pattern.permute.xlu0 0
        %1471 = vperm.xlu0 %1470, %v1428
        %v1472 = vpop.permute.xlu0 %1471
        %1473 = vset.pattern.permute.xlu0 0
        %1474 = vperm.xlu0 %1473, %v1429
        %v1475 = vpop.permute.xlu0 %1474
        %1476 = vset.pattern.permute.xlu0 0
        %1477 = vperm.xlu0 %1476, %v1431
        %v1478 = vpop.permute.xlu0 %1477
        %1479 = vset.pattern.permute.xlu0 0
        %1480 = vperm.xlu0 %1479, %v1432
        %v1481 = vpop.permute.xlu0 %1480
        %1482 = vset.pattern.permute.xlu0 0
        %1483 = vperm.xlu0 %1482, %v1434
        %v1484 = vpop.permute.xlu0 %1483
        %1485 = vset.pattern.permute.xlu0 0
        %1486 = vperm.xlu0 %1485, %v1435
        %v1487 = vpop.permute.xlu0 %1486
        %1488 = vset.pattern.permute.xlu0 0
        %1489 = vperm.xlu0 %1488, %v1437
        %v1490 = vpop.permute.xlu0 %1489
        %1491 = vset.pattern.permute.xlu0 0
        %1492 = vperm.xlu0 %1491, %v1438
        %v1493 = vpop.permute.xlu0 %1492
        %1494 = vset.pattern.permute.xlu0 0
        %1495 = vperm.xlu0 %1494, %v1440
        %v1496 = vpop.permute.xlu0 %1495
        %1497 = vset.pattern.permute.xlu0 0
        %1498 = vperm.xlu0 %1497, %v1441
        %v1499 = vpop.permute.xlu0 %1498
        %1500 = vset.pattern.permute.xlu0 0
        %1501 = vperm.xlu0 %1500, %v1443
        %v1502 = vpop.permute.xlu0 %1501
        %1503 = vset.pattern.permute.xlu0 0
        %1504 = vperm.xlu0 %1503, %v1444
        %v1505 = vpop.permute.xlu0 %1504
        %1506 = vset.pattern.permute.xlu0 0
        %1507 = vperm.xlu0 %1506, %v1446
        %v1508 = vpop.permute.xlu0 %1507
        %1509 = vset.pattern.permute.xlu0 0
        %1510 = vperm.xlu0 %1509, %v1447
        %v1511 = vpop.permute.xlu0 %1510
        %v1512 = vlaneseq
        %v1513 = vshrl.u32 %v1512, 7
        %v1514 = vsub.s32 %v1053, %v1513
        %v1515 = vrot.slane %v1466, %v1514
        %v1516 = vlaneseq
        %v1517 = vshrl.u32 %v1516, 7
        %v1518 = vsub.s32 %v1058, %v1517
        %v1519 = vrot.slane %v1469, %v1518
        %v1520 = vsel %vm1063, %v1519, %v1515
        %v1521 = vlaneseq
        %v1522 = vshrl.u32 %v1521, 7
        %v1523 = vsub.s32 %v1053, %v1522
        %v1524 = vrot.slane %v1472, %v1523
        %v1525 = vlaneseq
        %v1526 = vshrl.u32 %v1525, 7
        %v1527 = vsub.s32 %v1058, %v1526
        %v1528 = vrot.slane %v1475, %v1527
        %v1529 = vsel %vm1063, %v1528, %v1524
        %v1530 = vlaneseq
        %v1531 = vshrl.u32 %v1530, 7
        %v1532 = vsub.s32 %v1053, %v1531
        %v1533 = vrot.slane %v1478, %v1532
        %v1534 = vlaneseq
        %v1535 = vshrl.u32 %v1534, 7
        %v1536 = vsub.s32 %v1058, %v1535
        %v1537 = vrot.slane %v1481, %v1536
        %v1538 = vsel %vm1063, %v1537, %v1533
        %v1539 = vlaneseq
        %v1540 = vshrl.u32 %v1539, 7
        %v1541 = vsub.s32 %v1053, %v1540
        %v1542 = vrot.slane %v1484, %v1541
        %v1543 = vlaneseq
        %v1544 = vshrl.u32 %v1543, 7
        %v1545 = vsub.s32 %v1058, %v1544
        %v1546 = vrot.slane %v1487, %v1545
        %v1547 = vsel %vm1063, %v1546, %v1542
        %v1548 = vlaneseq
        %v1549 = vshrl.u32 %v1548, 7
        %v1550 = vsub.s32 %v1053, %v1549
        %v1551 = vrot.slane %v1490, %v1550
        %v1552 = vlaneseq
        %v1553 = vshrl.u32 %v1552, 7
        %v1554 = vsub.s32 %v1058, %v1553
        %v1555 = vrot.slane %v1493, %v1554
        %v1556 = vsel %vm1063, %v1555, %v1551
        %v1557 = vlaneseq
        %v1558 = vshrl.u32 %v1557, 7
        %v1559 = vsub.s32 %v1053, %v1558
        %v1560 = vrot.slane %v1496, %v1559
        %v1561 = vlaneseq
        %v1562 = vshrl.u32 %v1561, 7
        %v1563 = vsub.s32 %v1058, %v1562
        %v1564 = vrot.slane %v1499, %v1563
        %v1565 = vsel %vm1063, %v1564, %v1560
        %v1566 = vlaneseq
        %v1567 = vshrl.u32 %v1566, 7
        %v1568 = vsub.s32 %v1053, %v1567
        %v1569 = vrot.slane %v1502, %v1568
        %v1570 = vlaneseq
        %v1571 = vshrl.u32 %v1570, 7
        %v1572 = vsub.s32 %v1058, %v1571
        %v1573 = vrot.slane %v1505, %v1572
        %v1574 = vsel %vm1063, %v1573, %v1569
        %v1575 = vlaneseq
        %v1576 = vshrl.u32 %v1575, 7
        %v1577 = vsub.s32 %v1053, %v1576
        %v1578 = vrot.slane %v1508, %v1577
        %v1579 = vlaneseq
        %v1580 = vshrl.u32 %v1579, 7
        %v1581 = vsub.s32 %v1058, %v1580
        %v1582 = vrot.slane %v1511, %v1581
        %v1583 = vsel %vm1063, %v1582, %v1578
        %v1584 = vsel %vm1128, %v1529, %v1520
        %v1585 = vsel %vm1130, %v1538, %v1584
        %v1586 = vsel %vm1132, %v1547, %v1585
        %v1587 = vsel %vm1134, %v1556, %v1586
        %v1588 = vsel %vm1136, %v1565, %v1587
        %v1589 = vsel %vm1138, %v1574, %v1588
        %v1590 = vsel %vm1140, %v1583, %v1589
        %1592 = vst.msk [vmem:[%s260] sm:$0xff] %vm1143, %v1590
        %s1593 = sand.u32 %s164, 1
        %s1594 = scalar_lea.sflag [#allocation3], %s1593
        %s1595 = sand.u32 %s164, 1
        %s1596 = smul.addr %s1595, 8
        %s1597 = scalar_lea.vmem [#allocation2], %s1596
        // Predicated region
        $region45: #{tpu_custom_call.1} parent=43 // pred_check
          %p1598 = pneg %p174
        $region46: #{tpu_custom_call.1} parent=43 // pred_check_branch
          %1600 = sbr.rel (%p1598) target = $region48
        $region47: #{tpu_custom_call.1} parent=43 // pred_region
          %s1602 = ssub.s32 128, 128
          %1603 = vsyncadd %s1594, %s1602
          %s1604 = smul.addr %s20, 128
          %s1605 = scalar_lea.hbm %s6, %s1604
          %s1607 = sshll.u32 %s1597, 4
          %s1608 = int_to_ptr.vmem [resolvable:$true] %s1607
          %1610 = dma.vmem_to_hbm [thread:$0]  %s1608, 128, %s1605, %s1594
        $region48: #{tpu_custom_call.1} parent=43 // pred_fallthru
          _
      $region44: #{tpu_custom_call.1} parent=5 // pred_fallthru
        _
      %p1611 = scmp.le.s32.totalorder 2, %s15
      // Predicated region
      $region49: #{tpu_custom_call.1} parent=5 // pred_check
        %p1612 = pneg %p1611
      $region50: #{tpu_custom_call.1} parent=5 // pred_check_branch
        %1614 = sbr.rel (%p1612) target = $region52
      $region51: #{tpu_custom_call.1} parent=5 // pred_region
        %s1615 = ssub.s32 %s15, 2
        // Predicated region
        $region53: #{tpu_custom_call.1} parent=51 // pred_check
          %p1616 = pneg %p180
        $region54: #{tpu_custom_call.1} parent=51 // pred_check_branch
          %1618 = sbr.rel (%p1616) target = $region56
        $region55: #{tpu_custom_call.1} parent=51 // pred_region
          %s1619 = sand.u32 %s165, 1
          %s1620 = scalar_lea.sflag [#allocation3], %s1619
          %s1621 = sand.u32 %s165, 1
          %s1622 = smul.addr %s1621, 8
          %s1623 = scalar_lea.vmem [#allocation2], %s1622
          %1624 = dma.done %s1620, 128
        $region56: #{tpu_custom_call.1} parent=51 // pred_fallthru
          _
      $region52: #{tpu_custom_call.1} parent=5 // pred_fallthru
        _
    $region6: #{tpu_custom_call.1} parent=1 // loop_footer
      %s19 = sadd.s32 1, %s15
    $region7: #{tpu_custom_call.1} parent=1 // loop_footer_branch
      %14 = sbr.rel target = $region3
    $region8: #{tpu_custom_call.1} parent=1 // loop_exit
      _
    %1625 = vsyncpa [#allocation3], 1
    %s1626 = scalar_lea.sflag [#allocation3], 1
    %1627 = vsyncpa %s1626, 1

</llo_original>
